<compile_context>
chip_gen: v7x
topology: tpu7x:2x2x1
jax: 0.10.0
libtpu: 0.0.40
codegen_flags: <defaults>
</compile_context>

<pallas_src>
import functools
import math

import jax
import jax.numpy as jnp
from jax.experimental import pallas as pl
from jax.experimental.pallas import tpu as pltpu

LANE = 128


def _round_up(x, m):
    return (x + m - 1) // m * m


# ---------------------------------------------------------------------------
# Fused kernel: upsample(H) + concat + pad + conv1/BN/ReLU + conv2/BN/ReLU
# ---------------------------------------------------------------------------
def _decoder_block_kernel(x_ref, skip_ref, w1_ref, s1_ref, b1_ref,
                          w2_ref, s2_ref, b2_ref, o_ref,
                          xpad_ref, pcat1_ref, pcat2_ref,
                          *, Hx, H, W, Cx, Cs, Cinp, Cout, Coutp):
    # x_ref:    (1, Hx, W, Cx)   bf16   x with W already doubled, channels UNPADDED
    # skip_ref: (1, H,  W, Cs)   bf16   channels UNPADDED
    # w1_ref:   (3, 3*Cinp, Coutp) bf16 [dy, dx-major x channel, out], zero-padded
    # w2_ref:   (3, 3*Coutp, Coutp) bf16
    # s*/b*:    (1, Coutp) f32   folded eval-mode BatchNorm scale/bias (zero in pad lanes)
    # o_ref:    (1, H, W, Cout)  bf16   unpadded output channels
    f32 = jnp.float32
    bf16 = jnp.bfloat16
    Ctot = Cx + Cs
    HW = H * W

    # ---- zero only the 1-px halo of the padded concat buffer (interior is overwritten) ----
    xpad_ref[0, :, :] = jnp.zeros((W + 2, Cinp), bf16)
    xpad_ref[H + 1, :, :] = jnp.zeros((W + 2, Cinp), bf16)
    xpad_ref[1:H + 1, 0, :] = jnp.zeros((H, Cinp), bf16)
    xpad_ref[1:H + 1, W + 1, :] = jnp.zeros((H, Cinp), bf16)

    # ---- nearest upsample (H direction) + channel concat (= torch.cat([x, skip], 1)) ----
    xv = x_ref[0]                                                  # (Hx, W, Cx)
    # H-doubling: replicate along a new leading dim and merge (leading dims only).
    upx = jnp.broadcast_to(xv[:, None, :, :], (Hx, 2, W, Cx)).reshape(H, W, Cx)
    cat = jnp.concatenate([upx, skip_ref[0]], axis=-1)             # (H, W, Ctot)
    if Ctot < Cinp:   # joint lane pad of the concatenated block (single 128-multiple)
        cat = jnp.concatenate(
            [cat, jnp.zeros((H, W, Cinp - Ctot), bf16)], axis=-1)
    xpad_ref[1:H + 1, 1:W + 1, :] = cat                            # lane-dense interior store

    # ---- conv1: fold the 3 dx taps into the contraction (K = 3*Cinp), dy = 3 dots ----
    for dx in range(3):
        pcat1_ref[:, :, dx * Cinp:(dx + 1) * Cinp] = xpad_ref[:, dx:dx + W, :]
    # dy shifts are leading-dim slices of the (H+2, W, 3*Cinp) buffer -> sublane-aligned.
    acc1 = (jnp.dot(pcat1_ref[0:H, :, :].reshape(HW, 3 * Cinp), w1_ref[0],
                    preferred_element_type=f32)
            + jnp.dot(pcat1_ref[1:H + 1, :, :].reshape(HW, 3 * Cinp), w1_ref[1],
                      preferred_element_type=f32)
            + jnp.dot(pcat1_ref[2:H + 2, :, :].reshape(HW, 3 * Cinp), w1_ref[2],
                      preferred_element_type=f32))

    # folded eval-mode BatchNorm + ReLU (f32), back to bf16 for the conv2 MXU operand.
    # Pad lanes of h1 are exactly zero (zero weight cols, zero scale/bias) so storing the
    # full Coutp lanes below both keeps the stores lane-dense and pre-zeroes pcat2's pads.
    h1 = jnp.maximum(acc1 * s1_ref[...] + b1_ref[...], 0.0)
    h1b = h1.astype(bf16).reshape(H, W, Coutp)

    # ---- conv2: write h1 straight into the dx-folded patch buffer (no hpad round trip) ----
    pcat2_ref[0, :, :] = jnp.zeros((W, 3 * Coutp), bf16)           # dy halo rows
    pcat2_ref[H + 1, :, :] = jnp.zeros((W, 3 * Coutp), bf16)
    # dx=1 (center tap): full, lane-dense, sublane-aligned store
    pcat2_ref[1:H + 1, :, Coutp:2 * Coutp] = h1b
    # dx=0: shift right by one column, zero the first column
    pcat2_ref[1:H + 1, 1:W, 0:Coutp] = h1b[:, 0:W - 1, :]
    pcat2_ref[1:H + 1, 0, 0:Coutp] = jnp.zeros((H, Coutp), bf16)
    # dx=2: shift left by one column, zero the last column
    pcat2_ref[1:H + 1, 0:W - 1, 2 * Coutp:3 * Coutp] = h1b[:, 1:W, :]
    pcat2_ref[1:H + 1, W - 1, 2 * Coutp:3 * Coutp] = jnp.zeros((H, Coutp), bf16)

    acc2 = (jnp.dot(pcat2_ref[0:H, :, :].reshape(HW, 3 * Coutp), w2_ref[0],
                    preferred_element_type=f32)
            + jnp.dot(pcat2_ref[1:H + 1, :, :].reshape(HW, 3 * Coutp), w2_ref[1],
                      preferred_element_type=f32)
            + jnp.dot(pcat2_ref[2:H + 2, :, :].reshape(HW, 3 * Coutp), w2_ref[2],
                      preferred_element_type=f32))
    y = jnp.maximum(acc2 * s2_ref[...] + b2_ref[...], 0.0)
    y = y.reshape(H, W, Coutp).astype(o_ref.dtype)
    o_ref[0] = y[:, :, 0:Cout]                                     # unpadded bf16 writeback


# ---------------------------------------------------------------------------
# Wrapper: layout plumbing (NCHW<->NHWC, weight packing, VMEM budgeting)
# ---------------------------------------------------------------------------
def custom_decoder_block_forward(x_nchw, skip_nchw, params):
    N, Cx, Hx, Wx = x_nchw.shape
    Ns, Cs, H, W = skip_nchw.shape
    assert Ns == N and H == 2 * Hx and W == 2 * Wx
    # keeps bf16 sublane tiles aligned for the in-kernel (H*W, K) <-> (H, W, K) reshapes
    assert W % 16 == 0, "W (after 2x upsample) must be a multiple of 16 for this kernel"
    Cout = params["w1"].shape[-1]

    Ctot = Cx + Cs
    Cinp = _round_up(Ctot, LANE)         # single joint lane block for the concat input
    Coutp = _round_up(Cout, LANE)

    # NCHW -> NHWC (channels on the lane axis), bf16 MXU operands — NO channel padding.
    # Nearest upsample: only the W direction here (on the small half-res tensor); the
    # H-direction doubling is fused into the kernel.
    # TODO(synk): fold the W-direction doubling into the kernel too (needs strided
    # sublane stores or an even/odd column-split buffer).
    xh = jnp.transpose(x_nchw, (0, 2, 3, 1)).astype(jnp.bfloat16)
    xw = jnp.repeat(xh, 2, axis=2)                                   # (N, Hx, W, Cx)
    sk = jnp.transpose(skip_nchw, (0, 2, 3, 1)).astype(jnp.bfloat16)  # (N, H, W, Cs)

    # Conv weights (HWIO): the conv1 input-channel order already matches the in-kernel
    # concat layout [x | skip], so a single joint channel pad suffices; the 3 dx taps
    # are folded into the contraction dimension.
    w1 = params["w1"]                      # (3, 3, Ctot, Cout)
    w2 = params["w2"]                      # (3, 3, Cout, Cout)
    w1k = (jnp.pad(w1, ((0, 0), (0, 0), (0, Cinp - Ctot), (0, Coutp - Cout)))
           .reshape(3, 3 * Cinp, Coutp).astype(jnp.bfloat16))
    w2k = (jnp.pad(w2, ((0, 0), (0, 0), (0, Coutp - Cout), (0, Coutp - Cout)))
           .reshape(3, 3 * Coutp, Coutp).astype(jnp.bfloat16))

    s1 = jnp.pad(params["s1"], (0, Coutp - Cout)).reshape(1, Coutp).astype(jnp.float32)
    b1 = jnp.pad(params["b1"], (0, Coutp - Cout)).reshape(1, Coutp).astype(jnp.float32)
    s2 = jnp.pad(params["s2"], (0, Coutp - Cout)).reshape(1, Coutp).astype(jnp.float32)
    b2 = jnp.pad(params["b2"], (0, Coutp - Cout)).reshape(1, Coutp).astype(jnp.float32)

    scratch_shapes = [
        pltpu.VMEM((H + 2, W + 2, Cinp), jnp.bfloat16),     # zero-halo concat input
        pltpu.VMEM((H + 2, W, 3 * Cinp), jnp.bfloat16),     # conv1 dx-folded patches
        pltpu.VMEM((H + 2, W, 3 * Coutp), jnp.bfloat16),    # conv2 dx-folded patches
    ]

    # ---- VMEM budget: 2x (double-buffered) blocks + single-buffered scratch + temps ----
    def _vmem_bytes(shape, dtype):
        dt = jnp.dtype(dtype)
        s = list(shape)
        s[-1] = _round_up(s[-1], 128)
        if len(s) >= 2:
            s[-2] = _round_up(s[-2], 8 * 4 // dt.itemsize)   # 8 f32 / 16 bf16 sublanes
        return math.prod(s) * dt.itemsize

    block_shapes = [((1, Hx, W, Cx), jnp.bfloat16), ((1, H, W, Cs), jnp.bfloat16),
                    ((3, 3 * Cinp, Coutp), jnp.bfloat16), ((1, Coutp), jnp.float32),
                    ((1, Coutp), jnp.float32), ((3, 3 * Coutp, Coutp), jnp.bfloat16),
                    ((1, Coutp), jnp.float32), ((1, Coutp), jnp.float32),
                    ((1, H, W, Cout), jnp.bfloat16)]
    block_bytes = sum(_vmem_bytes(s, d) for s, d in block_shapes)
    scratch_bytes = (_vmem_bytes((H + 2, W + 2, Cinp), jnp.bfloat16)
                     + _vmem_bytes((H + 2, W, 3 * Cinp), jnp.bfloat16)
                     + _vmem_bytes((H + 2, W, 3 * Coutp), jnp.bfloat16))
    tmp_bytes = 2 * _vmem_bytes((H * W, Coutp), jnp.float32)   # value-based accumulators
    need = 2 * block_bytes + scratch_bytes + tmp_bytes + (4 << 20)
    try:
        cap = int(pltpu.get_tpu_info().vmem_capacity_bytes) - (16 << 20)
    except Exception:  # conservative fallback if the query is unavailable
        cap = 64 << 20
    vmem_limit = int(max(min(need, cap), 16 << 20))

    kernel = functools.partial(_decoder_block_kernel, Hx=Hx, H=H, W=W,
                               Cx=Cx, Cs=Cs, Cinp=Cinp, Cout=Cout, Coutp=Coutp)

    # TODO(synk): for production-scale H/W add a row-strip grid axis (manual halo'd DMA
    # via memory_space=pl.ANY) so blocks fit v7x's 64 MiB VMEM, strips pipeline against
    # compute, and both v7x TensorCores stay busy even at N=1; whole-image blocks are
    # fine at these decoder-tail shapes.
    out = pl.pallas_call(
        kernel,
        out_shape=jax.ShapeDtypeStruct((N, H, W, Cout), jnp.bfloat16),
        grid=(N,),
        in_specs=[
            pl.BlockSpec((1, Hx, W, Cx), lambda n: (n, 0, 0, 0)),
            pl.BlockSpec((1, H, W, Cs), lambda n: (n, 0, 0, 0)),
            pl.BlockSpec((3, 3 * Cinp, Coutp), lambda n: (0, 0, 0)),
            pl.BlockSpec((1, Coutp), lambda n: (0, 0)),
            pl.BlockSpec((1, Coutp), lambda n: (0, 0)),
            pl.BlockSpec((3, 3 * Coutp, Coutp), lambda n: (0, 0, 0)),
            pl.BlockSpec((1, Coutp), lambda n: (0, 0)),
            pl.BlockSpec((1, Coutp), lambda n: (0, 0)),
        ],
        out_specs=pl.BlockSpec((1, H, W, Cout), lambda n: (n, 0, 0, 0)),
        scratch_shapes=scratch_shapes,
        compiler_params=pltpu.CompilerParams(
            dimension_semantics=("parallel",),          # batch across TCs (v7x megacore)
            vmem_limit_bytes=vmem_limit),
    )(xw, sk, w1k, s1, b1, w2k, s2, b2)

    # NHWC bf16 -> NCHW f32 (PyTorch output convention).
    # TODO(synk): keep bf16 NHWC between chained decoder blocks to skip this HBM pass.
    return jnp.transpose(out, (0, 3, 1, 2)).astype(jnp.float32)


# ---------------------------------------------------------------------------
# Deterministic parameter construction (shapes per module __init__), BN folded (eval)
# ---------------------------------------------------------------------------
def make_params(key, in_channels, skip_channels, out_channels, eps=1e-5):
    c1_in = in_channels + skip_channels
    ks = jax.random.split(key, 10)

    def bn_fold(kg, kb, km, kv, c):
        gamma = jax.random.uniform(kg, (c,), jnp.float32, 0.5, 1.5)
        beta = 0.1 * jax.random.normal(kb, (c,), jnp.float32)
        running_mean = 0.1 * jax.random.normal(km, (c,), jnp.float32)
        running_var = jax.random.uniform(kv, (c,), jnp.float32, 0.5, 1.5)
        scale = gamma / jnp.sqrt(running_var + eps)
        bias = beta - running_mean * scale
        return scale, bias

    # conv weights in PyTorch (Cout, Cin, kH, kW) convention, converted to HWIO
    w1_oihw = 0.1 * jax.random.normal(ks[0], (out_channels, c1_in, 3, 3), jnp.float32)
    w2_oihw = 0.1 * jax.random.normal(ks[1], (out_channels, out_channels, 3, 3), jnp.float32)
    w1 = jnp.transpose(w1_oihw, (2, 3, 1, 0))   # (3,3,Cin,Cout)
    w2 = jnp.transpose(w2_oihw, (2, 3, 1, 0))

    s1, b1 = bn_fold(ks[2], ks[3], ks[4], ks[5], out_channels)
    s2, b2 = bn_fold(ks[6], ks[7], ks[8], ks[9], out_channels)
    return {"w1": w1, "s1": s1, "b1": b1, "w2": w2, "s2": s2, "b2": b2}


# ---------------------------------------------------------------------------
# Pure-JAX reference (same bf16 operand precision / bf16 output, f32 accumulation)
# ---------------------------------------------------------------------------
def _ref_forward(x_nchw, skip_nchw, params):
    x = jnp.transpose(x_nchw, (0, 2, 3, 1)).astype(jnp.bfloat16)
    skip = jnp.transpose(skip_nchw, (0, 2, 3, 1)).astype(jnp.bfloat16)
    x = jnp.repeat(jnp.repeat(x, 2, axis=1), 2, axis=2)          # nearest 2x upsample
    x = jnp.concatenate([x, skip], axis=-1)                      # torch.cat([x, skip], 1)

    def conv_bn_relu(h, w, s, b):
        y = jax.lax.conv_general_dilated(
            h, w.astype(jnp.bfloat16), (1, 1), "SAME",
            dimension_numbers=("NHWC", "HWIO", "NHWC"),
            preferred_element_type=jnp.float32)
        return jnp.maximum(y * s + b, 0.0)

    h1 = conv_bn_relu(x, params["w1"], params["s1"], params["b1"]).astype(jnp.bfloat16)
    h2 = conv_bn_relu(h1, params["w2"], params["s2"], params["b2"]).astype(jnp.bfloat16)
    return jnp.transpose(h2.astype(jnp.float32), (0, 3, 1, 2))


if __name__ == "__main__":
    # batch=2, in_channels=4, skip_channels=4, out_channels=8,
    # x spatial 8x8 (upsampled to 16x16), skip spatial 16x16.
    N, CIN, CSKIP, COUT, HX, WX = 2, 4, 4, 8, 8, 8

    key = jax.random.PRNGKey(0)
    kx, kskip, kp = jax.random.split(key, 3)
    x = jax.random.normal(kx, (N, CIN, HX, WX), jnp.float32)             # NCHW
    skip = jax.random.normal(kskip, (N, CSKIP, 2 * HX, 2 * WX), jnp.float32)
    params = make_params(kp, CIN, CSKIP, COUT)

    fwd = jax.jit(custom_decoder_block_forward)
    out = jax.block_until_ready(fwd(x, skip, params))
    ref = jax.block_until_ready(jax.jit(_ref_forward)(x, skip, params))

    assert out.shape == (N, COUT, 2 * HX, 2 * WX), out.shape
    max_err = float(jnp.max(jnp.abs(out - ref)))
    tol = 1e-2 + 2e-2 * float(jnp.max(jnp.abs(ref)))   # bf16-output tolerance
    assert max_err < tol, (max_err, tol)
    print("KERNEL_OK")
</pallas_src>

<mosaic_0001>
module attributes {stable_mosaic.version = 11 : i64} {
  func.func @_decoder_block_kernel(%arg0: i32, %arg1: memref<1x8x16x4xbf16, #tpu.memory_space<vmem>>, %arg2: memref<1x16x16x4xbf16, #tpu.memory_space<vmem>>, %arg3: memref<3x384x128xbf16, #tpu.memory_space<vmem>>, %arg4: memref<1x128xf32, #tpu.memory_space<vmem>>, %arg5: memref<1x128xf32, #tpu.memory_space<vmem>>, %arg6: memref<3x384x128xbf16, #tpu.memory_space<vmem>>, %arg7: memref<1x128xf32, #tpu.memory_space<vmem>>, %arg8: memref<1x128xf32, #tpu.memory_space<vmem>>, %arg9: memref<1x16x16x8xbf16, #tpu.memory_space<vmem>>, %arg10: memref<18x18x128xbf16, #tpu.memory_space<vmem>>, %arg11: memref<18x16x384xbf16, #tpu.memory_space<vmem>>, %arg12: memref<18x16x384xbf16, #tpu.memory_space<vmem>>) attributes {dimension_semantics = [#tpu.dimension_semantics<parallel>], iteration_bounds = array<i64: 2>, scalar_prefetch = 0 : i64, scratch_operands = 3 : i64, tpu.core_type = #tpu.core_type<tc>, window_params = [{transform_indices = @transform_0, window_bounds = array<i64: 1, 8, 16, 4>}, {transform_indices = @transform_1, window_bounds = array<i64: 1, 16, 16, 4>}, {pipeline_mode = #tpu.pipeline_mode<synchronous>, transform_indices = @transform_2, window_bounds = array<i64: 3, 384, 128>}, {pipeline_mode = #tpu.pipeline_mode<synchronous>, transform_indices = @transform_3, window_bounds = array<i64: 1, 128>}, {pipeline_mode = #tpu.pipeline_mode<synchronous>, transform_indices = @transform_4, window_bounds = array<i64: 1, 128>}, {pipeline_mode = #tpu.pipeline_mode<synchronous>, transform_indices = @transform_5, window_bounds = array<i64: 3, 384, 128>}, {pipeline_mode = #tpu.pipeline_mode<synchronous>, transform_indices = @transform_6, window_bounds = array<i64: 1, 128>}, {pipeline_mode = #tpu.pipeline_mode<synchronous>, transform_indices = @transform_7, window_bounds = array<i64: 1, 128>}, {transform_indices = @transform_8, window_bounds = array<i64: 1, 16, 16, 8>}]} {
    %cst = arith.constant 0.000000e+00 : bf16
    %0 = vector.broadcast %cst : bf16 to vector<18x128xbf16>
    %c0 = arith.constant 0 : index
    %c0_0 = arith.constant 0 : index
    %c0_1 = arith.constant 0 : index
    %1 = vector.load %arg10[%c0, %c0_0, %c0_1] : memref<18x18x128xbf16, #tpu.memory_space<vmem>>, vector<1x18x128xbf16>
    %2 = vector.shape_cast %1 : vector<1x18x128xbf16> to vector<18x128xbf16>
    %3 = vector.shape_cast %0 : vector<18x128xbf16> to vector<1x18x128xbf16>
    tpu.vector_store %arg10[%c0, %c0_0, %c0_1], %3 {strides = array<i32>} : memref<18x18x128xbf16, #tpu.memory_space<vmem>>, vector<1x18x128xbf16>,
    %cst_2 = arith.constant 0.000000e+00 : bf16
    %4 = vector.broadcast %cst_2 : bf16 to vector<18x128xbf16>
    %c17 = arith.constant 17 : index
    %c0_3 = arith.constant 0 : index
    %c0_4 = arith.constant 0 : index
    %5 = vector.load %arg10[%c17, %c0_3, %c0_4] : memref<18x18x128xbf16, #tpu.memory_space<vmem>>, vector<1x18x128xbf16>
    %6 = vector.shape_cast %5 : vector<1x18x128xbf16> to vector<18x128xbf16>
    %7 = vector.shape_cast %4 : vector<18x128xbf16> to vector<1x18x128xbf16>
    tpu.vector_store %arg10[%c17, %c0_3, %c0_4], %7 {strides = array<i32>} : memref<18x18x128xbf16, #tpu.memory_space<vmem>>, vector<1x18x128xbf16>,
    %cst_5 = arith.constant 0.000000e+00 : bf16
    %8 = vector.broadcast %cst_5 : bf16 to vector<16x128xbf16>
    %c1 = arith.constant 1 : index
    %c0_6 = arith.constant 0 : index
    %c0_7 = arith.constant 0 : index
    %9 = vector.load %arg10[%c1, %c0_6, %c0_7] : memref<18x18x128xbf16, #tpu.memory_space<vmem>>, vector<16x1x128xbf16>
    %10 = vector.shape_cast %9 : vector<16x1x128xbf16> to vector<16x128xbf16>
    %11 = vector.shape_cast %8 : vector<16x128xbf16> to vector<16x1x128xbf16>
    tpu.vector_store %arg10[%c1, %c0_6, %c0_7], %11 {strides = array<i32>} : memref<18x18x128xbf16, #tpu.memory_space<vmem>>, vector<16x1x128xbf16>,
    %cst_8 = arith.constant 0.000000e+00 : bf16
    %12 = vector.broadcast %cst_8 : bf16 to vector<16x128xbf16>
    %c1_9 = arith.constant 1 : index
    %c17_10 = arith.constant 17 : index
    %c0_11 = arith.constant 0 : index
    %13 = vector.load %arg10[%c1_9, %c17_10, %c0_11] : memref<18x18x128xbf16, #tpu.memory_space<vmem>>, vector<16x1x128xbf16>
    %14 = vector.shape_cast %13 : vector<16x1x128xbf16> to vector<16x128xbf16>
    %15 = vector.shape_cast %12 : vector<16x128xbf16> to vector<16x1x128xbf16>
    tpu.vector_store %arg10[%c1_9, %c17_10, %c0_11], %15 {strides = array<i32>} : memref<18x18x128xbf16, #tpu.memory_space<vmem>>, vector<16x1x128xbf16>,
    %c0_12 = arith.constant 0 : index
    %c0_13 = arith.constant 0 : index
    %c0_14 = arith.constant 0 : index
    %c0_15 = arith.constant 0 : index
    %16 = vector.load %arg1[%c0_12, %c0_13, %c0_14, %c0_15] : memref<1x8x16x4xbf16, #tpu.memory_space<vmem>>, vector<1x8x16x4xbf16>
    %17 = vector.shape_cast %16 : vector<1x8x16x4xbf16> to vector<8x16x4xbf16>
    %18 = vector.shape_cast %17 : vector<8x16x4xbf16> to vector<8x1x16x4xbf16>
    %19 = vector.shape_cast %18 : vector<8x1x16x4xbf16> to vector<8x1x16x4xbf16>
    %20 = vector.broadcast %19 : vector<8x1x16x4xbf16> to vector<8x2x16x4xbf16>
    %21 = vector.shape_cast %20 : vector<8x2x16x4xbf16> to vector<16x16x4xbf16>
    %c0_16 = arith.constant 0 : index
    %c0_17 = arith.constant 0 : index
    %c0_18 = arith.constant 0 : index
    %c0_19 = arith.constant 0 : index
    %22 = vector.load %arg2[%c0_16, %c0_17, %c0_18, %c0_19] : memref<1x16x16x4xbf16, #tpu.memory_space<vmem>>, vector<1x16x16x4xbf16>
    %23 = vector.shape_cast %22 : vector<1x16x16x4xbf16> to vector<16x16x4xbf16>
    %24 = tpu.concatenate %21, %23 in 2 : vector<16x16x4xbf16>, vector<16x16x4xbf16> -> vector<16x16x8xbf16>
    %cst_20 = arith.constant 0.000000e+00 : bf16
    %25 = vector.broadcast %cst_20 : bf16 to vector<16x16x120xbf16>
    %26 = tpu.concatenate %24, %25 in 2 : vector<16x16x8xbf16>, vector<16x16x120xbf16> -> vector<16x16x128xbf16>
    %c1_21 = arith.constant 1 : index
    %c1_22 = arith.constant 1 : index
    %c0_23 = arith.constant 0 : index
    %27 = vector.load %arg10[%c1_21, %c1_22, %c0_23] : memref<18x18x128xbf16, #tpu.memory_space<vmem>>, vector<16x16x128xbf16>
    tpu.vector_store %arg10[%c1_21, %c1_22, %c0_23], %26 {strides = array<i32>} : memref<18x18x128xbf16, #tpu.memory_space<vmem>>, vector<16x16x128xbf16>,
    %c0_24 = arith.constant 0 : index
    %c0_25 = arith.constant 0 : index
    %c0_26 = arith.constant 0 : index
    %28 = vector.load %arg10[%c0_24, %c0_25, %c0_26] : memref<18x18x128xbf16, #tpu.memory_space<vmem>>, vector<18x16x128xbf16>
    %c0_27 = arith.constant 0 : index
    %c0_28 = arith.constant 0 : index
    %c0_29 = arith.constant 0 : index
    %29 = vector.load %arg11[%c0_27, %c0_28, %c0_29] : memref<18x16x384xbf16, #tpu.memory_space<vmem>>, vector<18x16x128xbf16>
    tpu.vector_store %arg11[%c0_27, %c0_28, %c0_29], %28 {strides = array<i32>} : memref<18x16x384xbf16, #tpu.memory_space<vmem>>, vector<18x16x128xbf16>,
    %c0_30 = arith.constant 0 : index
    %c1_31 = arith.constant 1 : index
    %c0_32 = arith.constant 0 : index
    %30 = vector.load %arg10[%c0_30, %c1_31, %c0_32] : memref<18x18x128xbf16, #tpu.memory_space<vmem>>, vector<18x16x128xbf16>
    %c0_33 = arith.constant 0 : index
    %c0_34 = arith.constant 0 : index
    %c128 = arith.constant 128 : index
    %31 = vector.load %arg11[%c0_33, %c0_34, %c128] : memref<18x16x384xbf16, #tpu.memory_space<vmem>>, vector<18x16x128xbf16>
    tpu.vector_store %arg11[%c0_33, %c0_34, %c128], %30 {strides = array<i32>} : memref<18x16x384xbf16, #tpu.memory_space<vmem>>, vector<18x16x128xbf16>,
    %c0_35 = arith.constant 0 : index
    %c2 = arith.constant 2 : index
    %c0_36 = arith.constant 0 : index
    %32 = vector.load %arg10[%c0_35, %c2, %c0_36] : memref<18x18x128xbf16, #tpu.memory_space<vmem>>, vector<18x16x128xbf16>
    %c0_37 = arith.constant 0 : index
    %c0_38 = arith.constant 0 : index
    %c256 = arith.constant 256 : index
    %33 = vector.load %arg11[%c0_37, %c0_38, %c256] : memref<18x16x384xbf16, #tpu.memory_space<vmem>>, vector<18x16x128xbf16>
    tpu.vector_store %arg11[%c0_37, %c0_38, %c256], %32 {strides = array<i32>} : memref<18x16x384xbf16, #tpu.memory_space<vmem>>, vector<18x16x128xbf16>,
    %c0_39 = arith.constant 0 : index
    %c0_40 = arith.constant 0 : index
    %c0_41 = arith.constant 0 : index
    %34 = vector.load %arg11[%c0_39, %c0_40, %c0_41] : memref<18x16x384xbf16, #tpu.memory_space<vmem>>, vector<16x16x384xbf16>
    %35 = vector.shape_cast %34 : vector<16x16x384xbf16> to vector<256x384xbf16>
    %c0_42 = arith.constant 0 : index
    %c0_43 = arith.constant 0 : index
    %c0_44 = arith.constant 0 : index
    %36 = vector.load %arg3[%c0_42, %c0_43, %c0_44] : memref<3x384x128xbf16, #tpu.memory_space<vmem>>, vector<1x384x128xbf16>
    %37 = vector.shape_cast %36 : vector<1x384x128xbf16> to vector<384x128xbf16>
    %cst_45 = arith.constant dense<0.000000e+00> : vector<256x128xf32>
    %38 = tpu.matmul %35, %37, %cst_45 {dimension_numbers = #tpu.dot_dimension_numbers<[1], [0], [0], [1], [0, 0, 1, 1], [], []>} : vector<256x384xbf16>, vector<384x128xbf16>, vector<256x128xf32> -> vector<256x128xf32>
    %c1_46 = arith.constant 1 : index
    %c0_47 = arith.constant 0 : index
    %c0_48 = arith.constant 0 : index
    %39 = vector.load %arg11[%c1_46, %c0_47, %c0_48] : memref<18x16x384xbf16, #tpu.memory_space<vmem>>, vector<16x16x384xbf16>
    %40 = vector.shape_cast %39 : vector<16x16x384xbf16> to vector<256x384xbf16>
    %c1_49 = arith.constant 1 : index
    %c0_50 = arith.constant 0 : index
    %c0_51 = arith.constant 0 : index
    %41 = vector.load %arg3[%c1_49, %c0_50, %c0_51] : memref<3x384x128xbf16, #tpu.memory_space<vmem>>, vector<1x384x128xbf16>
    %42 = vector.shape_cast %41 : vector<1x384x128xbf16> to vector<384x128xbf16>
    %cst_52 = arith.constant dense<0.000000e+00> : vector<256x128xf32>
    %43 = tpu.matmul %40, %42, %cst_52 {dimension_numbers = #tpu.dot_dimension_numbers<[1], [0], [0], [1], [0, 0, 1, 1], [], []>} : vector<256x384xbf16>, vector<384x128xbf16>, vector<256x128xf32> -> vector<256x128xf32>
    %44 = arith.addf %38, %43 : vector<256x128xf32>
    %c2_53 = arith.constant 2 : index
    %c0_54 = arith.constant 0 : index
    %c0_55 = arith.constant 0 : index
    %45 = vector.load %arg11[%c2_53, %c0_54, %c0_55] : memref<18x16x384xbf16, #tpu.memory_space<vmem>>, vector<16x16x384xbf16>
    %46 = vector.shape_cast %45 : vector<16x16x384xbf16> to vector<256x384xbf16>
    %c2_56 = arith.constant 2 : index
    %c0_57 = arith.constant 0 : index
    %c0_58 = arith.constant 0 : index
    %47 = vector.load %arg3[%c2_56, %c0_57, %c0_58] : memref<3x384x128xbf16, #tpu.memory_space<vmem>>, vector<1x384x128xbf16>
    %48 = vector.shape_cast %47 : vector<1x384x128xbf16> to vector<384x128xbf16>
    %cst_59 = arith.constant dense<0.000000e+00> : vector<256x128xf32>
    %49 = tpu.matmul %46, %48, %cst_59 {dimension_numbers = #tpu.dot_dimension_numbers<[1], [0], [0], [1], [0, 0, 1, 1], [], []>} : vector<256x384xbf16>, vector<384x128xbf16>, vector<256x128xf32> -> vector<256x128xf32>
    %50 = arith.addf %44, %49 : vector<256x128xf32>
    %c0_60 = arith.constant 0 : index
    %c0_61 = arith.constant 0 : index
    %51 = vector.load %arg4[%c0_60, %c0_61] : memref<1x128xf32, #tpu.memory_space<vmem>>, vector<1x128xf32>
    %52 = vector.broadcast %51 : vector<1x128xf32> to vector<256x128xf32>
    %53 = arith.mulf %50, %52 : vector<256x128xf32>
    %c0_62 = arith.constant 0 : index
    %c0_63 = arith.constant 0 : index
    %54 = vector.load %arg5[%c0_62, %c0_63] : memref<1x128xf32, #tpu.memory_space<vmem>>, vector<1x128xf32>
    %55 = vector.broadcast %54 : vector<1x128xf32> to vector<256x128xf32>
    %56 = arith.addf %53, %55 : vector<256x128xf32>
    %cst_64 = arith.constant 0.000000e+00 : f32
    %57 = vector.broadcast %cst_64 : f32 to vector<256x128xf32>
    %58 = arith.maximumf %56, %57 : vector<256x128xf32>
    %59 = arith.truncf %58 : vector<256x128xf32> to vector<256x128xbf16>
    %60 = vector.shape_cast %59 : vector<256x128xbf16> to vector<16x16x128xbf16>
    %cst_65 = arith.constant 0.000000e+00 : bf16
    %61 = vector.broadcast %cst_65 : bf16 to vector<16x384xbf16>
    %c0_66 = arith.constant 0 : index
    %c0_67 = arith.constant 0 : index
    %c0_68 = arith.constant 0 : index
    %62 = vector.load %arg12[%c0_66, %c0_67, %c0_68] : memref<18x16x384xbf16, #tpu.memory_space<vmem>>, vector<1x16x384xbf16>
    %63 = vector.shape_cast %62 : vector<1x16x384xbf16> to vector<16x384xbf16>
    %64 = vector.shape_cast %61 : vector<16x384xbf16> to vector<1x16x384xbf16>
    tpu.vector_store %arg12[%c0_66, %c0_67, %c0_68], %64 {strides = array<i32>} : memref<18x16x384xbf16, #tpu.memory_space<vmem>>, vector<1x16x384xbf16>,
    %cst_69 = arith.constant 0.000000e+00 : bf16
    %65 = vector.broadcast %cst_69 : bf16 to vector<16x384xbf16>
    %c17_70 = arith.constant 17 : index
    %c0_71 = arith.constant 0 : index
    %c0_72 = arith.constant 0 : index
    %66 = vector.load %arg12[%c17_70, %c0_71, %c0_72] : memref<18x16x384xbf16, #tpu.memory_space<vmem>>, vector<1x16x384xbf16>
    %67 = vector.shape_cast %66 : vector<1x16x384xbf16> to vector<16x384xbf16>
    %68 = vector.shape_cast %65 : vector<16x384xbf16> to vector<1x16x384xbf16>
    tpu.vector_store %arg12[%c17_70, %c0_71, %c0_72], %68 {strides = array<i32>} : memref<18x16x384xbf16, #tpu.memory_space<vmem>>, vector<1x16x384xbf16>,
    %c1_73 = arith.constant 1 : index
    %c0_74 = arith.constant 0 : index
    %c128_75 = arith.constant 128 : index
    %69 = vector.load %arg12[%c1_73, %c0_74, %c128_75] : memref<18x16x384xbf16, #tpu.memory_space<vmem>>, vector<16x16x128xbf16>
    tpu.vector_store %arg12[%c1_73, %c0_74, %c128_75], %60 {strides = array<i32>} : memref<18x16x384xbf16, #tpu.memory_space<vmem>>, vector<16x16x128xbf16>,
    %70 = vector.extract_strided_slice %60 {offsets = [0, 0, 0], sizes = [16, 15, 128], strides = [1, 1, 1]} : vector<16x16x128xbf16> to vector<16x15x128xbf16>
    %c1_76 = arith.constant 1 : index
    %c1_77 = arith.constant 1 : index
    %c0_78 = arith.constant 0 : index
    %71 = vector.load %arg12[%c1_76, %c1_77, %c0_78] : memref<18x16x384xbf16, #tpu.memory_space<vmem>>, vector<16x15x128xbf16>
    tpu.vector_store %arg12[%c1_76, %c1_77, %c0_78], %70 {strides = array<i32>} : memref<18x16x384xbf16, #tpu.memory_space<vmem>>, vector<16x15x128xbf16>,
    %cst_79 = arith.constant 0.000000e+00 : bf16
    %72 = vector.broadcast %cst_79 : bf16 to vector<16x128xbf16>
    %c1_80 = arith.constant 1 : index
    %c0_81 = arith.constant 0 : index
    %c0_82 = arith.constant 0 : index
    %73 = vector.load %arg12[%c1_80, %c0_81, %c0_82] : memref<18x16x384xbf16, #tpu.memory_space<vmem>>, vector<16x1x128xbf16>
    %74 = vector.shape_cast %73 : vector<16x1x128xbf16> to vector<16x128xbf16>
    %75 = vector.shape_cast %72 : vector<16x128xbf16> to vector<16x1x128xbf16>
    tpu.vector_store %arg12[%c1_80, %c0_81, %c0_82], %75 {strides = array<i32>} : memref<18x16x384xbf16, #tpu.memory_space<vmem>>, vector<16x1x128xbf16>,
    %76 = vector.extract_strided_slice %60 {offsets = [0, 1, 0], sizes = [16, 15, 128], strides = [1, 1, 1]} : vector<16x16x128xbf16> to vector<16x15x128xbf16>
    %c1_83 = arith.constant 1 : index
    %c0_84 = arith.constant 0 : index
    %c256_85 = arith.constant 256 : index
    %77 = vector.load %arg12[%c1_83, %c0_84, %c256_85] : memref<18x16x384xbf16, #tpu.memory_space<vmem>>, vector<16x15x128xbf16>
    tpu.vector_store %arg12[%c1_83, %c0_84, %c256_85], %76 {strides = array<i32>} : memref<18x16x384xbf16, #tpu.memory_space<vmem>>, vector<16x15x128xbf16>,
    %cst_86 = arith.constant 0.000000e+00 : bf16
    %78 = vector.broadcast %cst_86 : bf16 to vector<16x128xbf16>
    %c1_87 = arith.constant 1 : index
    %c15 = arith.constant 15 : index
    %c256_88 = arith.constant 256 : index
    %79 = vector.load %arg12[%c1_87, %c15, %c256_88] : memref<18x16x384xbf16, #tpu.memory_space<vmem>>, vector<16x1x128xbf16>
    %80 = vector.shape_cast %79 : vector<16x1x128xbf16> to vector<16x128xbf16>
    %81 = vector.shape_cast %78 : vector<16x128xbf16> to vector<16x1x128xbf16>
    tpu.vector_store %arg12[%c1_87, %c15, %c256_88], %81 {strides = array<i32>} : memref<18x16x384xbf16, #tpu.memory_space<vmem>>, vector<16x1x128xbf16>,
    %c0_89 = arith.constant 0 : index
    %c0_90 = arith.constant 0 : index
    %c0_91 = arith.constant 0 : index
    %82 = vector.load %arg12[%c0_89, %c0_90, %c0_91] : memref<18x16x384xbf16, #tpu.memory_space<vmem>>, vector<16x16x384xbf16>
    %83 = vector.shape_cast %82 : vector<16x16x384xbf16> to vector<256x384xbf16>
    %c0_92 = arith.constant 0 : index
    %c0_93 = arith.constant 0 : index
    %c0_94 = arith.constant 0 : index
    %84 = vector.load %arg6[%c0_92, %c0_93, %c0_94] : memref<3x384x128xbf16, #tpu.memory_space<vmem>>, vector<1x384x128xbf16>
    %85 = vector.shape_cast %84 : vector<1x384x128xbf16> to vector<384x128xbf16>
    %cst_95 = arith.constant dense<0.000000e+00> : vector<256x128xf32>
    %86 = tpu.matmul %83, %85, %cst_95 {dimension_numbers = #tpu.dot_dimension_numbers<[1], [0], [0], [1], [0, 0, 1, 1], [], []>} : vector<256x384xbf16>, vector<384x128xbf16>, vector<256x128xf32> -> vector<256x128xf32>
    %c1_96 = arith.constant 1 : index
    %c0_97 = arith.constant 0 : index
    %c0_98 = arith.constant 0 : index
    %87 = vector.load %arg12[%c1_96, %c0_97, %c0_98] : memref<18x16x384xbf16, #tpu.memory_space<vmem>>, vector<16x16x384xbf16>
    %88 = vector.shape_cast %87 : vector<16x16x384xbf16> to vector<256x384xbf16>
    %c1_99 = arith.constant 1 : index
    %c0_100 = arith.constant 0 : index
    %c0_101 = arith.constant 0 : index
    %89 = vector.load %arg6[%c1_99, %c0_100, %c0_101] : memref<3x384x128xbf16, #tpu.memory_space<vmem>>, vector<1x384x128xbf16>
    %90 = vector.shape_cast %89 : vector<1x384x128xbf16> to vector<384x128xbf16>
    %cst_102 = arith.constant dense<0.000000e+00> : vector<256x128xf32>
    %91 = tpu.matmul %88, %90, %cst_102 {dimension_numbers = #tpu.dot_dimension_numbers<[1], [0], [0], [1], [0, 0, 1, 1], [], []>} : vector<256x384xbf16>, vector<384x128xbf16>, vector<256x128xf32> -> vector<256x128xf32>
    %92 = arith.addf %86, %91 : vector<256x128xf32>
    %c2_103 = arith.constant 2 : index
    %c0_104 = arith.constant 0 : index
    %c0_105 = arith.constant 0 : index
    %93 = vector.load %arg12[%c2_103, %c0_104, %c0_105] : memref<18x16x384xbf16, #tpu.memory_space<vmem>>, vector<16x16x384xbf16>
    %94 = vector.shape_cast %93 : vector<16x16x384xbf16> to vector<256x384xbf16>
    %c2_106 = arith.constant 2 : index
    %c0_107 = arith.constant 0 : index
    %c0_108 = arith.constant 0 : index
    %95 = vector.load %arg6[%c2_106, %c0_107, %c0_108] : memref<3x384x128xbf16, #tpu.memory_space<vmem>>, vector<1x384x128xbf16>
    %96 = vector.shape_cast %95 : vector<1x384x128xbf16> to vector<384x128xbf16>
    %cst_109 = arith.constant dense<0.000000e+00> : vector<256x128xf32>
    %97 = tpu.matmul %94, %96, %cst_109 {dimension_numbers = #tpu.dot_dimension_numbers<[1], [0], [0], [1], [0, 0, 1, 1], [], []>} : vector<256x384xbf16>, vector<384x128xbf16>, vector<256x128xf32> -> vector<256x128xf32>
    %98 = arith.addf %92, %97 : vector<256x128xf32>
    %c0_110 = arith.constant 0 : index
    %c0_111 = arith.constant 0 : index
    %99 = vector.load %arg7[%c0_110, %c0_111] : memref<1x128xf32, #tpu.memory_space<vmem>>, vector<1x128xf32>
    %100 = vector.broadcast %99 : vector<1x128xf32> to vector<256x128xf32>
    %101 = arith.mulf %98, %100 : vector<256x128xf32>
    %c0_112 = arith.constant 0 : index
    %c0_113 = arith.constant 0 : index
    %102 = vector.load %arg8[%c0_112, %c0_113] : memref<1x128xf32, #tpu.memory_space<vmem>>, vector<1x128xf32>
    %103 = vector.broadcast %102 : vector<1x128xf32> to vector<256x128xf32>
    %104 = arith.addf %101, %103 : vector<256x128xf32>
    %cst_114 = arith.constant 0.000000e+00 : f32
    %105 = vector.broadcast %cst_114 : f32 to vector<256x128xf32>
    %106 = arith.maximumf %104, %105 : vector<256x128xf32>
    %107 = vector.shape_cast %106 : vector<256x128xf32> to vector<16x16x128xf32>
    %108 = arith.truncf %107 : vector<16x16x128xf32> to vector<16x16x128xbf16>
    %109 = vector.extract_strided_slice %108 {offsets = [0, 0, 0], sizes = [16, 16, 8], strides = [1, 1, 1]} : vector<16x16x128xbf16> to vector<16x16x8xbf16>
    %c0_115 = arith.constant 0 : index
    %c0_116 = arith.constant 0 : index
    %c0_117 = arith.constant 0 : index
    %c0_118 = arith.constant 0 : index
    %110 = vector.load %arg9[%c0_115, %c0_116, %c0_117, %c0_118] : memref<1x16x16x8xbf16, #tpu.memory_space<vmem>>, vector<1x16x16x8xbf16>
    %111 = vector.shape_cast %110 : vector<1x16x16x8xbf16> to vector<16x16x8xbf16>
    %112 = vector.shape_cast %109 : vector<16x16x8xbf16> to vector<1x16x16x8xbf16>
    tpu.vector_store %arg9[%c0_115, %c0_116, %c0_117, %c0_118], %112 {strides = array<i32>} : memref<1x16x16x8xbf16, #tpu.memory_space<vmem>>, vector<1x16x16x8xbf16>,
    return
  }
  func.func @transform_0(%arg0: i32) -> (i32, i32, i32, i32) {
    %c0_i32 = arith.constant 0 : i32
    %c0_i32_0 = arith.constant 0 : i32
    %c0_i32_1 = arith.constant 0 : i32
    %c0_i32_2 = arith.constant 0 : i32
    return %arg0, %c0_i32, %c0_i32_0, %c0_i32_1 : i32, i32, i32, i32
  }
  func.func @transform_1(%arg0: i32) -> (i32, i32, i32, i32) {
    %c0_i32 = arith.constant 0 : i32
    %c0_i32_0 = arith.constant 0 : i32
    %c0_i32_1 = arith.constant 0 : i32
    %c0_i32_2 = arith.constant 0 : i32
    return %arg0, %c0_i32, %c0_i32_0, %c0_i32_1 : i32, i32, i32, i32
  }
  func.func @transform_2(%arg0: i32) -> (i32, i32, i32) {
    %c0_i32 = arith.constant 0 : i32
    %c0_i32_0 = arith.constant 0 : i32
    %c0_i32_1 = arith.constant 0 : i32
    %c0_i32_2 = arith.constant 0 : i32
    return %c0_i32, %c0_i32_0, %c0_i32_1 : i32, i32, i32
  }
  func.func @transform_3(%arg0: i32) -> (i32, i32) {
    %c0_i32 = arith.constant 0 : i32
    %c0_i32_0 = arith.constant 0 : i32
    %c0_i32_1 = arith.constant 0 : i32
    return %c0_i32, %c0_i32_0 : i32, i32
  }
  func.func @transform_4(%arg0: i32) -> (i32, i32) {
    %c0_i32 = arith.constant 0 : i32
    %c0_i32_0 = arith.constant 0 : i32
    %c0_i32_1 = arith.constant 0 : i32
    return %c0_i32, %c0_i32_0 : i32, i32
  }
  func.func @transform_5(%arg0: i32) -> (i32, i32, i32) {
    %c0_i32 = arith.constant 0 : i32
    %c0_i32_0 = arith.constant 0 : i32
    %c0_i32_1 = arith.constant 0 : i32
    %c0_i32_2 = arith.constant 0 : i32
    return %c0_i32, %c0_i32_0, %c0_i32_1 : i32, i32, i32
  }
  func.func @transform_6(%arg0: i32) -> (i32, i32) {
    %c0_i32 = arith.constant 0 : i32
    %c0_i32_0 = arith.constant 0 : i32
    %c0_i32_1 = arith.constant 0 : i32
    return %c0_i32, %c0_i32_0 : i32, i32
  }
  func.func @transform_7(%arg0: i32) -> (i32, i32) {
    %c0_i32 = arith.constant 0 : i32
    %c0_i32_0 = arith.constant 0 : i32
    %c0_i32_1 = arith.constant 0 : i32
    return %c0_i32, %c0_i32_0 : i32, i32
  }
  func.func @transform_8(%arg0: i32) -> (i32, i32, i32, i32) {
    %c0_i32 = arith.constant 0 : i32
    %c0_i32_0 = arith.constant 0 : i32
    %c0_i32_1 = arith.constant 0 : i32
    %c0_i32_2 = arith.constant 0 : i32
    return %arg0, %c0_i32, %c0_i32_0, %c0_i32_1 : i32, i32, i32, i32
  }
}

</mosaic_0001>

<llo_original>
// kernel: custom_decoder_block_forward.1
$region0: #{custom_decoder_block_forward.1}
  #allocation0 [shape = 'u32[]', space=smem, size = 0x4, offset = 0x4, fixed_abs, tag = 'smem constant byte address 0x4 - core index']
  #allocation1 [shape = 'u32[144,128]{1,0:T(1,128)}', space=vmem, size = 0x12000, scoped, tag = 'internal scratch']
  #allocation2 [shape = 'bf16[18,18,128]{2,1,0:T(8,128)(2,1)}', space=vmem, size = 0x1b000, scoped, tag = 'scratch operand']
  #allocation3 [shape = 'bf16[18,16,384]{2,1,0:T(16,128)(2,1)}', space=vmem, size = 0x36000, scoped, tag = 'scratch operand']
  #allocation4 [shape = 'bf16[18,16,384]{2,1,0:T(16,128)(2,1)}', space=vmem, size = 0x36000, scoped, tag = 'scratch operand']
  %s0 = inlined_call_operand.vmem [shape: bf16[2,8,16,4], index: 0, kind: input, shape index: {}]
  %s1 = inlined_call_operand.vmem [shape: bf16[2,16,16,4], index: 1, kind: input, shape index: {}]
  %s2 = inlined_call_operand.vmem [shape: bf16[3,384,128], index: 2, kind: input, shape index: {}]
  %s3 = inlined_call_operand.vmem [shape: f32[1,128], index: 3, kind: input, shape index: {}]
  %s4 = inlined_call_operand.vmem [shape: f32[1,128], index: 4, kind: input, shape index: {}]
  %s5 = inlined_call_operand.vmem [shape: bf16[3,384,128], index: 5, kind: input, shape index: {}]
  %s6 = inlined_call_operand.vmem [shape: f32[1,128], index: 6, kind: input, shape index: {}]
  %s7 = inlined_call_operand.vmem [shape: f32[1,128], index: 7, kind: input, shape index: {}]
  %s8 = inlined_call_operand.vmem [shape: bf16[2,16,16,8], index: 8, kind: output, shape index: {}]
  %s9 = sld [smem:[#allocation0]]
  $region65: #{custom_decoder_block_forward.1} parent=0
    _
  %s11 = ssub.s32 1, %s9
  %s12 = scalar_select 0, %s11, %s9
  loop: start=0, step=1, limit=4
  $region2: #{custom_decoder_block_forward.1} parent=0 // loop_pre_header
    _
  $region3: #{custom_decoder_block_forward.1} parent=0 // loop_header
    %s14 = sphi 0, %s18
    %p15 = scmp.ge.s32.totalorder %s14, 4
    %s24 = sphi 0, %s26
    %s27 = sphi 0, %s24
    %s28 = sphi 0, %s27
    %s44 = sphi 0, %s28
    %s50 = sphi 0, %s52
    %s53 = sphi 0, %s50
    %s54 = sphi 0, %s53
    %s70 = sphi 0, %s54
    %s74 = sphi 0, %s74
    %s76 = sphi 0, %s74
    %s77 = sphi 0, %s76
    %s91 = sphi 0, %s77
    %s95 = sphi 0, %s95
    %s97 = sphi 0, %s95
    %s98 = sphi 0, %s97
    %s112 = sphi 0, %s98
    %s116 = sphi 0, %s116
    %s118 = sphi 0, %s116
    %s119 = sphi 0, %s118
    %s133 = sphi 0, %s119
    %s137 = sphi 0, %s137
    %s139 = sphi 0, %s137
    %s140 = sphi 0, %s139
    %s154 = sphi 0, %s140
    %s158 = sphi 0, %s158
    %s160 = sphi 0, %s158
    %s161 = sphi 0, %s160
    %s175 = sphi 0, %s161
    %s179 = sphi 0, %s179
    %s181 = sphi 0, %s179
    %s182 = sphi 0, %s181
    %s196 = sphi 0, %s182
    %s202 = sphi 0, %s204
    %s205 = sphi 0, %s202
    %s206 = sphi 0, %s205
    %s222 = sphi 0, %s206
  $region4: #{custom_decoder_block_forward.1} parent=0 // loop_header_branch
    %17 = sbr.rel (%p15) target = $region8
  $region5: #{custom_decoder_block_forward.1} parent=0 // loop_body
    %s19 = ssub.s32 %s14, 1
    %s20 = ssub.s32 %s14, 2
    %s21 = sadd.s32 %s14, 1
    %s22 = ssub.s32 %s14, %s21
    %p23 = scmp.eq.s32.totalorder %s22, 0
    %s25 = sadd.s32 %s24, 1
    %s26 = scalar_select %p23, %s24, %s25
    %p29 = pneg %p23
    %p30 = scmp.eq.s32.totalorder %s14, 1
    %p31 = por %p29, %p30
    %p32 = scmp.ne.s32.totalorder %s24, %s27
    %p33 = scmp.eq.s32.totalorder %s14, 0
    %p34 = por %p32, %p33
    %p35 = scmp.ne.s32.totalorder %s24, %s27
    %p36 = scmp.eq.s32.totalorder %s19, 1
    %p37 = por %p35, %p36
    %p38 = scmp.ne.s32.totalorder %s27, %s28
    %p39 = scmp.eq.s32.totalorder %s19, 0
    %p40 = por %p38, %p39
    %p41 = scmp.ne.s32.totalorder %s27, %s28
    %p42 = scmp.eq.s32.totalorder %s20, 1
    %p43 = por %p41, %p42
    %p45 = scmp.ne.s32.totalorder %s28, %s44
    %p46 = scmp.eq.s32.totalorder %s20, 0
    %p47 = por %p45, %p46
    %s48 = ssub.s32 %s14, %s21
    %p49 = scmp.eq.s32.totalorder %s48, 0
    %s51 = sadd.s32 %s50, 1
    %s52 = scalar_select %p49, %s50, %s51
    %p55 = pneg %p49
    %p56 = scmp.eq.s32.totalorder %s14, 1
    %p57 = por %p55, %p56
    %p58 = scmp.ne.s32.totalorder %s50, %s53
    %p59 = scmp.eq.s32.totalorder %s14, 0
    %p60 = por %p58, %p59
    %p61 = scmp.ne.s32.totalorder %s50, %s53
    %p62 = scmp.eq.s32.totalorder %s19, 1
    %p63 = por %p61, %p62
    %p64 = scmp.ne.s32.totalorder %s53, %s54
    %p65 = scmp.eq.s32.totalorder %s19, 0
    %p66 = por %p64, %p65
    %p67 = scmp.ne.s32.totalorder %s53, %s54
    %p68 = scmp.eq.s32.totalorder %s20, 1
    %p69 = por %p67, %p68
    %p71 = scmp.ne.s32.totalorder %s54, %s70
    %p72 = scmp.eq.s32.totalorder %s20, 0
    %p73 = por %p71, %p72
    %s75 = sadd.s32 %s74, 1
    %p78 = scmp.eq.s32.totalorder %s14, 1
    %p79 = scmp.ne.s32.totalorder %s74, %s76
    %p80 = scmp.eq.s32.totalorder %s14, 0
    %p81 = por %p79, %p80
    %p82 = scmp.ne.s32.totalorder %s74, %s76
    %p83 = scmp.eq.s32.totalorder %s19, 1
    %p84 = por %p82, %p83
    %p85 = scmp.ne.s32.totalorder %s76, %s77
    %p86 = scmp.eq.s32.totalorder %s19, 0
    %p87 = por %p85, %p86
    %p88 = scmp.ne.s32.totalorder %s76, %s77
    %p89 = scmp.eq.s32.totalorder %s20, 1
    %p90 = por %p88, %p89
    %p92 = scmp.ne.s32.totalorder %s77, %s91
    %p93 = scmp.eq.s32.totalorder %s20, 0
    %p94 = por %p92, %p93
    %s96 = sadd.s32 %s95, 1
    %p99 = scmp.eq.s32.totalorder %s14, 1
    %p100 = scmp.ne.s32.totalorder %s95, %s97
    %p101 = scmp.eq.s32.totalorder %s14, 0
    %p102 = por %p100, %p101
    %p103 = scmp.ne.s32.totalorder %s95, %s97
    %p104 = scmp.eq.s32.totalorder %s19, 1
    %p105 = por %p103, %p104
    %p106 = scmp.ne.s32.totalorder %s97, %s98
    %p107 = scmp.eq.s32.totalorder %s19, 0
    %p108 = por %p106, %p107
    %p109 = scmp.ne.s32.totalorder %s97, %s98
    %p110 = scmp.eq.s32.totalorder %s20, 1
    %p111 = por %p109, %p110
    %p113 = scmp.ne.s32.totalorder %s98, %s112
    %p114 = scmp.eq.s32.totalorder %s20, 0
    %p115 = por %p113, %p114
    %s117 = sadd.s32 %s116, 1
    %p120 = scmp.eq.s32.totalorder %s14, 1
    %p121 = scmp.ne.s32.totalorder %s116, %s118
    %p122 = scmp.eq.s32.totalorder %s14, 0
    %p123 = por %p121, %p122
    %p124 = scmp.ne.s32.totalorder %s116, %s118
    %p125 = scmp.eq.s32.totalorder %s19, 1
    %p126 = por %p124, %p125
    %p127 = scmp.ne.s32.totalorder %s118, %s119
    %p128 = scmp.eq.s32.totalorder %s19, 0
    %p129 = por %p127, %p128
    %p130 = scmp.ne.s32.totalorder %s118, %s119
    %p131 = scmp.eq.s32.totalorder %s20, 1
    %p132 = por %p130, %p131
    %p134 = scmp.ne.s32.totalorder %s119, %s133
    %p135 = scmp.eq.s32.totalorder %s20, 0
    %p136 = por %p134, %p135
    %s138 = sadd.s32 %s137, 1
    %p141 = scmp.eq.s32.totalorder %s14, 1
    %p142 = scmp.ne.s32.totalorder %s137, %s139
    %p143 = scmp.eq.s32.totalorder %s14, 0
    %p144 = por %p142, %p143
    %p145 = scmp.ne.s32.totalorder %s137, %s139
    %p146 = scmp.eq.s32.totalorder %s19, 1
    %p147 = por %p145, %p146
    %p148 = scmp.ne.s32.totalorder %s139, %s140
    %p149 = scmp.eq.s32.totalorder %s19, 0
    %p150 = por %p148, %p149
    %p151 = scmp.ne.s32.totalorder %s139, %s140
    %p152 = scmp.eq.s32.totalorder %s20, 1
    %p153 = por %p151, %p152
    %p155 = scmp.ne.s32.totalorder %s140, %s154
    %p156 = scmp.eq.s32.totalorder %s20, 0
    %p157 = por %p155, %p156
    %s159 = sadd.s32 %s158, 1
    %p162 = scmp.eq.s32.totalorder %s14, 1
    %p163 = scmp.ne.s32.totalorder %s158, %s160
    %p164 = scmp.eq.s32.totalorder %s14, 0
    %p165 = por %p163, %p164
    %p166 = scmp.ne.s32.totalorder %s158, %s160
    %p167 = scmp.eq.s32.totalorder %s19, 1
    %p168 = por %p166, %p167
    %p169 = scmp.ne.s32.totalorder %s160, %s161
    %p170 = scmp.eq.s32.totalorder %s19, 0
    %p171 = por %p169, %p170
    %p172 = scmp.ne.s32.totalorder %s160, %s161
    %p173 = scmp.eq.s32.totalorder %s20, 1
    %p174 = por %p172, %p173
    %p176 = scmp.ne.s32.totalorder %s161, %s175
    %p177 = scmp.eq.s32.totalorder %s20, 0
    %p178 = por %p176, %p177
    %s180 = sadd.s32 %s179, 1
    %p183 = scmp.eq.s32.totalorder %s14, 1
    %p184 = scmp.ne.s32.totalorder %s179, %s181
    %p185 = scmp.eq.s32.totalorder %s14, 0
    %p186 = por %p184, %p185
    %p187 = scmp.ne.s32.totalorder %s179, %s181
    %p188 = scmp.eq.s32.totalorder %s19, 1
    %p189 = por %p187, %p188
    %p190 = scmp.ne.s32.totalorder %s181, %s182
    %p191 = scmp.eq.s32.totalorder %s19, 0
    %p192 = por %p190, %p191
    %p193 = scmp.ne.s32.totalorder %s181, %s182
    %p194 = scmp.eq.s32.totalorder %s20, 1
    %p195 = por %p193, %p194
    %p197 = scmp.ne.s32.totalorder %s182, %s196
    %p198 = scmp.eq.s32.totalorder %s20, 0
    %p199 = por %p197, %p198
    %s200 = ssub.s32 %s14, %s21
    %p201 = scmp.eq.s32.totalorder %s200, 0
    %s203 = sadd.s32 %s202, 1
    %s204 = scalar_select %p201, %s202, %s203
    %p207 = pneg %p201
    %p208 = scmp.eq.s32.totalorder %s14, 1
    %p209 = por %p207, %p208
    %p210 = scmp.ne.s32.totalorder %s202, %s205
    %p211 = scmp.eq.s32.totalorder %s14, 0
    %p212 = por %p210, %p211
    %p213 = scmp.ne.s32.totalorder %s202, %s205
    %p214 = scmp.eq.s32.totalorder %s19, 1
    %p215 = por %p213, %p214
    %p216 = scmp.ne.s32.totalorder %s205, %s206
    %p217 = scmp.eq.s32.totalorder %s19, 0
    %p218 = por %p216, %p217
    %p219 = scmp.ne.s32.totalorder %s205, %s206
    %p220 = scmp.eq.s32.totalorder %s20, 1
    %p221 = por %p219, %p220
    %p223 = scmp.ne.s32.totalorder %s206, %s222
    %p224 = scmp.eq.s32.totalorder %s20, 0
    %p225 = por %p223, %p224
    %p226 = scmp.le.s32.totalorder 1, %s14
    %p227 = scmp.lt.s32.totalorder %s14, 3
    %p228 = pnand %p226, %p227
    %p229 = pneg %p228
    // Predicated region
    $region9: #{custom_decoder_block_forward.1} parent=5 // pred_check
      _
    $region10: #{custom_decoder_block_forward.1} parent=5 // pred_check_branch
      %231 = sbr.rel (%p228) target = $region12
    $region11: #{custom_decoder_block_forward.1} parent=5 // pred_region
      %s232 = ssub.s32 %s14, 1
      // Predicated region
      $region13: #{custom_decoder_block_forward.1} parent=11 // pred_check
        %p233 = pneg %p87
      $region14: #{custom_decoder_block_forward.1} parent=11 // pred_check_branch
        %235 = sbr.rel (%p233) target = $region16
      $region15: #{custom_decoder_block_forward.1} parent=11 // pred_region
        _
      $region16: #{custom_decoder_block_forward.1} parent=11 // pred_fallthru
        _
      // Predicated region
      $region17: #{custom_decoder_block_forward.1} parent=11 // pred_check
        %p236 = pneg %p108
      $region18: #{custom_decoder_block_forward.1} parent=11 // pred_check_branch
        %238 = sbr.rel (%p236) target = $region20
      $region19: #{custom_decoder_block_forward.1} parent=11 // pred_region
        _
      $region20: #{custom_decoder_block_forward.1} parent=11 // pred_fallthru
        _
      // Predicated region
      $region21: #{custom_decoder_block_forward.1} parent=11 // pred_check
        %p239 = pneg %p129
      $region22: #{custom_decoder_block_forward.1} parent=11 // pred_check_branch
        %241 = sbr.rel (%p239) target = $region24
      $region23: #{custom_decoder_block_forward.1} parent=11 // pred_region
        _
      $region24: #{custom_decoder_block_forward.1} parent=11 // pred_fallthru
        _
      // Predicated region
      $region25: #{custom_decoder_block_forward.1} parent=11 // pred_check
        %p242 = pneg %p150
      $region26: #{custom_decoder_block_forward.1} parent=11 // pred_check_branch
        %244 = sbr.rel (%p242) target = $region28
      $region27: #{custom_decoder_block_forward.1} parent=11 // pred_region
        _
      $region28: #{custom_decoder_block_forward.1} parent=11 // pred_fallthru
        _
      // Predicated region
      $region29: #{custom_decoder_block_forward.1} parent=11 // pred_check
        %p245 = pneg %p171
      $region30: #{custom_decoder_block_forward.1} parent=11 // pred_check_branch
        %247 = sbr.rel (%p245) target = $region32
      $region31: #{custom_decoder_block_forward.1} parent=11 // pred_region
        _
      $region32: #{custom_decoder_block_forward.1} parent=11 // pred_fallthru
        _
      // Predicated region
      $region33: #{custom_decoder_block_forward.1} parent=11 // pred_check
        %p248 = pneg %p192
      $region34: #{custom_decoder_block_forward.1} parent=11 // pred_check_branch
        %250 = sbr.rel (%p248) target = $region36
      $region35: #{custom_decoder_block_forward.1} parent=11 // pred_region
        _
      $region36: #{custom_decoder_block_forward.1} parent=11 // pred_fallthru
        _
    $region12: #{custom_decoder_block_forward.1} parent=5 // pred_fallthru
      _
    %p251 = scmp.lt.s32.totalorder %s14, 2
    // Predicated region
    $region37: #{custom_decoder_block_forward.1} parent=5 // pred_check
      %p252 = pneg %p251
    $region38: #{custom_decoder_block_forward.1} parent=5 // pred_check_branch
      %254 = sbr.rel (%p252) target = $region40
    $region39: #{custom_decoder_block_forward.1} parent=5 // pred_region
      // Predicated region
      $region41: #{custom_decoder_block_forward.1} parent=39 // pred_check
        %p255 = pneg %p34
      $region42: #{custom_decoder_block_forward.1} parent=39 // pred_check_branch
        %257 = sbr.rel (%p255) target = $region44
      $region43: #{custom_decoder_block_forward.1} parent=39 // pred_region
        %p258 = scmp.lt.s32.totalorder %s14, 1
        %s259 = scalar_select %p258, %s14, 1
        %s260 = smul.addr %s259, 16
        %s261 = smul.addr %s260, 4
        %s262 = scalar_lea.vmem %s0, %s261
      $region44: #{custom_decoder_block_forward.1} parent=39 // pred_fallthru
        _
      // Predicated region
      $region45: #{custom_decoder_block_forward.1} parent=39 // pred_check
        %p263 = pneg %p60
      $region46: #{custom_decoder_block_forward.1} parent=39 // pred_check_branch
        %265 = sbr.rel (%p263) target = $region48
      $region47: #{custom_decoder_block_forward.1} parent=39 // pred_region
        %p266 = scmp.lt.s32.totalorder %s14, 1
        %s267 = scalar_select %p266, %s14, 1
        %s268 = smul.addr %s267, 32
        %s269 = smul.addr %s268, 4
        %s270 = scalar_lea.vmem %s1, %s269
      $region48: #{custom_decoder_block_forward.1} parent=39 // pred_fallthru
        _
    $region40: #{custom_decoder_block_forward.1} parent=5 // pred_fallthru
      _
    %p271 = scmp.le.s32.totalorder 1, %s14
    %p272 = scmp.lt.s32.totalorder %s14, 3
    %p273 = pnand %p271, %p272
    %p274 = pneg %p273
    // Predicated region
    $region49: #{custom_decoder_block_forward.1} parent=5 // pred_check
      _
    $region50: #{custom_decoder_block_forward.1} parent=5 // pred_check_branch
      %276 = sbr.rel (%p273) target = $region52
    $region51: #{custom_decoder_block_forward.1} parent=5 // pred_region
      %s277 = ssub.s32 %s14, 1
      %p278 = scmp.lt.s32.totalorder %s19, 1
      %s279 = scalar_select %p278, %s19, 1
      %s280 = smul.addr %s279, 16
      %s281 = smul.addr %s280, 4
      %s282 = scalar_lea.vmem %s0, %s281
      %p283 = pneg %p40
      %p284 = pneg %p37
      %p285 = scmp.lt.s32.totalorder %s19, 1
      %s286 = scalar_select %p285, %s19, 1
      %s287 = smul.addr %s286, 32
      %s288 = smul.addr %s287, 4
      %s289 = scalar_lea.vmem %s1, %s288
      %p290 = pneg %p66
      %p291 = pneg %p63
      %p292 = pneg %p87
      %p293 = pneg %p84
      %p294 = pneg %p108
      %p295 = pneg %p105
      %p296 = pneg %p129
      %p297 = pneg %p126
      %p298 = pneg %p150
      %p299 = pneg %p147
      %p300 = pneg %p171
      %p301 = pneg %p168
      %p302 = pneg %p192
      %p303 = pneg %p189
      %p304 = pneg %p218
      %p305 = pneg %p215
      %p306 = scmp.lt.s32.totalorder %s19, 1
      %s307 = scalar_select %p306, %s19, 1
      %s308 = smul.addr %s307, 32
      %s309 = smul.addr %s308, 4
      %s310 = scalar_lea.vmem %s8, %s309
      %p311 = scmp.lt.s32.totalorder %s19, 1
      %s312 = scalar_select %p311, %s19, 1
      %s313 = smul.addr %s312, 16
      %s314 = smul.addr %s313, 4
      %s315 = scalar_lea.vmem %s0, %s314
      %p316 = scmp.lt.s32.totalorder %s19, 1
      %s317 = scalar_select %p316, %s19, 1
      %s318 = smul.addr %s317, 32
      %s319 = smul.addr %s318, 4
      %s320 = scalar_lea.vmem %s1, %s319
      %p321 = scmp.lt.s32.totalorder %s19, 1
      %s322 = scalar_select %p321, %s19, 1
      %s323 = smul.addr %s322, 32
      %s324 = smul.addr %s323, 4
      %s325 = scalar_lea.vmem %s8, %s324
      %327 = vst [vmem:[#allocation2] sm:$0xf] 0
      %328 = vst [vmem:[#allocation2 + $0x4] sm:$0xf] 0
      %329 = vst [vmem:[#allocation2 + $0x8] sm:$0x1] 0
      %s330 = scalar_lea.vmem [#allocation2], 204
      %331 = vst [vmem:[%s330] sm:$0xf] 0
      %332 = vst [vmem:[%s330 + $0x4] sm:$0xf] 0
      %333 = vst [vmem:[%s330 + $0x8] sm:$0x1] 0
      %s334 = scalar_lea.vmem [#allocation2], 12
      %vm335 = vcmask 1040384
      %vm336 = vsmask.f32 256
      %vm337 = vmand %vm335, %vm336
      %v338 = vld [vmem:[%s334] sm:$0x1]
      %v339 = vsel %vm337, 0, %v338
      %340 = vst [vmem:[%s334] sm:$0x1] %v339
      %v341 = vld [vmem:[%s334 + $0xc] sm:$0x1]
      %v342 = vsel %vm337, 0, %v341
      %343 = vst [vmem:[%s334 + $0xc] sm:$0x1] %v342
      %v344 = vld [vmem:[%s334 + $0x18] sm:$0x1]
      %v345 = vsel %vm337, 0, %v344
      %346 = vst [vmem:[%s334 + $0x18] sm:$0x1] %v345
      %v347 = vld [vmem:[%s334 + $0x24] sm:$0x1]
      %v348 = vsel %vm337, 0, %v347
      %349 = vst [vmem:[%s334 + $0x24] sm:$0x1] %v348
      %v350 = vld [vmem:[%s334 + $0x30] sm:$0x1]
      %v351 = vsel %vm337, 0, %v350
      %352 = vst [vmem:[%s334 + $0x30] sm:$0x1] %v351
      %v353 = vld [vmem:[%s334 + $0x3c] sm:$0x1]
      %v354 = vsel %vm337, 0, %v353
      %355 = vst [vmem:[%s334 + $0x3c] sm:$0x1] %v354
      %v356 = vld [vmem:[%s334 + $0x48] sm:$0x1]
      %v357 = vsel %vm337, 0, %v356
      %358 = vst [vmem:[%s334 + $0x48] sm:$0x1] %v357
      %v359 = vld [vmem:[%s334 + $0x54] sm:$0x1]
      %v360 = vsel %vm337, 0, %v359
      %361 = vst [vmem:[%s334 + $0x54] sm:$0x1] %v360
      %v362 = vld [vmem:[%s334 + $0x60] sm:$0x1]
      %v363 = vsel %vm337, 0, %v362
      %364 = vst [vmem:[%s334 + $0x60] sm:$0x1] %v363
      %v365 = vld [vmem:[%s334 + $0x6c] sm:$0x1]
      %v366 = vsel %vm337, 0, %v365
      %367 = vst [vmem:[%s334 + $0x6c] sm:$0x1] %v366
      %v368 = vld [vmem:[%s334 + $0x78] sm:$0x1]
      %v369 = vsel %vm337, 0, %v368
      %370 = vst [vmem:[%s334 + $0x78] sm:$0x1] %v369
      %v371 = vld [vmem:[%s334 + $0x84] sm:$0x1]
      %v372 = vsel %vm337, 0, %v371
      %373 = vst [vmem:[%s334 + $0x84] sm:$0x1] %v372
      %v374 = vld [vmem:[%s334 + $0x90] sm:$0x1]
      %v375 = vsel %vm337, 0, %v374
      %376 = vst [vmem:[%s334 + $0x90] sm:$0x1] %v375
      %v377 = vld [vmem:[%s334 + $0x9c] sm:$0x1]
      %v378 = vsel %vm337, 0, %v377
      %379 = vst [vmem:[%s334 + $0x9c] sm:$0x1] %v378
      %v380 = vld [vmem:[%s334 + $0xa8] sm:$0x1]
      %v381 = vsel %vm337, 0, %v380
      %382 = vst [vmem:[%s334 + $0xa8] sm:$0x1] %v381
      %v383 = vld [vmem:[%s334 + $0xb4] sm:$0x1]
      %v384 = vsel %vm337, 0, %v383
      %385 = vst [vmem:[%s334 + $0xb4] sm:$0x1] %v384
      %vm386 = vsmask.f32 7938
      %vm387 = vmand %vm335, %vm386
      %v388 = vld [vmem:[%s334 + $0x8] sm:$0x1]
      %v389 = vsel %vm387, 0, %v388
      %390 = vst [vmem:[%s334 + $0x8] sm:$0x1] %v389
      %v391 = vld [vmem:[%s334 + $0x14] sm:$0x1]
      %v392 = vsel %vm387, 0, %v391
      %393 = vst [vmem:[%s334 + $0x14] sm:$0x1] %v392
      %v394 = vld [vmem:[%s334 + $0x20] sm:$0x1]
      %v395 = vsel %vm387, 0, %v394
      %396 = vst [vmem:[%s334 + $0x20] sm:$0x1] %v395
      %v397 = vld [vmem:[%s334 + $0x2c] sm:$0x1]
      %v398 = vsel %vm387, 0, %v397
      %399 = vst [vmem:[%s334 + $0x2c] sm:$0x1] %v398
      %v400 = vld [vmem:[%s334 + $0x38] sm:$0x1]
      %v401 = vsel %vm387, 0, %v400
      %402 = vst [vmem:[%s334 + $0x38] sm:$0x1] %v401
      %v403 = vld [vmem:[%s334 + $0x44] sm:$0x1]
      %v404 = vsel %vm387, 0, %v403
      %405 = vst [vmem:[%s334 + $0x44] sm:$0x1] %v404
      %v406 = vld [vmem:[%s334 + $0x50] sm:$0x1]
      %v407 = vsel %vm387, 0, %v406
      %408 = vst [vmem:[%s334 + $0x50] sm:$0x1] %v407
      %v409 = vld [vmem:[%s334 + $0x5c] sm:$0x1]
      %v410 = vsel %vm387, 0, %v409
      %411 = vst [vmem:[%s334 + $0x5c] sm:$0x1] %v410
      %v412 = vld [vmem:[%s334 + $0x68] sm:$0x1]
      %v413 = vsel %vm387, 0, %v412
      %414 = vst [vmem:[%s334 + $0x68] sm:$0x1] %v413
      %v415 = vld [vmem:[%s334 + $0x74] sm:$0x1]
      %v416 = vsel %vm387, 0, %v415
      %417 = vst [vmem:[%s334 + $0x74] sm:$0x1] %v416
      %v418 = vld [vmem:[%s334 + $0x80] sm:$0x1]
      %v419 = vsel %vm387, 0, %v418
      %420 = vst [vmem:[%s334 + $0x80] sm:$0x1] %v419
      %v421 = vld [vmem:[%s334 + $0x8c] sm:$0x1]
      %v422 = vsel %vm387, 0, %v421
      %423 = vst [vmem:[%s334 + $0x8c] sm:$0x1] %v422
      %v424 = vld [vmem:[%s334 + $0x98] sm:$0x1]
      %v425 = vsel %vm387, 0, %v424
      %426 = vst [vmem:[%s334 + $0x98] sm:$0x1] %v425
      %v427 = vld [vmem:[%s334 + $0xa4] sm:$0x1]
      %v428 = vsel %vm387, 0, %v427
      %429 = vst [vmem:[%s334 + $0xa4] sm:$0x1] %v428
      %v430 = vld [vmem:[%s334 + $0xb0] sm:$0x1]
      %v431 = vsel %vm387, 0, %v430
      %432 = vst [vmem:[%s334 + $0xb0] sm:$0x1] %v431
      %v433 = vld [vmem:[%s334 + $0xbc] sm:$0x1]
      %v434 = vsel %vm387, 0, %v433
      %435 = vst [vmem:[%s334 + $0xbc] sm:$0x1] %v434
      %v436 = vld [vmem:[%s315] sm:$0xf]
      %v437 = vld [vmem:[%s315 + $0x4] sm:$0xf]
      %v438 = vld [vmem:[%s315 + $0x8] sm:$0xf]
      %v439 = vld [vmem:[%s315 + $0xc] sm:$0xf]
      %v440 = vld [vmem:[%s315 + $0x10] sm:$0xf]
      %v441 = vld [vmem:[%s315 + $0x14] sm:$0xf]
      %v442 = vld [vmem:[%s315 + $0x18] sm:$0xf]
      %v443 = vld [vmem:[%s315 + $0x1c] sm:$0xf]
      %v444 = vld [vmem:[%s315 + $0x20] sm:$0xf]
      %v445 = vld [vmem:[%s315 + $0x24] sm:$0xf]
      %v446 = vld [vmem:[%s315 + $0x28] sm:$0xf]
      %v447 = vld [vmem:[%s315 + $0x2c] sm:$0xf]
      %v448 = vld [vmem:[%s315 + $0x30] sm:$0xf]
      %v449 = vld [vmem:[%s315 + $0x34] sm:$0xf]
      %v450 = vld [vmem:[%s315 + $0x38] sm:$0xf]
      %v451 = vld [vmem:[%s315 + $0x3c] sm:$0xf]
      %v452 = vld [vmem:[%s320] sm:$0xf]
      %v453 = vld [vmem:[%s320 + $0x4] sm:$0xf]
      %v454 = vld [vmem:[%s320 + $0x8] sm:$0xf]
      %v455 = vld [vmem:[%s320 + $0xc] sm:$0xf]
      %v456 = vld [vmem:[%s320 + $0x10] sm:$0xf]
      %v457 = vld [vmem:[%s320 + $0x14] sm:$0xf]
      %v458 = vld [vmem:[%s320 + $0x18] sm:$0xf]
      %v459 = vld [vmem:[%s320 + $0x1c] sm:$0xf]
      %v460 = vld [vmem:[%s320 + $0x20] sm:$0xf]
      %v461 = vld [vmem:[%s320 + $0x24] sm:$0xf]
      %v462 = vld [vmem:[%s320 + $0x28] sm:$0xf]
      %v463 = vld [vmem:[%s320 + $0x2c] sm:$0xf]
      %v464 = vld [vmem:[%s320 + $0x30] sm:$0xf]
      %v465 = vld [vmem:[%s320 + $0x34] sm:$0xf]
      %v466 = vld [vmem:[%s320 + $0x38] sm:$0xf]
      %v467 = vld [vmem:[%s320 + $0x3c] sm:$0xf]
      %v468 = vld [vmem:[%s320 + $0x40] sm:$0xf]
      %v469 = vld [vmem:[%s320 + $0x44] sm:$0xf]
      %v470 = vld [vmem:[%s320 + $0x48] sm:$0xf]
      %v471 = vld [vmem:[%s320 + $0x4c] sm:$0xf]
      %v472 = vld [vmem:[%s320 + $0x50] sm:$0xf]
      %v473 = vld [vmem:[%s320 + $0x54] sm:$0xf]
      %v474 = vld [vmem:[%s320 + $0x58] sm:$0xf]
      %v475 = vld [vmem:[%s320 + $0x5c] sm:$0xf]
      %v476 = vld [vmem:[%s320 + $0x60] sm:$0xf]
      %v477 = vld [vmem:[%s320 + $0x64] sm:$0xf]
      %v478 = vld [vmem:[%s320 + $0x68] sm:$0xf]
      %v479 = vld [vmem:[%s320 + $0x6c] sm:$0xf]
      %v480 = vld [vmem:[%s320 + $0x70] sm:$0xf]
      %v481 = vld [vmem:[%s320 + $0x74] sm:$0xf]
      %v482 = vld [vmem:[%s320 + $0x78] sm:$0xf]
      %v483 = vld [vmem:[%s320 + $0x7c] sm:$0xf]
      %v500 = vunpack.c.l.b16 %v436
      %v501 = vunpack.c.l.b16 %v437
      %v502 = vunpack.c.l.b16 %v438
      %v503 = vunpack.c.l.b16 %v439
      %v504 = vunpack.c.l.b16 %v440
      %v505 = vunpack.c.l.b16 %v441
      %v506 = vunpack.c.l.b16 %v442
      %v507 = vunpack.c.l.b16 %v443
      %v508 = vunpack.c.l.b16 %v444
      %v509 = vunpack.c.l.b16 %v445
      %v510 = vunpack.c.l.b16 %v446
      %v511 = vunpack.c.l.b16 %v447
      %v512 = vunpack.c.l.b16 %v448
      %v513 = vunpack.c.l.b16 %v449
      %v514 = vunpack.c.l.b16 %v450
      %v515 = vunpack.c.l.b16 %v451
      %v516 = vpack.c.b16 %v501, %v500
      %v517 = vpack.c.b16 %v503, %v502
      %v518 = vpack.c.b16 %v505, %v504
      %v519 = vpack.c.b16 %v507, %v506
      %v520 = vpack.c.b16 %v509, %v508
      %v521 = vpack.c.b16 %v511, %v510
      %v522 = vpack.c.b16 %v513, %v512
      %v523 = vpack.c.b16 %v515, %v514
      %v556 = vunpack.c.l.b16 %v452
      %v557 = vunpack.c.l.b16 %v453
      %v558 = vunpack.c.l.b16 %v454
      %v559 = vunpack.c.l.b16 %v455
      %v560 = vunpack.c.l.b16 %v456
      %v561 = vunpack.c.l.b16 %v457
      %v562 = vunpack.c.l.b16 %v458
      %v563 = vunpack.c.l.b16 %v459
      %v564 = vunpack.c.l.b16 %v460
      %v565 = vunpack.c.l.b16 %v461
      %v566 = vunpack.c.l.b16 %v462
      %v567 = vunpack.c.l.b16 %v463
      %v568 = vunpack.c.l.b16 %v464
      %v569 = vunpack.c.l.b16 %v465
      %v570 = vunpack.c.l.b16 %v466
      %v571 = vunpack.c.l.b16 %v467
      %v572 = vunpack.c.l.b16 %v468
      %v573 = vunpack.c.l.b16 %v469
      %v574 = vunpack.c.l.b16 %v470
      %v575 = vunpack.c.l.b16 %v471
      %v576 = vunpack.c.l.b16 %v472
      %v577 = vunpack.c.l.b16 %v473
      %v578 = vunpack.c.l.b16 %v474
      %v579 = vunpack.c.l.b16 %v475
      %v580 = vunpack.c.l.b16 %v476
      %v581 = vunpack.c.l.b16 %v477
      %v582 = vunpack.c.l.b16 %v478
      %v583 = vunpack.c.l.b16 %v479
      %v584 = vunpack.c.l.b16 %v480
      %v585 = vunpack.c.l.b16 %v481
      %v586 = vunpack.c.l.b16 %v482
      %v587 = vunpack.c.l.b16 %v483
      %v588 = vpack.c.b16 %v557, %v556
      %v589 = vpack.c.b16 %v559, %v558
      %v590 = vpack.c.b16 %v561, %v560
      %v591 = vpack.c.b16 %v563, %v562
      %v592 = vpack.c.b16 %v565, %v564
      %v593 = vpack.c.b16 %v567, %v566
      %v594 = vpack.c.b16 %v569, %v568
      %v595 = vpack.c.b16 %v571, %v570
      %v596 = vpack.c.b16 %v573, %v572
      %v597 = vpack.c.b16 %v575, %v574
      %v598 = vpack.c.b16 %v577, %v576
      %v599 = vpack.c.b16 %v579, %v578
      %v600 = vpack.c.b16 %v581, %v580
      %v601 = vpack.c.b16 %v583, %v582
      %v602 = vpack.c.b16 %v585, %v584
      %v603 = vpack.c.b16 %v587, %v586
      %604 = vrot.lane.b32.xlu0 %v588, 4
      %v605 = vpop.permute.xlu0 %604
      %606 = vrot.lane.b32.xlu0 %v589, 4
      %v607 = vpop.permute.xlu0 %606
      %608 = vrot.lane.b32.xlu0 %v590, 4
      %v609 = vpop.permute.xlu0 %608
      %610 = vrot.lane.b32.xlu0 %v591, 4
      %v611 = vpop.permute.xlu0 %610
      %612 = vrot.lane.b32.xlu0 %v592, 4
      %v613 = vpop.permute.xlu0 %612
      %614 = vrot.lane.b32.xlu0 %v593, 4
      %v615 = vpop.permute.xlu0 %614
      %616 = vrot.lane.b32.xlu0 %v594, 4
      %v617 = vpop.permute.xlu0 %616
      %618 = vrot.lane.b32.xlu0 %v595, 4
      %v619 = vpop.permute.xlu0 %618
      %620 = vrot.lane.b32.xlu0 %v596, 4
      %v621 = vpop.permute.xlu0 %620
      %622 = vrot.lane.b32.xlu0 %v597, 4
      %v623 = vpop.permute.xlu0 %622
      %624 = vrot.lane.b32.xlu0 %v598, 4
      %v625 = vpop.permute.xlu0 %624
      %626 = vrot.lane.b32.xlu0 %v599, 4
      %v627 = vpop.permute.xlu0 %626
      %628 = vrot.lane.b32.xlu0 %v600, 4
      %v629 = vpop.permute.xlu0 %628
      %630 = vrot.lane.b32.xlu0 %v601, 4
      %v631 = vpop.permute.xlu0 %630
      %632 = vrot.lane.b32.xlu0 %v602, 4
      %v633 = vpop.permute.xlu0 %632
      %634 = vrot.lane.b32.xlu0 %v603, 4
      %v635 = vpop.permute.xlu0 %634
      %vm636 = vcmask 31744
      %v639 = vsel %vm636, %v516, %v605
      %v641 = vsel %vm636, %v516, %v607
      %v644 = vsel %vm636, %v517, %v609
      %v646 = vsel %vm636, %v517, %v611
      %v649 = vsel %vm636, %v518, %v613
      %v651 = vsel %vm636, %v518, %v615
      %v654 = vsel %vm636, %v519, %v617
      %v656 = vsel %vm636, %v519, %v619
      %v659 = vsel %vm636, %v520, %v621
      %v661 = vsel %vm636, %v520, %v623
      %v664 = vsel %vm636, %v521, %v625
      %v666 = vsel %vm636, %v521, %v627
      %v669 = vsel %vm636, %v522, %v629
      %v671 = vsel %vm636, %v522, %v631
      %v674 = vsel %vm636, %v523, %v633
      %v676 = vsel %vm636, %v523, %v635
      %vm677 = vcmask 64512
      %v679 = vsel %vm677, %v639, 0
      %v680 = vsel %vm677, %v641, 0
      %v681 = vsel %vm677, %v644, 0
      %v682 = vsel %vm677, %v646, 0
      %v683 = vsel %vm677, %v649, 0
      %v684 = vsel %vm677, %v651, 0
      %v685 = vsel %vm677, %v654, 0
      %v686 = vsel %vm677, %v656, 0
      %v687 = vsel %vm677, %v659, 0
      %v688 = vsel %vm677, %v661, 0
      %v689 = vsel %vm677, %v664, 0
      %v690 = vsel %vm677, %v666, 0
      %v691 = vsel %vm677, %v669, 0
      %v692 = vsel %vm677, %v671, 0
      %v693 = vsel %vm677, %v674, 0
      %v694 = vsel %vm677, %v676, 0
      %v711 = vunpack.c.l.b16 %v679
      %v712 = vunpack.c.h.b16 %v679
      %v713 = vunpack.c.l.b16 %v680
      %v714 = vunpack.c.h.b16 %v680
      %v715 = vunpack.c.l.b16 %v681
      %v716 = vunpack.c.h.b16 %v681
      %v717 = vunpack.c.l.b16 %v682
      %v718 = vunpack.c.h.b16 %v682
      %v719 = vunpack.c.l.b16 %v683
      %v720 = vunpack.c.h.b16 %v683
      %v721 = vunpack.c.l.b16 %v684
      %v722 = vunpack.c.h.b16 %v684
      %v723 = vunpack.c.l.b16 %v685
      %v724 = vunpack.c.h.b16 %v685
      %v725 = vunpack.c.l.b16 %v686
      %v726 = vunpack.c.h.b16 %v686
      %v727 = vunpack.c.l.b16 %v687
      %v728 = vunpack.c.h.b16 %v687
      %v729 = vunpack.c.l.b16 %v688
      %v730 = vunpack.c.h.b16 %v688
      %v731 = vunpack.c.l.b16 %v689
      %v732 = vunpack.c.h.b16 %v689
      %v733 = vunpack.c.l.b16 %v690
      %v734 = vunpack.c.h.b16 %v690
      %v735 = vunpack.c.l.b16 %v691
      %v736 = vunpack.c.h.b16 %v691
      %v737 = vunpack.c.l.b16 %v692
      %v738 = vunpack.c.h.b16 %v692
      %v739 = vunpack.c.l.b16 %v693
      %v740 = vunpack.c.h.b16 %v693
      %v741 = vunpack.c.l.b16 %v694
      %v742 = vunpack.c.h.b16 %v694
      %v743 = vpack.c.b16 %v711, %v711
      %v744 = vpack.c.b16 %v712, %v712
      %v745 = vpack.c.b16 %v713, %v713
      %v746 = vpack.c.b16 %v714, %v714
      %v747 = vpack.c.b16 %v715, %v715
      %v748 = vpack.c.b16 %v716, %v716
      %v749 = vpack.c.b16 %v717, %v717
      %v750 = vpack.c.b16 %v718, %v718
      %v751 = vpack.c.b16 %v719, %v719
      %v752 = vpack.c.b16 %v720, %v720
      %v753 = vpack.c.b16 %v721, %v721
      %v754 = vpack.c.b16 %v722, %v722
      %v755 = vpack.c.b16 %v723, %v723
      %v756 = vpack.c.b16 %v724, %v724
      %v757 = vpack.c.b16 %v725, %v725
      %v758 = vpack.c.b16 %v726, %v726
      %v759 = vpack.c.b16 %v727, %v727
      %v760 = vpack.c.b16 %v728, %v728
      %v761 = vpack.c.b16 %v729, %v729
      %v762 = vpack.c.b16 %v730, %v730
      %v763 = vpack.c.b16 %v731, %v731
      %v764 = vpack.c.b16 %v732, %v732
      %v765 = vpack.c.b16 %v733, %v733
      %v766 = vpack.c.b16 %v734, %v734
      %v767 = vpack.c.b16 %v735, %v735
      %v768 = vpack.c.b16 %v736, %v736
      %v769 = vpack.c.b16 %v737, %v737
      %v770 = vpack.c.b16 %v738, %v738
      %v771 = vpack.c.b16 %v739, %v739
      %v772 = vpack.c.b16 %v740, %v740
      %v773 = vpack.c.b16 %v741, %v741
      %v774 = vpack.c.b16 %v742, %v742
      %vm775 = vsmask.f32 4368
      %vm776 = vmor %vm336, %vm775
      %v778 = vshrl.u32 %v743, 16
      %v780 = vrot.slane %v778, 7
      %v781 = vshll.u32 %v743, 16
      %v783 = vor.u32 %v780, %v781
      %v784 = vrot.slane %v780, 4
      %v786 = vshrl.u32 %v744, 16
      %v788 = vrot.slane %v786, 7
      %v789 = vshll.u32 %v744, 16
      %v791 = vor.u32 %v788, %v789
      %v792 = vsel %vm776, %v784, %v791
      %v793 = vrot.slane %v788, 4
      %v795 = vshrl.u32 %v745, 16
      %v797 = vrot.slane %v795, 7
      %v798 = vshll.u32 %v745, 16
      %v800 = vor.u32 %v797, %v798
      %v801 = vrot.slane %v797, 4
      %v803 = vshrl.u32 %v746, 16
      %v805 = vrot.slane %v803, 7
      %v806 = vshll.u32 %v746, 16
      %v808 = vor.u32 %v805, %v806
      %v809 = vsel %vm776, %v801, %v808
      %v810 = vrot.slane %v805, 4
      %v812 = vshrl.u32 %v747, 16
      %v814 = vrot.slane %v812, 7
      %v815 = vshll.u32 %v747, 16
      %v817 = vor.u32 %v814, %v815
      %v818 = vrot.slane %v814, 4
      %v820 = vshrl.u32 %v748, 16
      %v822 = vrot.slane %v820, 7
      %v823 = vshll.u32 %v748, 16
      %v825 = vor.u32 %v822, %v823
      %v826 = vsel %vm776, %v818, %v825
      %v827 = vrot.slane %v822, 4
      %v829 = vshrl.u32 %v749, 16
      %v831 = vrot.slane %v829, 7
      %v832 = vshll.u32 %v749, 16
      %v834 = vor.u32 %v831, %v832
      %v835 = vrot.slane %v831, 4
      %v837 = vshrl.u32 %v750, 16
      %v839 = vrot.slane %v837, 7
      %v840 = vshll.u32 %v750, 16
      %v842 = vor.u32 %v839, %v840
      %v843 = vsel %vm776, %v835, %v842
      %v844 = vrot.slane %v839, 4
      %v846 = vshrl.u32 %v751, 16
      %v848 = vrot.slane %v846, 7
      %v849 = vshll.u32 %v751, 16
      %v851 = vor.u32 %v848, %v849
      %v852 = vrot.slane %v848, 4
      %v854 = vshrl.u32 %v752, 16
      %v856 = vrot.slane %v854, 7
      %v857 = vshll.u32 %v752, 16
      %v859 = vor.u32 %v856, %v857
      %v860 = vsel %vm776, %v852, %v859
      %v861 = vrot.slane %v856, 4
      %v863 = vshrl.u32 %v753, 16
      %v865 = vrot.slane %v863, 7
      %v866 = vshll.u32 %v753, 16
      %v868 = vor.u32 %v865, %v866
      %v869 = vrot.slane %v865, 4
      %v871 = vshrl.u32 %v754, 16
      %v873 = vrot.slane %v871, 7
      %v874 = vshll.u32 %v754, 16
      %v876 = vor.u32 %v873, %v874
      %v877 = vsel %vm776, %v869, %v876
      %v878 = vrot.slane %v873, 4
      %v880 = vshrl.u32 %v755, 16
      %v882 = vrot.slane %v880, 7
      %v883 = vshll.u32 %v755, 16
      %v885 = vor.u32 %v882, %v883
      %v886 = vrot.slane %v882, 4
      %v888 = vshrl.u32 %v756, 16
      %v890 = vrot.slane %v888, 7
      %v891 = vshll.u32 %v756, 16
      %v893 = vor.u32 %v890, %v891
      %v894 = vsel %vm776, %v886, %v893
      %v895 = vrot.slane %v890, 4
      %v897 = vshrl.u32 %v757, 16
      %v899 = vrot.slane %v897, 7
      %v900 = vshll.u32 %v757, 16
      %v902 = vor.u32 %v899, %v900
      %v903 = vrot.slane %v899, 4
      %v905 = vshrl.u32 %v758, 16
      %v907 = vrot.slane %v905, 7
      %v908 = vshll.u32 %v758, 16
      %v910 = vor.u32 %v907, %v908
      %v911 = vsel %vm776, %v903, %v910
      %v912 = vrot.slane %v907, 4
      %v914 = vshrl.u32 %v759, 16
      %v916 = vrot.slane %v914, 7
      %v917 = vshll.u32 %v759, 16
      %v919 = vor.u32 %v916, %v917
      %v920 = vrot.slane %v916, 4
      %v922 = vshrl.u32 %v760, 16
      %v924 = vrot.slane %v922, 7
      %v925 = vshll.u32 %v760, 16
      %v927 = vor.u32 %v924, %v925
      %v928 = vsel %vm776, %v920, %v927
      %v929 = vrot.slane %v924, 4
      %v931 = vshrl.u32 %v761, 16
      %v933 = vrot.slane %v931, 7
      %v934 = vshll.u32 %v761, 16
      %v936 = vor.u32 %v933, %v934
      %v937 = vrot.slane %v933, 4
      %v939 = vshrl.u32 %v762, 16
      %v941 = vrot.slane %v939, 7
      %v942 = vshll.u32 %v762, 16
      %v944 = vor.u32 %v941, %v942
      %v945 = vsel %vm776, %v937, %v944
      %v946 = vrot.slane %v941, 4
      %v948 = vshrl.u32 %v763, 16
      %v950 = vrot.slane %v948, 7
      %v951 = vshll.u32 %v763, 16
      %v953 = vor.u32 %v950, %v951
      %v954 = vrot.slane %v950, 4
      %v956 = vshrl.u32 %v764, 16
      %v958 = vrot.slane %v956, 7
      %v959 = vshll.u32 %v764, 16
      %v961 = vor.u32 %v958, %v959
      %v962 = vsel %vm776, %v954, %v961
      %v963 = vrot.slane %v958, 4
      %v965 = vshrl.u32 %v765, 16
      %v967 = vrot.slane %v965, 7
      %v968 = vshll.u32 %v765, 16
      %v970 = vor.u32 %v967, %v968
      %v971 = vrot.slane %v967, 4
      %v973 = vshrl.u32 %v766, 16
      %v975 = vrot.slane %v973, 7
      %v976 = vshll.u32 %v766, 16
      %v978 = vor.u32 %v975, %v976
      %v979 = vsel %vm776, %v971, %v978
      %v980 = vrot.slane %v975, 4
      %v982 = vshrl.u32 %v767, 16
      %v984 = vrot.slane %v982, 7
      %v985 = vshll.u32 %v767, 16
      %v987 = vor.u32 %v984, %v985
      %v988 = vrot.slane %v984, 4
      %v990 = vshrl.u32 %v768, 16
      %v992 = vrot.slane %v990, 7
      %v993 = vshll.u32 %v768, 16
      %v995 = vor.u32 %v992, %v993
      %v996 = vsel %vm776, %v988, %v995
      %v997 = vrot.slane %v992, 4
      %v999 = vshrl.u32 %v769, 16
      %v1001 = vrot.slane %v999, 7
      %v1002 = vshll.u32 %v769, 16
      %v1004 = vor.u32 %v1001, %v1002
      %v1005 = vrot.slane %v1001, 4
      %v1007 = vshrl.u32 %v770, 16
      %v1009 = vrot.slane %v1007, 7
      %v1010 = vshll.u32 %v770, 16
      %v1012 = vor.u32 %v1009, %v1010
      %v1013 = vsel %vm776, %v1005, %v1012
      %v1014 = vrot.slane %v1009, 4
      %v1016 = vshrl.u32 %v771, 16
      %v1018 = vrot.slane %v1016, 7
      %v1019 = vshll.u32 %v771, 16
      %v1021 = vor.u32 %v1018, %v1019
      %v1022 = vrot.slane %v1018, 4
      %v1024 = vshrl.u32 %v772, 16
      %v1026 = vrot.slane %v1024, 7
      %v1027 = vshll.u32 %v772, 16
      %v1029 = vor.u32 %v1026, %v1027
      %v1030 = vsel %vm776, %v1022, %v1029
      %v1031 = vrot.slane %v1026, 4
      %v1033 = vshrl.u32 %v773, 16
      %v1035 = vrot.slane %v1033, 7
      %v1036 = vshll.u32 %v773, 16
      %v1038 = vor.u32 %v1035, %v1036
      %v1039 = vrot.slane %v1035, 4
      %v1041 = vshrl.u32 %v774, 16
      %v1043 = vrot.slane %v1041, 7
      %v1044 = vshll.u32 %v774, 16
      %v1046 = vor.u32 %v1043, %v1044
      %v1047 = vsel %vm776, %v1039, %v1046
      %v1048 = vrot.slane %v1043, 4
      %vm1097 = vcmask 1043456
      %vm1098 = vmand %vm1097, %vm386
      %v1099 = vld [vmem:[%s334] sm:$0xf]
      %v1100 = vsel %vm1098, %v783, %v1099
      %1101 = vst [vmem:[%s334] sm:$0xf] %v1100
      %1102 = vst [vmem:[%s334 + $0x4] sm:$0xf] %v792
      %v1103 = vld [vmem:[%s334 + $0x8] sm:$0x1]
      %v1104 = vsel %vm337, %v793, %v1103
      %1105 = vst [vmem:[%s334 + $0x8] sm:$0x1] %v1104
      %v1106 = vld [vmem:[%s334 + $0xc] sm:$0xf]
      %v1107 = vsel %vm1098, %v800, %v1106
      %1108 = vst [vmem:[%s334 + $0xc] sm:$0xf] %v1107
      %1109 = vst [vmem:[%s334 + $0x10] sm:$0xf] %v809
      %v1110 = vld [vmem:[%s334 + $0x14] sm:$0x1]
      %v1111 = vsel %vm337, %v810, %v1110
      %1112 = vst [vmem:[%s334 + $0x14] sm:$0x1] %v1111
      %v1113 = vld [vmem:[%s334 + $0x18] sm:$0xf]
      %v1114 = vsel %vm1098, %v817, %v1113
      %1115 = vst [vmem:[%s334 + $0x18] sm:$0xf] %v1114
      %1116 = vst [vmem:[%s334 + $0x1c] sm:$0xf] %v826
      %v1117 = vld [vmem:[%s334 + $0x20] sm:$0x1]
      %v1118 = vsel %vm337, %v827, %v1117
      %1119 = vst [vmem:[%s334 + $0x20] sm:$0x1] %v1118
      %v1120 = vld [vmem:[%s334 + $0x24] sm:$0xf]
      %v1121 = vsel %vm1098, %v834, %v1120
      %1122 = vst [vmem:[%s334 + $0x24] sm:$0xf] %v1121
      %1123 = vst [vmem:[%s334 + $0x28] sm:$0xf] %v843
      %v1124 = vld [vmem:[%s334 + $0x2c] sm:$0x1]
      %v1125 = vsel %vm337, %v844, %v1124
      %1126 = vst [vmem:[%s334 + $0x2c] sm:$0x1] %v1125
      %v1127 = vld [vmem:[%s334 + $0x30] sm:$0xf]
      %v1128 = vsel %vm1098, %v851, %v1127
      %1129 = vst [vmem:[%s334 + $0x30] sm:$0xf] %v1128
      %1130 = vst [vmem:[%s334 + $0x34] sm:$0xf] %v860
      %v1131 = vld [vmem:[%s334 + $0x38] sm:$0x1]
      %v1132 = vsel %vm337, %v861, %v1131
      %1133 = vst [vmem:[%s334 + $0x38] sm:$0x1] %v1132
      %v1134 = vld [vmem:[%s334 + $0x3c] sm:$0xf]
      %v1135 = vsel %vm1098, %v868, %v1134
      %1136 = vst [vmem:[%s334 + $0x3c] sm:$0xf] %v1135
      %1137 = vst [vmem:[%s334 + $0x40] sm:$0xf] %v877
      %v1138 = vld [vmem:[%s334 + $0x44] sm:$0x1]
      %v1139 = vsel %vm337, %v878, %v1138
      %1140 = vst [vmem:[%s334 + $0x44] sm:$0x1] %v1139
      %v1141 = vld [vmem:[%s334 + $0x48] sm:$0xf]
      %v1142 = vsel %vm1098, %v885, %v1141
      %1143 = vst [vmem:[%s334 + $0x48] sm:$0xf] %v1142
      %1144 = vst [vmem:[%s334 + $0x4c] sm:$0xf] %v894
      %v1145 = vld [vmem:[%s334 + $0x50] sm:$0x1]
      %v1146 = vsel %vm337, %v895, %v1145
      %1147 = vst [vmem:[%s334 + $0x50] sm:$0x1] %v1146
      %v1148 = vld [vmem:[%s334 + $0x54] sm:$0xf]
      %v1149 = vsel %vm1098, %v902, %v1148
      %1150 = vst [vmem:[%s334 + $0x54] sm:$0xf] %v1149
      %1151 = vst [vmem:[%s334 + $0x58] sm:$0xf] %v911
      %v1152 = vld [vmem:[%s334 + $0x5c] sm:$0x1]
      %v1153 = vsel %vm337, %v912, %v1152
      %1154 = vst [vmem:[%s334 + $0x5c] sm:$0x1] %v1153
      %v1155 = vld [vmem:[%s334 + $0x60] sm:$0xf]
      %v1156 = vsel %vm1098, %v919, %v1155
      %1157 = vst [vmem:[%s334 + $0x60] sm:$0xf] %v1156
      %1158 = vst [vmem:[%s334 + $0x64] sm:$0xf] %v928
      %v1159 = vld [vmem:[%s334 + $0x68] sm:$0x1]
      %v1160 = vsel %vm337, %v929, %v1159
      %1161 = vst [vmem:[%s334 + $0x68] sm:$0x1] %v1160
      %v1162 = vld [vmem:[%s334 + $0x6c] sm:$0xf]
      %v1163 = vsel %vm1098, %v936, %v1162
      %1164 = vst [vmem:[%s334 + $0x6c] sm:$0xf] %v1163
      %1165 = vst [vmem:[%s334 + $0x70] sm:$0xf] %v945
      %v1166 = vld [vmem:[%s334 + $0x74] sm:$0x1]
      %v1167 = vsel %vm337, %v946, %v1166
      %1168 = vst [vmem:[%s334 + $0x74] sm:$0x1] %v1167
      %v1169 = vld [vmem:[%s334 + $0x78] sm:$0xf]
      %v1170 = vsel %vm1098, %v953, %v1169
      %1171 = vst [vmem:[%s334 + $0x78] sm:$0xf] %v1170
      %1172 = vst [vmem:[%s334 + $0x7c] sm:$0xf] %v962
      %v1173 = vld [vmem:[%s334 + $0x80] sm:$0x1]
      %v1174 = vsel %vm337, %v963, %v1173
      %1175 = vst [vmem:[%s334 + $0x80] sm:$0x1] %v1174
      %v1176 = vld [vmem:[%s334 + $0x84] sm:$0xf]
      %v1177 = vsel %vm1098, %v970, %v1176
      %1178 = vst [vmem:[%s334 + $0x84] sm:$0xf] %v1177
      %1179 = vst [vmem:[%s334 + $0x88] sm:$0xf] %v979
      %v1180 = vld [vmem:[%s334 + $0x8c] sm:$0x1]
      %v1181 = vsel %vm337, %v980, %v1180
      %1182 = vst [vmem:[%s334 + $0x8c] sm:$0x1] %v1181
      %v1183 = vld [vmem:[%s334 + $0x90] sm:$0xf]
      %v1184 = vsel %vm1098, %v987, %v1183
      %1185 = vst [vmem:[%s334 + $0x90] sm:$0xf] %v1184
      %1186 = vst [vmem:[%s334 + $0x94] sm:$0xf] %v996
      %v1187 = vld [vmem:[%s334 + $0x98] sm:$0x1]
      %v1188 = vsel %vm337, %v997, %v1187
      %1189 = vst [vmem:[%s334 + $0x98] sm:$0x1] %v1188
      %v1190 = vld [vmem:[%s334 + $0x9c] sm:$0xf]
      %v1191 = vsel %vm1098, %v1004, %v1190
      %1192 = vst [vmem:[%s334 + $0x9c] sm:$0xf] %v1191
      %1193 = vst [vmem:[%s334 + $0xa0] sm:$0xf] %v1013
      %v1194 = vld [vmem:[%s334 + $0xa4] sm:$0x1]
      %v1195 = vsel %vm337, %v1014, %v1194
      %1196 = vst [vmem:[%s334 + $0xa4] sm:$0x1] %v1195
      %v1197 = vld [vmem:[%s334 + $0xa8] sm:$0xf]
      %v1198 = vsel %vm1098, %v1021, %v1197
      %1199 = vst [vmem:[%s334 + $0xa8] sm:$0xf] %v1198
      %1200 = vst [vmem:[%s334 + $0xac] sm:$0xf] %v1030
      %v1201 = vld [vmem:[%s334 + $0xb0] sm:$0x1]
      %v1202 = vsel %vm337, %v1031, %v1201
      %1203 = vst [vmem:[%s334 + $0xb0] sm:$0x1] %v1202
      %v1204 = vld [vmem:[%s334 + $0xb4] sm:$0xf]
      %v1205 = vsel %vm1098, %v1038, %v1204
      %1206 = vst [vmem:[%s334 + $0xb4] sm:$0xf] %v1205
      %1207 = vst [vmem:[%s334 + $0xb8] sm:$0xf] %v1047
      %v1208 = vld [vmem:[%s334 + $0xbc] sm:$0x1]
      %v1209 = vsel %vm337, %v1048, %v1208
      %1210 = vst [vmem:[%s334 + $0xbc] sm:$0x1] %v1209
      %v1211 = vld [vmem:[#allocation2] sm:$0xf]
      %v1212 = vld [vmem:[#allocation2 + $0x4] sm:$0xf]
      %v1213 = vld [vmem:[#allocation2 + $0xc] sm:$0xf]
      %v1214 = vld [vmem:[#allocation2 + $0x10] sm:$0xf]
      %v1215 = vld [vmem:[#allocation2 + $0x18] sm:$0xf]
      %v1216 = vld [vmem:[#allocation2 + $0x1c] sm:$0xf]
      %v1217 = vld [vmem:[#allocation2 + $0x24] sm:$0xf]
      %v1218 = vld [vmem:[#allocation2 + $0x28] sm:$0xf]
      %v1219 = vld [vmem:[#allocation2 + $0x30] sm:$0xf]
      %v1220 = vld [vmem:[#allocation2 + $0x34] sm:$0xf]
      %v1221 = vld [vmem:[#allocation2 + $0x3c] sm:$0xf]
      %v1222 = vld [vmem:[#allocation2 + $0x40] sm:$0xf]
      %v1223 = vld [vmem:[#allocation2 + $0x48] sm:$0xf]
      %v1224 = vld [vmem:[#allocation2 + $0x4c] sm:$0xf]
      %v1225 = vld [vmem:[#allocation2 + $0x54] sm:$0xf]
      %v1226 = vld [vmem:[#allocation2 + $0x58] sm:$0xf]
      %v1227 = vld [vmem:[#allocation2 + $0x60] sm:$0xf]
      %v1228 = vld [vmem:[#allocation2 + $0x64] sm:$0xf]
      %v1229 = vld [vmem:[#allocation2 + $0x6c] sm:$0xf]
      %v1230 = vld [vmem:[#allocation2 + $0x70] sm:$0xf]
      %v1231 = vld [vmem:[#allocation2 + $0x78] sm:$0xf]
      %v1232 = vld [vmem:[#allocation2 + $0x7c] sm:$0xf]
      %v1233 = vld [vmem:[#allocation2 + $0x84] sm:$0xf]
      %v1234 = vld [vmem:[#allocation2 + $0x88] sm:$0xf]
      %v1235 = vld [vmem:[#allocation2 + $0x90] sm:$0xf]
      %v1236 = vld [vmem:[#allocation2 + $0x94] sm:$0xf]
      %v1237 = vld [vmem:[#allocation2 + $0x9c] sm:$0xf]
      %v1238 = vld [vmem:[#allocation2 + $0xa0] sm:$0xf]
      %v1239 = vld [vmem:[#allocation2 + $0xa8] sm:$0xf]
      %v1240 = vld [vmem:[#allocation2 + $0xac] sm:$0xf]
      %v1241 = vld [vmem:[#allocation2 + $0xb4] sm:$0xf]
      %v1242 = vld [vmem:[#allocation2 + $0xb8] sm:$0xf]
      %v1243 = vld [vmem:[#allocation2 + $0xc0] sm:$0xf]
      %v1244 = vld [vmem:[#allocation2 + $0xc4] sm:$0xf]
      %v1245 = vld [vmem:[#allocation2 + $0xcc] sm:$0xf]
      %v1246 = vld [vmem:[#allocation2 + $0xd0] sm:$0xf]
      %v1283 = vunpack.c.l.b16 %v1211
      %v1284 = vunpack.c.l.b16 %v1212
      %v1285 = vunpack.c.l.b16 %v1213
      %v1286 = vunpack.c.l.b16 %v1214
      %v1287 = vunpack.c.l.b16 %v1215
      %v1288 = vunpack.c.l.b16 %v1216
      %v1289 = vunpack.c.l.b16 %v1217
      %v1290 = vunpack.c.l.b16 %v1218
      %v1291 = vunpack.c.l.b16 %v1219
      %v1292 = vunpack.c.l.b16 %v1220
      %v1293 = vunpack.c.l.b16 %v1221
      %v1294 = vunpack.c.l.b16 %v1222
      %v1295 = vunpack.c.l.b16 %v1223
      %v1296 = vunpack.c.l.b16 %v1224
      %v1297 = vunpack.c.l.b16 %v1225
      %v1298 = vunpack.c.l.b16 %v1226
      %v1299 = vunpack.c.l.b16 %v1227
      %v1300 = vunpack.c.l.b16 %v1228
      %v1301 = vunpack.c.l.b16 %v1229
      %v1302 = vunpack.c.l.b16 %v1230
      %v1303 = vunpack.c.l.b16 %v1231
      %v1304 = vunpack.c.l.b16 %v1232
      %v1305 = vunpack.c.l.b16 %v1233
      %v1306 = vunpack.c.l.b16 %v1234
      %v1307 = vunpack.c.l.b16 %v1235
      %v1308 = vunpack.c.l.b16 %v1236
      %v1309 = vunpack.c.l.b16 %v1237
      %v1310 = vunpack.c.l.b16 %v1238
      %v1311 = vunpack.c.l.b16 %v1239
      %v1312 = vunpack.c.l.b16 %v1240
      %v1313 = vunpack.c.l.b16 %v1241
      %v1314 = vunpack.c.l.b16 %v1242
      %v1315 = vunpack.c.l.b16 %v1243
      %v1316 = vunpack.c.l.b16 %v1244
      %v1317 = vunpack.c.l.b16 %v1245
      %v1318 = vunpack.c.l.b16 %v1246
      %v1319 = vpack.c.b16 %v1284, %v1283
      %v1320 = vpack.c.b16 %v1286, %v1285
      %v1321 = vpack.c.b16 %v1288, %v1287
      %v1322 = vpack.c.b16 %v1290, %v1289
      %v1323 = vpack.c.b16 %v1292, %v1291
      %v1324 = vpack.c.b16 %v1294, %v1293
      %v1325 = vpack.c.b16 %v1296, %v1295
      %v1326 = vpack.c.b16 %v1298, %v1297
      %v1327 = vpack.c.b16 %v1300, %v1299
      %v1328 = vpack.c.b16 %v1302, %v1301
      %v1329 = vpack.c.b16 %v1304, %v1303
      %v1330 = vpack.c.b16 %v1306, %v1305
      %v1331 = vpack.c.b16 %v1308, %v1307
      %v1332 = vpack.c.b16 %v1310, %v1309
      %v1333 = vpack.c.b16 %v1312, %v1311
      %v1334 = vpack.c.b16 %v1314, %v1313
      %v1335 = vpack.c.b16 %v1316, %v1315
      %v1336 = vpack.c.b16 %v1318, %v1317
      %1355 = vst [vmem:[#allocation3] sm:$0xff] %v1319
      %1356 = vst [vmem:[#allocation3 + $0x18] sm:$0xff] %v1320
      %1357 = vst [vmem:[#allocation3 + $0x30] sm:$0xff] %v1321
      %1358 = vst [vmem:[#allocation3 + $0x48] sm:$0xff] %v1322
      %1359 = vst [vmem:[#allocation3 + $0x60] sm:$0xff] %v1323
      %1360 = vst [vmem:[#allocation3 + $0x78] sm:$0xff] %v1324
      %1361 = vst [vmem:[#allocation3 + $0x90] sm:$0xff] %v1325
      %1362 = vst [vmem:[#allocation3 + $0xa8] sm:$0xff] %v1326
      %1363 = vst [vmem:[#allocation3 + $0xc0] sm:$0xff] %v1327
      %1364 = vst [vmem:[#allocation3 + $0xd8] sm:$0xff] %v1328
      %1365 = vst [vmem:[#allocation3 + $0xf0] sm:$0xff] %v1329
      %1366 = vst [vmem:[#allocation3 + $0x108] sm:$0xff] %v1330
      %1367 = vst [vmem:[#allocation3 + $0x120] sm:$0xff] %v1331
      %1368 = vst [vmem:[#allocation3 + $0x138] sm:$0xff] %v1332
      %1369 = vst [vmem:[#allocation3 + $0x150] sm:$0xff] %v1333
      %1370 = vst [vmem:[#allocation3 + $0x168] sm:$0xff] %v1334
      %1371 = vst [vmem:[#allocation3 + $0x180] sm:$0xff] %v1335
      %1372 = vst [vmem:[#allocation3 + $0x198] sm:$0xff] %v1336
      %v1373 = vld [vmem:[#allocation2] sm:$0xf]
      %v1374 = vld [vmem:[#allocation2 + $0x4] sm:$0xf]
      %v1375 = vld [vmem:[#allocation2 + $0x8] sm:$0x1]
      %v1376 = vld [vmem:[#allocation2 + $0xc] sm:$0xf]
      %v1377 = vld [vmem:[#allocation2 + $0x10] sm:$0xf]
      %v1378 = vld [vmem:[#allocation2 + $0x14] sm:$0x1]
      %v1379 = vld [vmem:[#allocation2 + $0x18] sm:$0xf]
      %v1380 = vld [vmem:[#allocation2 + $0x1c] sm:$0xf]
      %v1381 = vld [vmem:[#allocation2 + $0x20] sm:$0x1]
      %v1382 = vld [vmem:[#allocation2 + $0x24] sm:$0xf]
      %v1383 = vld [vmem:[#allocation2 + $0x28] sm:$0xf]
      %v1384 = vld [vmem:[#allocation2 + $0x2c] sm:$0x1]
      %v1385 = vld [vmem:[#allocation2 + $0x30] sm:$0xf]
      %v1386 = vld [vmem:[#allocation2 + $0x34] sm:$0xf]
      %v1387 = vld [vmem:[#allocation2 + $0x38] sm:$0x1]
      %v1388 = vld [vmem:[#allocation2 + $0x3c] sm:$0xf]
      %v1389 = vld [vmem:[#allocation2 + $0x40] sm:$0xf]
      %v1390 = vld [vmem:[#allocation2 + $0x44] sm:$0x1]
      %v1391 = vld [vmem:[#allocation2 + $0x48] sm:$0xf]
      %v1392 = vld [vmem:[#allocation2 + $0x4c] sm:$0xf]
      %v1393 = vld [vmem:[#allocation2 + $0x50] sm:$0x1]
      %v1394 = vld [vmem:[#allocation2 + $0x54] sm:$0xf]
      %v1395 = vld [vmem:[#allocation2 + $0x58] sm:$0xf]
      %v1396 = vld [vmem:[#allocation2 + $0x5c] sm:$0x1]
      %v1397 = vld [vmem:[#allocation2 + $0x60] sm:$0xf]
      %v1398 = vld [vmem:[#allocation2 + $0x64] sm:$0xf]
      %v1399 = vld [vmem:[#allocation2 + $0x68] sm:$0x1]
      %v1400 = vld [vmem:[#allocation2 + $0x6c] sm:$0xf]
      %v1401 = vld [vmem:[#allocation2 + $0x70] sm:$0xf]
      %v1402 = vld [vmem:[#allocation2 + $0x74] sm:$0x1]
      %v1403 = vld [vmem:[#allocation2 + $0x78] sm:$0xf]
      %v1404 = vld [vmem:[#allocation2 + $0x7c] sm:$0xf]
      %v1405 = vld [vmem:[#allocation2 + $0x80] sm:$0x1]
      %v1406 = vld [vmem:[#allocation2 + $0x84] sm:$0xf]
      %v1407 = vld [vmem:[#allocation2 + $0x88] sm:$0xf]
      %v1408 = vld [vmem:[#allocation2 + $0x8c] sm:$0x1]
      %v1409 = vld [vmem:[#allocation2 + $0x90] sm:$0xf]
      %v1410 = vld [vmem:[#allocation2 + $0x94] sm:$0xf]
      %v1411 = vld [vmem:[#allocation2 + $0x98] sm:$0x1]
      %v1412 = vld [vmem:[#allocation2 + $0x9c] sm:$0xf]
      %v1413 = vld [vmem:[#allocation2 + $0xa0] sm:$0xf]
      %v1414 = vld [vmem:[#allocation2 + $0xa4] sm:$0x1]
      %v1415 = vld [vmem:[#allocation2 + $0xa8] sm:$0xf]
      %v1416 = vld [vmem:[#allocation2 + $0xac] sm:$0xf]
      %v1417 = vld [vmem:[#allocation2 + $0xb0] sm:$0x1]
      %v1418 = vld [vmem:[#allocation2 + $0xb4] sm:$0xf]
      %v1419 = vld [vmem:[#allocation2 + $0xb8] sm:$0xf]
      %v1420 = vld [vmem:[#allocation2 + $0xbc] sm:$0x1]
      %v1421 = vld [vmem:[#allocation2 + $0xc0] sm:$0xf]
      %v1422 = vld [vmem:[#allocation2 + $0xc4] sm:$0xf]
      %v1423 = vld [vmem:[#allocation2 + $0xc8] sm:$0x1]
      %v1424 = vld [vmem:[#allocation2 + $0xcc] sm:$0xf]
      %v1425 = vld [vmem:[#allocation2 + $0xd0] sm:$0xf]
      %v1426 = vld [vmem:[#allocation2 + $0xd4] sm:$0x1]
      %v1481 = vunpack.c.l.b16 %v1373
      %v1482 = vunpack.c.l.b16 %v1374
      %v1483 = vunpack.c.l.b16 %v1375
      %v1484 = vunpack.c.l.b16 %v1376
      %v1485 = vunpack.c.l.b16 %v1377
      %v1486 = vunpack.c.l.b16 %v1378
      %v1487 = vunpack.c.l.b16 %v1379
      %v1488 = vunpack.c.l.b16 %v1380
      %v1489 = vunpack.c.l.b16 %v1381
      %v1490 = vunpack.c.l.b16 %v1382
      %v1491 = vunpack.c.l.b16 %v1383
      %v1492 = vunpack.c.l.b16 %v1384
      %v1493 = vunpack.c.l.b16 %v1385
      %v1494 = vunpack.c.l.b16 %v1386
      %v1495 = vunpack.c.l.b16 %v1387
      %v1496 = vunpack.c.l.b16 %v1388
      %v1497 = vunpack.c.l.b16 %v1389
      %v1498 = vunpack.c.l.b16 %v1390
      %v1499 = vunpack.c.l.b16 %v1391
      %v1500 = vunpack.c.l.b16 %v1392
      %v1501 = vunpack.c.l.b16 %v1393
      %v1502 = vunpack.c.l.b16 %v1394
      %v1503 = vunpack.c.l.b16 %v1395
      %v1504 = vunpack.c.l.b16 %v1396
      %v1505 = vunpack.c.l.b16 %v1397
      %v1506 = vunpack.c.l.b16 %v1398
      %v1507 = vunpack.c.l.b16 %v1399
      %v1508 = vunpack.c.l.b16 %v1400
      %v1509 = vunpack.c.l.b16 %v1401
      %v1510 = vunpack.c.l.b16 %v1402
      %v1511 = vunpack.c.l.b16 %v1403
      %v1512 = vunpack.c.l.b16 %v1404
      %v1513 = vunpack.c.l.b16 %v1405
      %v1514 = vunpack.c.l.b16 %v1406
      %v1515 = vunpack.c.l.b16 %v1407
      %v1516 = vunpack.c.l.b16 %v1408
      %v1517 = vunpack.c.l.b16 %v1409
      %v1518 = vunpack.c.l.b16 %v1410
      %v1519 = vunpack.c.l.b16 %v1411
      %v1520 = vunpack.c.l.b16 %v1412
      %v1521 = vunpack.c.l.b16 %v1413
      %v1522 = vunpack.c.l.b16 %v1414
      %v1523 = vunpack.c.l.b16 %v1415
      %v1524 = vunpack.c.l.b16 %v1416
      %v1525 = vunpack.c.l.b16 %v1417
      %v1526 = vunpack.c.l.b16 %v1418
      %v1527 = vunpack.c.l.b16 %v1419
      %v1528 = vunpack.c.l.b16 %v1420
      %v1529 = vunpack.c.l.b16 %v1421
      %v1530 = vunpack.c.l.b16 %v1422
      %v1531 = vunpack.c.l.b16 %v1423
      %v1532 = vunpack.c.l.b16 %v1424
      %v1533 = vunpack.c.l.b16 %v1425
      %v1534 = vunpack.c.l.b16 %v1426
      %v1535 = vpack.c.b16 %v1482, %v1481
      %v1536 = vpack.c.b16 %v1483, %v1483
      %v1537 = vpack.c.b16 %v1485, %v1484
      %v1538 = vpack.c.b16 %v1486, %v1486
      %v1539 = vpack.c.b16 %v1488, %v1487
      %v1540 = vpack.c.b16 %v1489, %v1489
      %v1541 = vpack.c.b16 %v1491, %v1490
      %v1542 = vpack.c.b16 %v1492, %v1492
      %v1543 = vpack.c.b16 %v1494, %v1493
      %v1544 = vpack.c.b16 %v1495, %v1495
      %v1545 = vpack.c.b16 %v1497, %v1496
      %v1546 = vpack.c.b16 %v1498, %v1498
      %v1547 = vpack.c.b16 %v1500, %v1499
      %v1548 = vpack.c.b16 %v1501, %v1501
      %v1549 = vpack.c.b16 %v1503, %v1502
      %v1550 = vpack.c.b16 %v1504, %v1504
      %v1551 = vpack.c.b16 %v1506, %v1505
      %v1552 = vpack.c.b16 %v1507, %v1507
      %v1553 = vpack.c.b16 %v1509, %v1508
      %v1554 = vpack.c.b16 %v1510, %v1510
      %v1555 = vpack.c.b16 %v1512, %v1511
      %v1556 = vpack.c.b16 %v1513, %v1513
      %v1557 = vpack.c.b16 %v1515, %v1514
      %v1558 = vpack.c.b16 %v1516, %v1516
      %v1559 = vpack.c.b16 %v1518, %v1517
      %v1560 = vpack.c.b16 %v1519, %v1519
      %v1561 = vpack.c.b16 %v1521, %v1520
      %v1562 = vpack.c.b16 %v1522, %v1522
      %v1563 = vpack.c.b16 %v1524, %v1523
      %v1564 = vpack.c.b16 %v1525, %v1525
      %v1565 = vpack.c.b16 %v1527, %v1526
      %v1566 = vpack.c.b16 %v1528, %v1528
      %v1567 = vpack.c.b16 %v1530, %v1529
      %v1568 = vpack.c.b16 %v1531, %v1531
      %v1569 = vpack.c.b16 %v1533, %v1532
      %v1570 = vpack.c.b16 %v1534, %v1534
      %vm1571 = vsmask.f32 7424
      %v1573 = vshrl.u32 %v1535, 16
      %v1575 = vshll.u32 %v1535, 16
      %v1577 = vrot.slane %v1575, 1
      %v1578 = vor.u32 %v1573, %v1577
      %v1580 = vshll.u32 %v1536, 16
      %v1582 = vrot.slane %v1580, 1
      %v1583 = vsel %vm1571, %v1578, %v1582
      %v1585 = vshrl.u32 %v1537, 16
      %v1587 = vshll.u32 %v1537, 16
      %v1589 = vrot.slane %v1587, 1
      %v1590 = vor.u32 %v1585, %v1589
      %v1592 = vshll.u32 %v1538, 16
      %v1594 = vrot.slane %v1592, 1
      %v1595 = vsel %vm1571, %v1590, %v1594
      %v1597 = vshrl.u32 %v1539, 16
      %v1599 = vshll.u32 %v1539, 16
      %v1601 = vrot.slane %v1599, 1
      %v1602 = vor.u32 %v1597, %v1601
      %v1604 = vshll.u32 %v1540, 16
      %v1606 = vrot.slane %v1604, 1
      %v1607 = vsel %vm1571, %v1602, %v1606
      %v1609 = vshrl.u32 %v1541, 16
      %v1611 = vshll.u32 %v1541, 16
      %v1613 = vrot.slane %v1611, 1
      %v1614 = vor.u32 %v1609, %v1613
      %v1616 = vshll.u32 %v1542, 16
      %v1618 = vrot.slane %v1616, 1
      %v1619 = vsel %vm1571, %v1614, %v1618
      %v1621 = vshrl.u32 %v1543, 16
      %v1623 = vshll.u32 %v1543, 16
      %v1625 = vrot.slane %v1623, 1
      %v1626 = vor.u32 %v1621, %v1625
      %v1628 = vshll.u32 %v1544, 16
      %v1630 = vrot.slane %v1628, 1
      %v1631 = vsel %vm1571, %v1626, %v1630
      %v1633 = vshrl.u32 %v1545, 16
      %v1635 = vshll.u32 %v1545, 16
      %v1637 = vrot.slane %v1635, 1
      %v1638 = vor.u32 %v1633, %v1637
      %v1640 = vshll.u32 %v1546, 16
      %v1642 = vrot.slane %v1640, 1
      %v1643 = vsel %vm1571, %v1638, %v1642
      %v1645 = vshrl.u32 %v1547, 16
      %v1647 = vshll.u32 %v1547, 16
      %v1649 = vrot.slane %v1647, 1
      %v1650 = vor.u32 %v1645, %v1649
      %v1652 = vshll.u32 %v1548, 16
      %v1654 = vrot.slane %v1652, 1
      %v1655 = vsel %vm1571, %v1650, %v1654
      %v1657 = vshrl.u32 %v1549, 16
      %v1659 = vshll.u32 %v1549, 16
      %v1661 = vrot.slane %v1659, 1
      %v1662 = vor.u32 %v1657, %v1661
      %v1664 = vshll.u32 %v1550, 16
      %v1666 = vrot.slane %v1664, 1
      %v1667 = vsel %vm1571, %v1662, %v1666
      %v1669 = vshrl.u32 %v1551, 16
      %v1671 = vshll.u32 %v1551, 16
      %v1673 = vrot.slane %v1671, 1
      %v1674 = vor.u32 %v1669, %v1673
      %v1676 = vshll.u32 %v1552, 16
      %v1678 = vrot.slane %v1676, 1
      %v1679 = vsel %vm1571, %v1674, %v1678
      %v1681 = vshrl.u32 %v1553, 16
      %v1683 = vshll.u32 %v1553, 16
      %v1685 = vrot.slane %v1683, 1
      %v1686 = vor.u32 %v1681, %v1685
      %v1688 = vshll.u32 %v1554, 16
      %v1690 = vrot.slane %v1688, 1
      %v1691 = vsel %vm1571, %v1686, %v1690
      %v1693 = vshrl.u32 %v1555, 16
      %v1695 = vshll.u32 %v1555, 16
      %v1697 = vrot.slane %v1695, 1
      %v1698 = vor.u32 %v1693, %v1697
      %v1700 = vshll.u32 %v1556, 16
      %v1702 = vrot.slane %v1700, 1
      %v1703 = vsel %vm1571, %v1698, %v1702
      %v1705 = vshrl.u32 %v1557, 16
      %v1707 = vshll.u32 %v1557, 16
      %v1709 = vrot.slane %v1707, 1
      %v1710 = vor.u32 %v1705, %v1709
      %v1712 = vshll.u32 %v1558, 16
      %v1714 = vrot.slane %v1712, 1
      %v1715 = vsel %vm1571, %v1710, %v1714
      %v1717 = vshrl.u32 %v1559, 16
      %v1719 = vshll.u32 %v1559, 16
      %v1721 = vrot.slane %v1719, 1
      %v1722 = vor.u32 %v1717, %v1721
      %v1724 = vshll.u32 %v1560, 16
      %v1726 = vrot.slane %v1724, 1
      %v1727 = vsel %vm1571, %v1722, %v1726
      %v1729 = vshrl.u32 %v1561, 16
      %v1731 = vshll.u32 %v1561, 16
      %v1733 = vrot.slane %v1731, 1
      %v1734 = vor.u32 %v1729, %v1733
      %v1736 = vshll.u32 %v1562, 16
      %v1738 = vrot.slane %v1736, 1
      %v1739 = vsel %vm1571, %v1734, %v1738
      %v1741 = vshrl.u32 %v1563, 16
      %v1743 = vshll.u32 %v1563, 16
      %v1745 = vrot.slane %v1743, 1
      %v1746 = vor.u32 %v1741, %v1745
      %v1748 = vshll.u32 %v1564, 16
      %v1750 = vrot.slane %v1748, 1
      %v1751 = vsel %vm1571, %v1746, %v1750
      %v1753 = vshrl.u32 %v1565, 16
      %v1755 = vshll.u32 %v1565, 16
      %v1757 = vrot.slane %v1755, 1
      %v1758 = vor.u32 %v1753, %v1757
      %v1760 = vshll.u32 %v1566, 16
      %v1762 = vrot.slane %v1760, 1
      %v1763 = vsel %vm1571, %v1758, %v1762
      %v1765 = vshrl.u32 %v1567, 16
      %v1767 = vshll.u32 %v1567, 16
      %v1769 = vrot.slane %v1767, 1
      %v1770 = vor.u32 %v1765, %v1769
      %v1772 = vshll.u32 %v1568, 16
      %v1774 = vrot.slane %v1772, 1
      %v1775 = vsel %vm1571, %v1770, %v1774
      %v1777 = vshrl.u32 %v1569, 16
      %v1779 = vshll.u32 %v1569, 16
      %v1781 = vrot.slane %v1779, 1
      %v1782 = vor.u32 %v1777, %v1781
      %v1784 = vshll.u32 %v1570, 16
      %v1786 = vrot.slane %v1784, 1
      %v1787 = vsel %vm1571, %v1782, %v1786
      %1806 = vst [vmem:[#allocation3 + $0x8] sm:$0xff] %v1583
      %1807 = vst [vmem:[#allocation3 + $0x20] sm:$0xff] %v1595
      %1808 = vst [vmem:[#allocation3 + $0x38] sm:$0xff] %v1607
      %1809 = vst [vmem:[#allocation3 + $0x50] sm:$0xff] %v1619
      %1810 = vst [vmem:[#allocation3 + $0x68] sm:$0xff] %v1631
      %1811 = vst [vmem:[#allocation3 + $0x80] sm:$0xff] %v1643
      %1812 = vst [vmem:[#allocation3 + $0x98] sm:$0xff] %v1655
      %1813 = vst [vmem:[#allocation3 + $0xb0] sm:$0xff] %v1667
      %1814 = vst [vmem:[#allocation3 + $0xc8] sm:$0xff] %v1679
      %1815 = vst [vmem:[#allocation3 + $0xe0] sm:$0xff] %v1691
      %1816 = vst [vmem:[#allocation3 + $0xf8] sm:$0xff] %v1703
      %1817 = vst [vmem:[#allocation3 + $0x110] sm:$0xff] %v1715
      %1818 = vst [vmem:[#allocation3 + $0x128] sm:$0xff] %v1727
      %1819 = vst [vmem:[#allocation3 + $0x140] sm:$0xff] %v1739
      %1820 = vst [vmem:[#allocation3 + $0x158] sm:$0xff] %v1751
      %1821 = vst [vmem:[#allocation3 + $0x170] sm:$0xff] %v1763
      %1822 = vst [vmem:[#allocation3 + $0x188] sm:$0xff] %v1775
      %1823 = vst [vmem:[#allocation3 + $0x1a0] sm:$0xff] %v1787
      %v1824 = vld [vmem:[#allocation2] sm:$0xe]
      %v1825 = vld [vmem:[#allocation2 + $0x4] sm:$0xf]
      %v1826 = vld [vmem:[#allocation2 + $0x8] sm:$0x1]
      %v1827 = vld [vmem:[#allocation2 + $0xc] sm:$0xe]
      %v1828 = vld [vmem:[#allocation2 + $0x10] sm:$0xf]
      %v1829 = vld [vmem:[#allocation2 + $0x14] sm:$0x1]
      %v1830 = vld [vmem:[#allocation2 + $0x18] sm:$0xe]
      %v1831 = vld [vmem:[#allocation2 + $0x1c] sm:$0xf]
      %v1832 = vld [vmem:[#allocation2 + $0x20] sm:$0x1]
      %v1833 = vld [vmem:[#allocation2 + $0x24] sm:$0xe]
      %v1834 = vld [vmem:[#allocation2 + $0x28] sm:$0xf]
      %v1835 = vld [vmem:[#allocation2 + $0x2c] sm:$0x1]
      %v1836 = vld [vmem:[#allocation2 + $0x30] sm:$0xe]
      %v1837 = vld [vmem:[#allocation2 + $0x34] sm:$0xf]
      %v1838 = vld [vmem:[#allocation2 + $0x38] sm:$0x1]
      %v1839 = vld [vmem:[#allocation2 + $0x3c] sm:$0xe]
      %v1840 = vld [vmem:[#allocation2 + $0x40] sm:$0xf]
      %v1841 = vld [vmem:[#allocation2 + $0x44] sm:$0x1]
      %v1842 = vld [vmem:[#allocation2 + $0x48] sm:$0xe]
      %v1843 = vld [vmem:[#allocation2 + $0x4c] sm:$0xf]
      %v1844 = vld [vmem:[#allocation2 + $0x50] sm:$0x1]
      %v1845 = vld [vmem:[#allocation2 + $0x54] sm:$0xe]
      %v1846 = vld [vmem:[#allocation2 + $0x58] sm:$0xf]
      %v1847 = vld [vmem:[#allocation2 + $0x5c] sm:$0x1]
      %v1848 = vld [vmem:[#allocation2 + $0x60] sm:$0xe]
      %v1849 = vld [vmem:[#allocation2 + $0x64] sm:$0xf]
      %v1850 = vld [vmem:[#allocation2 + $0x68] sm:$0x1]
      %v1851 = vld [vmem:[#allocation2 + $0x6c] sm:$0xe]
      %v1852 = vld [vmem:[#allocation2 + $0x70] sm:$0xf]
      %v1853 = vld [vmem:[#allocation2 + $0x74] sm:$0x1]
      %v1854 = vld [vmem:[#allocation2 + $0x78] sm:$0xe]
      %v1855 = vld [vmem:[#allocation2 + $0x7c] sm:$0xf]
      %v1856 = vld [vmem:[#allocation2 + $0x80] sm:$0x1]
      %v1857 = vld [vmem:[#allocation2 + $0x84] sm:$0xe]
      %v1858 = vld [vmem:[#allocation2 + $0x88] sm:$0xf]
      %v1859 = vld [vmem:[#allocation2 + $0x8c] sm:$0x1]
      %v1860 = vld [vmem:[#allocation2 + $0x90] sm:$0xe]
      %v1861 = vld [vmem:[#allocation2 + $0x94] sm:$0xf]
      %v1862 = vld [vmem:[#allocation2 + $0x98] sm:$0x1]
      %v1863 = vld [vmem:[#allocation2 + $0x9c] sm:$0xe]
      %v1864 = vld [vmem:[#allocation2 + $0xa0] sm:$0xf]
      %v1865 = vld [vmem:[#allocation2 + $0xa4] sm:$0x1]
      %v1866 = vld [vmem:[#allocation2 + $0xa8] sm:$0xe]
      %v1867 = vld [vmem:[#allocation2 + $0xac] sm:$0xf]
      %v1868 = vld [vmem:[#allocation2 + $0xb0] sm:$0x1]
      %v1869 = vld [vmem:[#allocation2 + $0xb4] sm:$0xe]
      %v1870 = vld [vmem:[#allocation2 + $0xb8] sm:$0xf]
      %v1871 = vld [vmem:[#allocation2 + $0xbc] sm:$0x1]
      %v1872 = vld [vmem:[#allocation2 + $0xc0] sm:$0xe]
      %v1873 = vld [vmem:[#allocation2 + $0xc4] sm:$0xf]
      %v1874 = vld [vmem:[#allocation2 + $0xc8] sm:$0x1]
      %v1875 = vld [vmem:[#allocation2 + $0xcc] sm:$0xe]
      %v1876 = vld [vmem:[#allocation2 + $0xd0] sm:$0xf]
      %v1877 = vld [vmem:[#allocation2 + $0xd4] sm:$0x1]
      %v1932 = vunpack.c.l.b16 %v1824
      %v1933 = vunpack.c.l.b16 %v1825
      %v1934 = vunpack.c.l.b16 %v1826
      %v1935 = vunpack.c.l.b16 %v1827
      %v1936 = vunpack.c.l.b16 %v1828
      %v1937 = vunpack.c.l.b16 %v1829
      %v1938 = vunpack.c.l.b16 %v1830
      %v1939 = vunpack.c.l.b16 %v1831
      %v1940 = vunpack.c.l.b16 %v1832
      %v1941 = vunpack.c.l.b16 %v1833
      %v1942 = vunpack.c.l.b16 %v1834
      %v1943 = vunpack.c.l.b16 %v1835
      %v1944 = vunpack.c.l.b16 %v1836
      %v1945 = vunpack.c.l.b16 %v1837
      %v1946 = vunpack.c.l.b16 %v1838
      %v1947 = vunpack.c.l.b16 %v1839
      %v1948 = vunpack.c.l.b16 %v1840
      %v1949 = vunpack.c.l.b16 %v1841
      %v1950 = vunpack.c.l.b16 %v1842
      %v1951 = vunpack.c.l.b16 %v1843
      %v1952 = vunpack.c.l.b16 %v1844
      %v1953 = vunpack.c.l.b16 %v1845
      %v1954 = vunpack.c.l.b16 %v1846
      %v1955 = vunpack.c.l.b16 %v1847
      %v1956 = vunpack.c.l.b16 %v1848
      %v1957 = vunpack.c.l.b16 %v1849
      %v1958 = vunpack.c.l.b16 %v1850
      %v1959 = vunpack.c.l.b16 %v1851
      %v1960 = vunpack.c.l.b16 %v1852
      %v1961 = vunpack.c.l.b16 %v1853
      %v1962 = vunpack.c.l.b16 %v1854
      %v1963 = vunpack.c.l.b16 %v1855
      %v1964 = vunpack.c.l.b16 %v1856
      %v1965 = vunpack.c.l.b16 %v1857
      %v1966 = vunpack.c.l.b16 %v1858
      %v1967 = vunpack.c.l.b16 %v1859
      %v1968 = vunpack.c.l.b16 %v1860
      %v1969 = vunpack.c.l.b16 %v1861
      %v1970 = vunpack.c.l.b16 %v1862
      %v1971 = vunpack.c.l.b16 %v1863
      %v1972 = vunpack.c.l.b16 %v1864
      %v1973 = vunpack.c.l.b16 %v1865
      %v1974 = vunpack.c.l.b16 %v1866
      %v1975 = vunpack.c.l.b16 %v1867
      %v1976 = vunpack.c.l.b16 %v1868
      %v1977 = vunpack.c.l.b16 %v1869
      %v1978 = vunpack.c.l.b16 %v1870
      %v1979 = vunpack.c.l.b16 %v1871
      %v1980 = vunpack.c.l.b16 %v1872
      %v1981 = vunpack.c.l.b16 %v1873
      %v1982 = vunpack.c.l.b16 %v1874
      %v1983 = vunpack.c.l.b16 %v1875
      %v1984 = vunpack.c.l.b16 %v1876
      %v1985 = vunpack.c.l.b16 %v1877
      %v1986 = vpack.c.b16 %v1933, %v1932
      %v1987 = vpack.c.b16 %v1934, %v1934
      %v1988 = vpack.c.b16 %v1936, %v1935
      %v1989 = vpack.c.b16 %v1937, %v1937
      %v1990 = vpack.c.b16 %v1939, %v1938
      %v1991 = vpack.c.b16 %v1940, %v1940
      %v1992 = vpack.c.b16 %v1942, %v1941
      %v1993 = vpack.c.b16 %v1943, %v1943
      %v1994 = vpack.c.b16 %v1945, %v1944
      %v1995 = vpack.c.b16 %v1946, %v1946
      %v1996 = vpack.c.b16 %v1948, %v1947
      %v1997 = vpack.c.b16 %v1949, %v1949
      %v1998 = vpack.c.b16 %v1951, %v1950
      %v1999 = vpack.c.b16 %v1952, %v1952
      %v2000 = vpack.c.b16 %v1954, %v1953
      %v2001 = vpack.c.b16 %v1955, %v1955
      %v2002 = vpack.c.b16 %v1957, %v1956
      %v2003 = vpack.c.b16 %v1958, %v1958
      %v2004 = vpack.c.b16 %v1960, %v1959
      %v2005 = vpack.c.b16 %v1961, %v1961
      %v2006 = vpack.c.b16 %v1963, %v1962
      %v2007 = vpack.c.b16 %v1964, %v1964
      %v2008 = vpack.c.b16 %v1966, %v1965
      %v2009 = vpack.c.b16 %v1967, %v1967
      %v2010 = vpack.c.b16 %v1969, %v1968
      %v2011 = vpack.c.b16 %v1970, %v1970
      %v2012 = vpack.c.b16 %v1972, %v1971
      %v2013 = vpack.c.b16 %v1973, %v1973
      %v2014 = vpack.c.b16 %v1975, %v1974
      %v2015 = vpack.c.b16 %v1976, %v1976
      %v2016 = vpack.c.b16 %v1978, %v1977
      %v2017 = vpack.c.b16 %v1979, %v1979
      %v2018 = vpack.c.b16 %v1981, %v1980
      %v2019 = vpack.c.b16 %v1982, %v1982
      %v2020 = vpack.c.b16 %v1984, %v1983
      %v2021 = vpack.c.b16 %v1985, %v1985
      %vm2022 = vcmask 1046528
      %v2023 = vrot.slane %v1986, 1
      %v2024 = vrot.slane %v1987, 1
      %v2025 = vsel %vm2022, %v2023, %v2024
      %v2026 = vrot.slane %v1988, 1
      %v2027 = vrot.slane %v1989, 1
      %v2028 = vsel %vm2022, %v2026, %v2027
      %v2029 = vrot.slane %v1990, 1
      %v2030 = vrot.slane %v1991, 1
      %v2031 = vsel %vm2022, %v2029, %v2030
      %v2032 = vrot.slane %v1992, 1
      %v2033 = vrot.slane %v1993, 1
      %v2034 = vsel %vm2022, %v2032, %v2033
      %v2035 = vrot.slane %v1994, 1
      %v2036 = vrot.slane %v1995, 1
      %v2037 = vsel %vm2022, %v2035, %v2036
      %v2038 = vrot.slane %v1996, 1
      %v2039 = vrot.slane %v1997, 1
      %v2040 = vsel %vm2022, %v2038, %v2039
      %v2041 = vrot.slane %v1998, 1
      %v2042 = vrot.slane %v1999, 1
      %v2043 = vsel %vm2022, %v2041, %v2042
      %v2044 = vrot.slane %v2000, 1
      %v2045 = vrot.slane %v2001, 1
      %v2046 = vsel %vm2022, %v2044, %v2045
      %v2047 = vrot.slane %v2002, 1
      %v2048 = vrot.slane %v2003, 1
      %v2049 = vsel %vm2022, %v2047, %v2048
      %v2050 = vrot.slane %v2004, 1
      %v2051 = vrot.slane %v2005, 1
      %v2052 = vsel %vm2022, %v2050, %v2051
      %v2053 = vrot.slane %v2006, 1
      %v2054 = vrot.slane %v2007, 1
      %v2055 = vsel %vm2022, %v2053, %v2054
      %v2056 = vrot.slane %v2008, 1
      %v2057 = vrot.slane %v2009, 1
      %v2058 = vsel %vm2022, %v2056, %v2057
      %v2059 = vrot.slane %v2010, 1
      %v2060 = vrot.slane %v2011, 1
      %v2061 = vsel %vm2022, %v2059, %v2060
      %v2062 = vrot.slane %v2012, 1
      %v2063 = vrot.slane %v2013, 1
      %v2064 = vsel %vm2022, %v2062, %v2063
      %v2065 = vrot.slane %v2014, 1
      %v2066 = vrot.slane %v2015, 1
      %v2067 = vsel %vm2022, %v2065, %v2066
      %v2068 = vrot.slane %v2016, 1
      %v2069 = vrot.slane %v2017, 1
      %v2070 = vsel %vm2022, %v2068, %v2069
      %v2071 = vrot.slane %v2018, 1
      %v2072 = vrot.slane %v2019, 1
      %v2073 = vsel %vm2022, %v2071, %v2072
      %v2074 = vrot.slane %v2020, 1
      %v2075 = vrot.slane %v2021, 1
      %v2076 = vsel %vm2022, %v2074, %v2075
      %2095 = vst [vmem:[#allocation3 + $0x10] sm:$0xff] %v2025
      %2096 = vst [vmem:[#allocation3 + $0x28] sm:$0xff] %v2028
      %2097 = vst [vmem:[#allocation3 + $0x40] sm:$0xff] %v2031
      %2098 = vst [vmem:[#allocation3 + $0x58] sm:$0xff] %v2034
      %2099 = vst [vmem:[#allocation3 + $0x70] sm:$0xff] %v2037
      %2100 = vst [vmem:[#allocation3 + $0x88] sm:$0xff] %v2040
      %2101 = vst [vmem:[#allocation3 + $0xa0] sm:$0xff] %v2043
      %2102 = vst [vmem:[#allocation3 + $0xb8] sm:$0xff] %v2046
      %2103 = vst [vmem:[#allocation3 + $0xd0] sm:$0xff] %v2049
      %2104 = vst [vmem:[#allocation3 + $0xe8] sm:$0xff] %v2052
      %2105 = vst [vmem:[#allocation3 + $0x100] sm:$0xff] %v2055
      %2106 = vst [vmem:[#allocation3 + $0x118] sm:$0xff] %v2058
      %2107 = vst [vmem:[#allocation3 + $0x130] sm:$0xff] %v2061
      %2108 = vst [vmem:[#allocation3 + $0x148] sm:$0xff] %v2064
      %2109 = vst [vmem:[#allocation3 + $0x160] sm:$0xff] %v2067
      %2110 = vst [vmem:[#allocation3 + $0x178] sm:$0xff] %v2070
      %2111 = vst [vmem:[#allocation3 + $0x190] sm:$0xff] %v2073
      %2112 = vst [vmem:[#allocation3 + $0x1a8] sm:$0xff] %v2076
      %v2113 = vld [vmem:[#allocation3] sm:$0xff]
      %v2114 = vld [vmem:[#allocation3 + $0x8] sm:$0xff]
      %v2115 = vld [vmem:[#allocation3 + $0x10] sm:$0xff]
      %v2116 = vld [vmem:[#allocation3 + $0x18] sm:$0xff]
      %v2117 = vld [vmem:[#allocation3 + $0x20] sm:$0xff]
      %v2118 = vld [vmem:[#allocation3 + $0x28] sm:$0xff]
      %v2119 = vld [vmem:[#allocation3 + $0x30] sm:$0xff]
      %v2120 = vld [vmem:[#allocation3 + $0x38] sm:$0xff]
      %v2121 = vld [vmem:[#allocation3 + $0x40] sm:$0xff]
      %v2122 = vld [vmem:[#allocation3 + $0x48] sm:$0xff]
      %v2123 = vld [vmem:[#allocation3 + $0x50] sm:$0xff]
      %v2124 = vld [vmem:[#allocation3 + $0x58] sm:$0xff]
      %v2125 = vld [vmem:[#allocation3 + $0x60] sm:$0xff]
      %v2126 = vld [vmem:[#allocation3 + $0x68] sm:$0xff]
      %v2127 = vld [vmem:[#allocation3 + $0x70] sm:$0xff]
      %v2128 = vld [vmem:[#allocation3 + $0x78] sm:$0xff]
      %v2129 = vld [vmem:[#allocation3 + $0x80] sm:$0xff]
      %v2130 = vld [vmem:[#allocation3 + $0x88] sm:$0xff]
      %v2131 = vld [vmem:[#allocation3 + $0x90] sm:$0xff]
      %v2132 = vld [vmem:[#allocation3 + $0x98] sm:$0xff]
      %v2133 = vld [vmem:[#allocation3 + $0xa0] sm:$0xff]
      %v2134 = vld [vmem:[#allocation3 + $0xa8] sm:$0xff]
      %v2135 = vld [vmem:[#allocation3 + $0xb0] sm:$0xff]
      %v2136 = vld [vmem:[#allocation3 + $0xb8] sm:$0xff]
      %v2137 = vld [vmem:[#allocation3 + $0xc0] sm:$0xff]
      %v2138 = vld [vmem:[#allocation3 + $0xc8] sm:$0xff]
      %v2139 = vld [vmem:[#allocation3 + $0xd0] sm:$0xff]
      %v2140 = vld [vmem:[#allocation3 + $0xd8] sm:$0xff]
      %v2141 = vld [vmem:[#allocation3 + $0xe0] sm:$0xff]
      %v2142 = vld [vmem:[#allocation3 + $0xe8] sm:$0xff]
      %v2143 = vld [vmem:[#allocation3 + $0xf0] sm:$0xff]
      %v2144 = vld [vmem:[#allocation3 + $0xf8] sm:$0xff]
      %v2145 = vld [vmem:[#allocation3 + $0x100] sm:$0xff]
      %v2146 = vld [vmem:[#allocation3 + $0x108] sm:$0xff]
      %v2147 = vld [vmem:[#allocation3 + $0x110] sm:$0xff]
      %v2148 = vld [vmem:[#allocation3 + $0x118] sm:$0xff]
      %v2149 = vld [vmem:[#allocation3 + $0x120] sm:$0xff]
      %v2150 = vld [vmem:[#allocation3 + $0x128] sm:$0xff]
      %v2151 = vld [vmem:[#allocation3 + $0x130] sm:$0xff]
      %v2152 = vld [vmem:[#allocation3 + $0x138] sm:$0xff]
      %v2153 = vld [vmem:[#allocation3 + $0x140] sm:$0xff]
      %v2154 = vld [vmem:[#allocation3 + $0x148] sm:$0xff]
      %v2155 = vld [vmem:[#allocation3 + $0x150] sm:$0xff]
      %v2156 = vld [vmem:[#allocation3 + $0x158] sm:$0xff]
      %v2157 = vld [vmem:[#allocation3 + $0x160] sm:$0xff]
      %v2158 = vld [vmem:[#allocation3 + $0x168] sm:$0xff]
      %v2159 = vld [vmem:[#allocation3 + $0x170] sm:$0xff]
      %v2160 = vld [vmem:[#allocation3 + $0x178] sm:$0xff]
      %v2161 = vld [vmem:[%s2] sm:$0xf]
      %v2162 = vld [vmem:[%s2 + $0x4] sm:$0xf]
      %v2163 = vld [vmem:[%s2 + $0x8] sm:$0xf]
      %v2164 = vld [vmem:[%s2 + $0xc] sm:$0xf]
      %v2165 = vld [vmem:[%s2 + $0x10] sm:$0xf]
      %v2166 = vld [vmem:[%s2 + $0x14] sm:$0xf]
      %v2167 = vld [vmem:[%s2 + $0x18] sm:$0xf]
      %v2168 = vld [vmem:[%s2 + $0x1c] sm:$0xf]
      %v2169 = vld [vmem:[%s2 + $0x20] sm:$0xf]
      %v2170 = vld [vmem:[%s2 + $0x24] sm:$0xf]
      %v2171 = vld [vmem:[%s2 + $0x28] sm:$0xf]
      %v2172 = vld [vmem:[%s2 + $0x2c] sm:$0xf]
      %v2173 = vld [vmem:[%s2 + $0x30] sm:$0xf]
      %v2174 = vld [vmem:[%s2 + $0x34] sm:$0xf]
      %v2175 = vld [vmem:[%s2 + $0x38] sm:$0xf]
      %v2176 = vld [vmem:[%s2 + $0x3c] sm:$0xf]
      %v2177 = vld [vmem:[%s2 + $0x40] sm:$0xf]
      %v2178 = vld [vmem:[%s2 + $0x44] sm:$0xf]
      %v2179 = vld [vmem:[%s2 + $0x48] sm:$0xf]
      %v2180 = vld [vmem:[%s2 + $0x4c] sm:$0xf]
      %v2181 = vld [vmem:[%s2 + $0x50] sm:$0xf]
      %v2182 = vld [vmem:[%s2 + $0x54] sm:$0xf]
      %v2183 = vld [vmem:[%s2 + $0x58] sm:$0xf]
      %v2184 = vld [vmem:[%s2 + $0x5c] sm:$0xf]
      %v2185 = vld [vmem:[%s2 + $0x60] sm:$0xf]
      %v2186 = vld [vmem:[%s2 + $0x64] sm:$0xf]
      %v2187 = vld [vmem:[%s2 + $0x68] sm:$0xf]
      %v2188 = vld [vmem:[%s2 + $0x6c] sm:$0xf]
      %v2189 = vld [vmem:[%s2 + $0x70] sm:$0xf]
      %v2190 = vld [vmem:[%s2 + $0x74] sm:$0xf]
      %v2191 = vld [vmem:[%s2 + $0x78] sm:$0xf]
      %v2192 = vld [vmem:[%s2 + $0x7c] sm:$0xf]
      %v2193 = vld [vmem:[%s2 + $0x80] sm:$0xf]
      %v2194 = vld [vmem:[%s2 + $0x84] sm:$0xf]
      %v2195 = vld [vmem:[%s2 + $0x88] sm:$0xf]
      %v2196 = vld [vmem:[%s2 + $0x8c] sm:$0xf]
      %v2197 = vld [vmem:[%s2 + $0x90] sm:$0xf]
      %v2198 = vld [vmem:[%s2 + $0x94] sm:$0xf]
      %v2199 = vld [vmem:[%s2 + $0x98] sm:$0xf]
      %v2200 = vld [vmem:[%s2 + $0x9c] sm:$0xf]
      %v2201 = vld [vmem:[%s2 + $0xa0] sm:$0xf]
      %v2202 = vld [vmem:[%s2 + $0xa4] sm:$0xf]
      %v2203 = vld [vmem:[%s2 + $0xa8] sm:$0xf]
      %v2204 = vld [vmem:[%s2 + $0xac] sm:$0xf]
      %v2205 = vld [vmem:[%s2 + $0xb0] sm:$0xf]
      %v2206 = vld [vmem:[%s2 + $0xb4] sm:$0xf]
      %v2207 = vld [vmem:[%s2 + $0xb8] sm:$0xf]
      %v2208 = vld [vmem:[%s2 + $0xbc] sm:$0xf]
      %s2209 = scalar_lea.vmem [#allocation3], 24
      %v2210 = vld [vmem:[%s2209] sm:$0xff]
      %v2211 = vld [vmem:[%s2209 + $0x8] sm:$0xff]
      %v2212 = vld [vmem:[%s2209 + $0x10] sm:$0xff]
      %v2213 = vld [vmem:[%s2209 + $0x18] sm:$0xff]
      %v2214 = vld [vmem:[%s2209 + $0x20] sm:$0xff]
      %v2215 = vld [vmem:[%s2209 + $0x28] sm:$0xff]
      %v2216 = vld [vmem:[%s2209 + $0x30] sm:$0xff]
      %v2217 = vld [vmem:[%s2209 + $0x38] sm:$0xff]
      %v2218 = vld [vmem:[%s2209 + $0x40] sm:$0xff]
      %v2219 = vld [vmem:[%s2209 + $0x48] sm:$0xff]
      %v2220 = vld [vmem:[%s2209 + $0x50] sm:$0xff]
      %v2221 = vld [vmem:[%s2209 + $0x58] sm:$0xff]
      %v2222 = vld [vmem:[%s2209 + $0x60] sm:$0xff]
      %v2223 = vld [vmem:[%s2209 + $0x68] sm:$0xff]
      %v2224 = vld [vmem:[%s2209 + $0x70] sm:$0xff]
      %v2225 = vld [vmem:[%s2209 + $0x78] sm:$0xff]
      %v2226 = vld [vmem:[%s2209 + $0x80] sm:$0xff]
      %v2227 = vld [vmem:[%s2209 + $0x88] sm:$0xff]
      %v2228 = vld [vmem:[%s2209 + $0x90] sm:$0xff]
      %v2229 = vld [vmem:[%s2209 + $0x98] sm:$0xff]
      %v2230 = vld [vmem:[%s2209 + $0xa0] sm:$0xff]
      %v2231 = vld [vmem:[%s2209 + $0xa8] sm:$0xff]
      %v2232 = vld [vmem:[%s2209 + $0xb0] sm:$0xff]
      %v2233 = vld [vmem:[%s2209 + $0xb8] sm:$0xff]
      %v2234 = vld [vmem:[%s2209 + $0xc0] sm:$0xff]
      %v2235 = vld [vmem:[%s2209 + $0xc8] sm:$0xff]
      %v2236 = vld [vmem:[%s2209 + $0xd0] sm:$0xff]
      %v2237 = vld [vmem:[%s2209 + $0xd8] sm:$0xff]
      %v2238 = vld [vmem:[%s2209 + $0xe0] sm:$0xff]
      %v2239 = vld [vmem:[%s2209 + $0xe8] sm:$0xff]
      %v2240 = vld [vmem:[%s2209 + $0xf0] sm:$0xff]
      %v2241 = vld [vmem:[%s2209 + $0xf8] sm:$0xff]
      %v2242 = vld [vmem:[%s2209 + $0x100] sm:$0xff]
      %v2243 = vld [vmem:[%s2209 + $0x108] sm:$0xff]
      %v2244 = vld [vmem:[%s2209 + $0x110] sm:$0xff]
      %v2245 = vld [vmem:[%s2209 + $0x118] sm:$0xff]
      %v2246 = vld [vmem:[%s2209 + $0x120] sm:$0xff]
      %v2247 = vld [vmem:[%s2209 + $0x128] sm:$0xff]
      %v2248 = vld [vmem:[%s2209 + $0x130] sm:$0xff]
      %v2249 = vld [vmem:[%s2209 + $0x138] sm:$0xff]
      %v2250 = vld [vmem:[%s2209 + $0x140] sm:$0xff]
      %v2251 = vld [vmem:[%s2209 + $0x148] sm:$0xff]
      %v2252 = vld [vmem:[%s2209 + $0x150] sm:$0xff]
      %v2253 = vld [vmem:[%s2209 + $0x158] sm:$0xff]
      %v2254 = vld [vmem:[%s2209 + $0x160] sm:$0xff]
      %v2255 = vld [vmem:[%s2209 + $0x168] sm:$0xff]
      %v2256 = vld [vmem:[%s2209 + $0x170] sm:$0xff]
      %v2257 = vld [vmem:[%s2209 + $0x178] sm:$0xff]
      %s2258 = scalar_lea.vmem %s2, 192
      %v2259 = vld [vmem:[%s2258] sm:$0xf]
      %v2260 = vld [vmem:[%s2258 + $0x4] sm:$0xf]
      %v2261 = vld [vmem:[%s2258 + $0x8] sm:$0xf]
      %v2262 = vld [vmem:[%s2258 + $0xc] sm:$0xf]
      %v2263 = vld [vmem:[%s2258 + $0x10] sm:$0xf]
      %v2264 = vld [vmem:[%s2258 + $0x14] sm:$0xf]
      %v2265 = vld [vmem:[%s2258 + $0x18] sm:$0xf]
      %v2266 = vld [vmem:[%s2258 + $0x1c] sm:$0xf]
      %v2267 = vld [vmem:[%s2258 + $0x20] sm:$0xf]
      %v2268 = vld [vmem:[%s2258 + $0x24] sm:$0xf]
      %v2269 = vld [vmem:[%s2258 + $0x28] sm:$0xf]
      %v2270 = vld [vmem:[%s2258 + $0x2c] sm:$0xf]
      %v2271 = vld [vmem:[%s2258 + $0x30] sm:$0xf]
      %v2272 = vld [vmem:[%s2258 + $0x34] sm:$0xf]
      %v2273 = vld [vmem:[%s2258 + $0x38] sm:$0xf]
      %v2274 = vld [vmem:[%s2258 + $0x3c] sm:$0xf]
      %v2275 = vld [vmem:[%s2258 + $0x40] sm:$0xf]
      %v2276 = vld [vmem:[%s2258 + $0x44] sm:$0xf]
      %v2277 = vld [vmem:[%s2258 + $0x48] sm:$0xf]
      %v2278 = vld [vmem:[%s2258 + $0x4c] sm:$0xf]
      %v2279 = vld [vmem:[%s2258 + $0x50] sm:$0xf]
      %v2280 = vld [vmem:[%s2258 + $0x54] sm:$0xf]
      %v2281 = vld [vmem:[%s2258 + $0x58] sm:$0xf]
      %v2282 = vld [vmem:[%s2258 + $0x5c] sm:$0xf]
      %v2283 = vld [vmem:[%s2258 + $0x60] sm:$0xf]
      %v2284 = vld [vmem:[%s2258 + $0x64] sm:$0xf]
      %v2285 = vld [vmem:[%s2258 + $0x68] sm:$0xf]
      %v2286 = vld [vmem:[%s2258 + $0x6c] sm:$0xf]
      %v2287 = vld [vmem:[%s2258 + $0x70] sm:$0xf]
      %v2288 = vld [vmem:[%s2258 + $0x74] sm:$0xf]
      %v2289 = vld [vmem:[%s2258 + $0x78] sm:$0xf]
      %v2290 = vld [vmem:[%s2258 + $0x7c] sm:$0xf]
      %v2291 = vld [vmem:[%s2258 + $0x80] sm:$0xf]
      %v2292 = vld [vmem:[%s2258 + $0x84] sm:$0xf]
      %v2293 = vld [vmem:[%s2258 + $0x88] sm:$0xf]
      %v2294 = vld [vmem:[%s2258 + $0x8c] sm:$0xf]
      %v2295 = vld [vmem:[%s2258 + $0x90] sm:$0xf]
      %v2296 = vld [vmem:[%s2258 + $0x94] sm:$0xf]
      %v2297 = vld [vmem:[%s2258 + $0x98] sm:$0xf]
      %v2298 = vld [vmem:[%s2258 + $0x9c] sm:$0xf]
      %v2299 = vld [vmem:[%s2258 + $0xa0] sm:$0xf]
      %v2300 = vld [vmem:[%s2258 + $0xa4] sm:$0xf]
      %v2301 = vld [vmem:[%s2258 + $0xa8] sm:$0xf]
      %v2302 = vld [vmem:[%s2258 + $0xac] sm:$0xf]
      %v2303 = vld [vmem:[%s2258 + $0xb0] sm:$0xf]
      %v2304 = vld [vmem:[%s2258 + $0xb4] sm:$0xf]
      %v2305 = vld [vmem:[%s2258 + $0xb8] sm:$0xf]
      %v2306 = vld [vmem:[%s2258 + $0xbc] sm:$0xf]
      %v2355 = vunpack.c.l.b16 %v2259
      %v2356 = vunpack.c.l.b16 %v2260
      %v2357 = vunpack.c.l.b16 %v2261
      %v2358 = vunpack.c.l.b16 %v2262
      %v2359 = vunpack.c.l.b16 %v2263
      %v2360 = vunpack.c.l.b16 %v2264
      %v2361 = vunpack.c.l.b16 %v2265
      %v2362 = vunpack.c.l.b16 %v2266
      %v2363 = vunpack.c.l.b16 %v2267
      %v2364 = vunpack.c.l.b16 %v2268
      %v2365 = vunpack.c.l.b16 %v2269
      %v2366 = vunpack.c.l.b16 %v2270
      %v2367 = vunpack.c.l.b16 %v2271
      %v2368 = vunpack.c.l.b16 %v2272
      %v2369 = vunpack.c.l.b16 %v2273
      %v2370 = vunpack.c.l.b16 %v2274
      %v2371 = vunpack.c.l.b16 %v2275
      %v2372 = vunpack.c.l.b16 %v2276
      %v2373 = vunpack.c.l.b16 %v2277
      %v2374 = vunpack.c.l.b16 %v2278
      %v2375 = vunpack.c.l.b16 %v2279
      %v2376 = vunpack.c.l.b16 %v2280
      %v2377 = vunpack.c.l.b16 %v2281
      %v2378 = vunpack.c.l.b16 %v2282
      %v2379 = vunpack.c.l.b16 %v2283
      %v2380 = vunpack.c.l.b16 %v2284
      %v2381 = vunpack.c.l.b16 %v2285
      %v2382 = vunpack.c.l.b16 %v2286
      %v2383 = vunpack.c.l.b16 %v2287
      %v2384 = vunpack.c.l.b16 %v2288
      %v2385 = vunpack.c.l.b16 %v2289
      %v2386 = vunpack.c.l.b16 %v2290
      %v2387 = vunpack.c.l.b16 %v2291
      %v2388 = vunpack.c.l.b16 %v2292
      %v2389 = vunpack.c.l.b16 %v2293
      %v2390 = vunpack.c.l.b16 %v2294
      %v2391 = vunpack.c.l.b16 %v2295
      %v2392 = vunpack.c.l.b16 %v2296
      %v2393 = vunpack.c.l.b16 %v2297
      %v2394 = vunpack.c.l.b16 %v2298
      %v2395 = vunpack.c.l.b16 %v2299
      %v2396 = vunpack.c.l.b16 %v2300
      %v2397 = vunpack.c.l.b16 %v2301
      %v2398 = vunpack.c.l.b16 %v2302
      %v2399 = vunpack.c.l.b16 %v2303
      %v2400 = vunpack.c.l.b16 %v2304
      %v2401 = vunpack.c.l.b16 %v2305
      %v2402 = vunpack.c.l.b16 %v2306
      %v2403 = vpack.c.b16 %v2356, %v2355
      %v2404 = vpack.c.b16 %v2358, %v2357
      %v2405 = vpack.c.b16 %v2360, %v2359
      %v2406 = vpack.c.b16 %v2362, %v2361
      %v2407 = vpack.c.b16 %v2364, %v2363
      %v2408 = vpack.c.b16 %v2366, %v2365
      %v2409 = vpack.c.b16 %v2368, %v2367
      %v2410 = vpack.c.b16 %v2370, %v2369
      %v2411 = vpack.c.b16 %v2372, %v2371
      %v2412 = vpack.c.b16 %v2374, %v2373
      %v2413 = vpack.c.b16 %v2376, %v2375
      %v2414 = vpack.c.b16 %v2378, %v2377
      %v2415 = vpack.c.b16 %v2380, %v2379
      %v2416 = vpack.c.b16 %v2382, %v2381
      %v2417 = vpack.c.b16 %v2384, %v2383
      %v2418 = vpack.c.b16 %v2386, %v2385
      %v2419 = vpack.c.b16 %v2388, %v2387
      %v2420 = vpack.c.b16 %v2390, %v2389
      %v2421 = vpack.c.b16 %v2392, %v2391
      %v2422 = vpack.c.b16 %v2394, %v2393
      %v2423 = vpack.c.b16 %v2396, %v2395
      %v2424 = vpack.c.b16 %v2398, %v2397
      %v2425 = vpack.c.b16 %v2400, %v2399
      %v2426 = vpack.c.b16 %v2402, %v2401
      %2451 = vmatprep.subr.bf16.mxu0 0
      %2452 = vmatpush1.bf16.msra.mxu0 %v2403
      %2453 = vmatprep.subr.bf16.mxu0 0
      %2454 = vmatpush1.bf16.msra.mxu0 %v2404
      %2455 = vmatprep.subr.bf16.mxu0 0
      %2456 = vmatpush1.bf16.msra.mxu0 %v2405
      %2457 = vmatprep.subr.bf16.mxu0 0
      %2458 = vmatpush1.bf16.msra.mxu0 %v2406
      %2459 = vmatprep.subr.bf16.mxu0 0
      %2460 = vmatpush1.bf16.msra.mxu0 %v2407
      %2461 = vmatprep.subr.bf16.mxu0 0
      %2462 = vmatpush1.bf16.msra.mxu0 %v2408
      %2463 = vmatprep.subr.bf16.mxu0 0
      %2464 = vmatpush1.bf16.msra.mxu0 %v2409
      %2465 = vmatprep.subr.bf16.mxu0 0
      %2466 = vmatpush1.bf16.msra.mxu0 %v2410
      %2467 = vmatprep.subr.bf16.mxu0 0
      %2468 = vmatpush1.bf16.msra.mxu0 %v2411
      %2469 = vmatprep.subr.bf16.mxu0 0
      %2470 = vmatpush1.bf16.msra.mxu0 %v2412
      %2471 = vmatprep.subr.bf16.mxu0 0
      %2472 = vmatpush1.bf16.msra.mxu0 %v2413
      %2473 = vmatprep.subr.bf16.mxu0 0
      %2474 = vmatpush1.bf16.msra.mxu0 %v2414
      %2475 = vmatprep.subr.bf16.mxu0 0
      %2476 = vmatpush1.bf16.msra.mxu0 %v2415
      %2477 = vmatprep.subr.bf16.mxu0 0
      %2478 = vmatpush1.bf16.msra.mxu0 %v2416
      %2479 = vmatprep.subr.bf16.mxu0 0
      %2480 = vmatpush1.bf16.msra.mxu0 %v2417
      %2481 = vmatprep.subr.bf16.mxu0 0
      %2482 = vmatpush1.bf16.msra.mxu0 %v2418
      %2483 = vmatprep.mubr.bf16.mxu0 %v2211
      %2484 = vmatmul.mubr.bf16.gmra.mrb[0].mxu0 %v2210
      %v2485 = vpop.f32.mrb[0].mxu0
      %v2486 = vadd.f32 0.0, %v2485
      %v2487 = vpop.f32.mrb[0].mxu0
      %v2488 = vpop.f32.mrb[0].mxu0
      %v2489 = vadd.f32 0.0, %v2488
      %v2490 = vpop.f32.mrb[0].mxu0
      %2491 = vmatprep.mubr.bf16.mxu0 %v2214
      %2492 = vmatmul.mubr.bf16.gmra.mrb[0].mxu0 %v2213
      %v2493 = vpop.f32.mrb[0].mxu0
      %v2494 = vadd.f32 0.0, %v2493
      %v2495 = vpop.f32.mrb[0].mxu0
      %v2496 = vpop.f32.mrb[0].mxu0
      %v2497 = vadd.f32 0.0, %v2496
      %v2498 = vpop.f32.mrb[0].mxu0
      %2499 = vmatprep.mubr.bf16.mxu0 %v2217
      %2500 = vmatmul.mubr.bf16.gmra.mrb[0].mxu0 %v2216
      %v2501 = vpop.f32.mrb[0].mxu0
      %v2502 = vadd.f32 0.0, %v2501
      %v2503 = vpop.f32.mrb[0].mxu0
      %v2504 = vpop.f32.mrb[0].mxu0
      %v2505 = vadd.f32 0.0, %v2504
      %v2506 = vpop.f32.mrb[0].mxu0
      %2507 = vmatprep.mubr.bf16.mxu0 %v2220
      %2508 = vmatmul.mubr.bf16.gmra.mrb[0].mxu0 %v2219
      %v2509 = vpop.f32.mrb[0].mxu0
      %v2510 = vadd.f32 0.0, %v2509
      %v2511 = vpop.f32.mrb[0].mxu0
      %v2512 = vpop.f32.mrb[0].mxu0
      %v2513 = vadd.f32 0.0, %v2512
      %v2514 = vpop.f32.mrb[0].mxu0
      %2515 = vmatprep.mubr.bf16.mxu0 %v2223
      %2516 = vmatmul.mubr.bf16.gmra.mrb[0].mxu0 %v2222
      %v2517 = vpop.f32.mrb[0].mxu0
      %v2518 = vadd.f32 0.0, %v2517
      %v2519 = vpop.f32.mrb[0].mxu0
      %v2520 = vpop.f32.mrb[0].mxu0
      %v2521 = vadd.f32 0.0, %v2520
      %v2522 = vpop.f32.mrb[0].mxu0
      %2523 = vmatprep.mubr.bf16.mxu0 %v2226
      %2524 = vmatmul.mubr.bf16.gmra.mrb[0].mxu0 %v2225
      %v2525 = vpop.f32.mrb[0].mxu0
      %v2526 = vadd.f32 0.0, %v2525
      %v2527 = vpop.f32.mrb[0].mxu0
      %v2528 = vpop.f32.mrb[0].mxu0
      %v2529 = vadd.f32 0.0, %v2528
      %v2530 = vpop.f32.mrb[0].mxu0
      %2531 = vmatprep.mubr.bf16.mxu0 %v2229
      %2532 = vmatmul.mubr.bf16.gmra.mrb[0].mxu0 %v2228
      %v2533 = vpop.f32.mrb[0].mxu0
      %v2534 = vadd.f32 0.0, %v2533
      %v2535 = vpop.f32.mrb[0].mxu0
      %v2536 = vpop.f32.mrb[0].mxu0
      %v2537 = vadd.f32 0.0, %v2536
      %v2538 = vpop.f32.mrb[0].mxu0
      %2539 = vmatprep.mubr.bf16.mxu0 %v2232
      %2540 = vmatmul.mubr.bf16.gmra.mrb[0].mxu0 %v2231
      %v2541 = vpop.f32.mrb[0].mxu0
      %v2542 = vadd.f32 0.0, %v2541
      %v2543 = vpop.f32.mrb[0].mxu0
      %v2544 = vpop.f32.mrb[0].mxu0
      %v2545 = vadd.f32 0.0, %v2544
      %v2546 = vpop.f32.mrb[0].mxu0
      %2547 = vmatprep.mubr.bf16.mxu0 %v2235
      %2548 = vmatmul.mubr.bf16.gmra.mrb[0].mxu0 %v2234
      %v2549 = vpop.f32.mrb[0].mxu0
      %v2550 = vadd.f32 0.0, %v2549
      %v2551 = vpop.f32.mrb[0].mxu0
      %v2552 = vpop.f32.mrb[0].mxu0
      %v2553 = vadd.f32 0.0, %v2552
      %v2554 = vpop.f32.mrb[0].mxu0
      %2555 = vmatprep.mubr.bf16.mxu0 %v2238
      %2556 = vmatmul.mubr.bf16.gmra.mrb[0].mxu0 %v2237
      %v2557 = vpop.f32.mrb[0].mxu0
      %v2558 = vadd.f32 0.0, %v2557
      %v2559 = vpop.f32.mrb[0].mxu0
      %v2560 = vpop.f32.mrb[0].mxu0
      %v2561 = vadd.f32 0.0, %v2560
      %v2562 = vpop.f32.mrb[0].mxu0
      %2563 = vmatprep.mubr.bf16.mxu0 %v2241
      %2564 = vmatmul.mubr.bf16.gmra.mrb[0].mxu0 %v2240
      %v2565 = vpop.f32.mrb[0].mxu0
      %v2566 = vadd.f32 0.0, %v2565
      %v2567 = vpop.f32.mrb[0].mxu0
      %v2568 = vpop.f32.mrb[0].mxu0
      %v2569 = vadd.f32 0.0, %v2568
      %v2570 = vpop.f32.mrb[0].mxu0
      %2571 = vmatprep.mubr.bf16.mxu0 %v2244
      %2572 = vmatmul.mubr.bf16.gmra.mrb[0].mxu0 %v2243
      %v2573 = vpop.f32.mrb[0].mxu0
      %v2574 = vadd.f32 0.0, %v2573
      %v2575 = vpop.f32.mrb[0].mxu0
      %v2576 = vpop.f32.mrb[0].mxu0
      %v2577 = vadd.f32 0.0, %v2576
      %v2578 = vpop.f32.mrb[0].mxu0
      %2579 = vmatprep.mubr.bf16.mxu0 %v2247
      %2580 = vmatmul.mubr.bf16.gmra.mrb[0].mxu0 %v2246
      %v2581 = vpop.f32.mrb[0].mxu0
      %v2582 = vadd.f32 0.0, %v2581
      %v2583 = vpop.f32.mrb[0].mxu0
      %v2584 = vpop.f32.mrb[0].mxu0
      %v2585 = vadd.f32 0.0, %v2584
      %v2586 = vpop.f32.mrb[0].mxu0
      %2587 = vmatprep.mubr.bf16.mxu0 %v2250
      %2588 = vmatmul.mubr.bf16.gmra.mrb[0].mxu0 %v2249
      %v2589 = vpop.f32.mrb[0].mxu0
      %v2590 = vadd.f32 0.0, %v2589
      %v2591 = vpop.f32.mrb[0].mxu0
      %v2592 = vpop.f32.mrb[0].mxu0
      %v2593 = vadd.f32 0.0, %v2592
      %v2594 = vpop.f32.mrb[0].mxu0
      %2595 = vmatprep.mubr.bf16.mxu0 %v2253
      %2596 = vmatmul.mubr.bf16.gmra.mrb[0].mxu0 %v2252
      %v2597 = vpop.f32.mrb[0].mxu0
      %v2598 = vadd.f32 0.0, %v2597
      %v2599 = vpop.f32.mrb[0].mxu0
      %v2600 = vpop.f32.mrb[0].mxu0
      %v2601 = vadd.f32 0.0, %v2600
      %v2602 = vpop.f32.mrb[0].mxu0
      %2603 = vmatprep.mubr.bf16.mxu0 %v2256
      %2604 = vmatmul.mubr.bf16.gmra.mrb[0].mxu0 %v2255
      %v2605 = vpop.f32.mrb[0].mxu0
      %v2606 = vadd.f32 0.0, %v2605
      %v2607 = vpop.f32.mrb[0].mxu0
      %v2608 = vpop.f32.mrb[0].mxu0
      %v2609 = vadd.f32 0.0, %v2608
      %v2610 = vpop.f32.mrb[0].mxu0
      %2611 = vdwg.mxu0
      %2612 = vmatprep.subr.bf16.mxu0 0
      %2613 = vmatpush1.bf16.msra.mxu0 %v2419
      %2614 = vmatprep.subr.bf16.mxu0 0
      %2615 = vmatpush1.bf16.msra.mxu0 %v2420
      %2616 = vmatprep.subr.bf16.mxu0 0
      %2617 = vmatpush1.bf16.msra.mxu0 %v2421
      %2618 = vmatprep.subr.bf16.mxu0 0
      %2619 = vmatpush1.bf16.msra.mxu0 %v2422
      %2620 = vmatprep.subr.bf16.mxu0 0
      %2621 = vmatpush1.bf16.msra.mxu0 %v2423
      %2622 = vmatprep.subr.bf16.mxu0 0
      %2623 = vmatpush1.bf16.msra.mxu0 %v2424
      %2624 = vmatprep.subr.bf16.mxu0 0
      %2625 = vmatpush1.bf16.msra.mxu0 %v2425
      %2626 = vmatprep.subr.bf16.mxu0 0
      %2627 = vmatpush1.bf16.msra.mxu0 %v2426
      %2628 = vmatprep.subr.bf16.mxu0 0
      %2629 = vmatpush1.bf16.msra.mxu0 0
      %2630 = vmatprep.subr.bf16.mxu0 0
      %2631 = vmatpush1.bf16.msra.mxu0 0
      %2632 = vmatprep.subr.bf16.mxu0 0
      %2633 = vmatpush1.bf16.msra.mxu0 0
      %2634 = vmatprep.subr.bf16.mxu0 0
      %2635 = vmatpush1.bf16.msra.mxu0 0
      %2636 = vmatprep.subr.bf16.mxu0 0
      %2637 = vmatpush1.bf16.msra.mxu0 0
      %2638 = vmatprep.subr.bf16.mxu0 0
      %2639 = vmatpush1.bf16.msra.mxu0 0
      %2640 = vmatprep.subr.bf16.mxu0 0
      %2641 = vmatpush1.bf16.msra.mxu0 0
      %2642 = vmatprep.subr.bf16.mxu0 0
      %2643 = vmatpush1.bf16.msra.mxu0 0
      %2644 = vmatprep.mubr.bf16.mxu0 0
      %2645 = vmatmul.mubr.bf16.gmra.mrb[0].mxu0 %v2212
      %v2646 = vpop.f32.mrb[0].mxu0
      %v2647 = vadd.f32 %v2486, %v2646
      %v2648 = vpop.f32.mrb[0].mxu0
      %v2649 = vpop.f32.mrb[0].mxu0
      %v2650 = vadd.f32 %v2489, %v2649
      %v2651 = vpop.f32.mrb[0].mxu0
      %2652 = vmatprep.mubr.bf16.mxu0 0
      %2653 = vmatmul.mubr.bf16.gmra.mrb[0].mxu0 %v2215
      %v2654 = vpop.f32.mrb[0].mxu0
      %v2655 = vadd.f32 %v2494, %v2654
      %v2656 = vpop.f32.mrb[0].mxu0
      %v2657 = vpop.f32.mrb[0].mxu0
      %v2658 = vadd.f32 %v2497, %v2657
      %v2659 = vpop.f32.mrb[0].mxu0
      %2660 = vmatprep.mubr.bf16.mxu0 0
      %2661 = vmatmul.mubr.bf16.gmra.mrb[0].mxu0 %v2218
      %v2662 = vpop.f32.mrb[0].mxu0
      %v2663 = vadd.f32 %v2502, %v2662
      %v2664 = vpop.f32.mrb[0].mxu0
      %v2665 = vpop.f32.mrb[0].mxu0
      %v2666 = vadd.f32 %v2505, %v2665
      %v2667 = vpop.f32.mrb[0].mxu0
      %2668 = vmatprep.mubr.bf16.mxu0 0
      %2669 = vmatmul.mubr.bf16.gmra.mrb[0].mxu0 %v2221
      %v2670 = vpop.f32.mrb[0].mxu0
      %v2671 = vadd.f32 %v2510, %v2670
      %v2672 = vpop.f32.mrb[0].mxu0
      %v2673 = vpop.f32.mrb[0].mxu0
      %v2674 = vadd.f32 %v2513, %v2673
      %v2675 = vpop.f32.mrb[0].mxu0
      %2676 = vmatprep.mubr.bf16.mxu0 0
      %2677 = vmatmul.mubr.bf16.gmra.mrb[0].mxu0 %v2224
      %v2678 = vpop.f32.mrb[0].mxu0
      %v2679 = vadd.f32 %v2518, %v2678
      %v2680 = vpop.f32.mrb[0].mxu0
      %v2681 = vpop.f32.mrb[0].mxu0
      %v2682 = vadd.f32 %v2521, %v2681
      %v2683 = vpop.f32.mrb[0].mxu0
      %2684 = vmatprep.mubr.bf16.mxu0 0
      %2685 = vmatmul.mubr.bf16.gmra.mrb[0].mxu0 %v2227
      %v2686 = vpop.f32.mrb[0].mxu0
      %v2687 = vadd.f32 %v2526, %v2686
      %v2688 = vpop.f32.mrb[0].mxu0
      %v2689 = vpop.f32.mrb[0].mxu0
      %v2690 = vadd.f32 %v2529, %v2689
      %v2691 = vpop.f32.mrb[0].mxu0
      %2692 = vmatprep.mubr.bf16.mxu0 0
      %2693 = vmatmul.mubr.bf16.gmra.mrb[0].mxu0 %v2230
      %v2694 = vpop.f32.mrb[0].mxu0
      %v2695 = vadd.f32 %v2534, %v2694
      %v2696 = vpop.f32.mrb[0].mxu0
      %v2697 = vpop.f32.mrb[0].mxu0
      %v2698 = vadd.f32 %v2537, %v2697
      %v2699 = vpop.f32.mrb[0].mxu0
      %2700 = vmatprep.mubr.bf16.mxu0 0
      %2701 = vmatmul.mubr.bf16.gmra.mrb[0].mxu0 %v2233
      %v2702 = vpop.f32.mrb[0].mxu0
      %v2703 = vadd.f32 %v2542, %v2702
      %v2704 = vpop.f32.mrb[0].mxu0
      %v2705 = vpop.f32.mrb[0].mxu0
      %v2706 = vadd.f32 %v2545, %v2705
      %v2707 = vpop.f32.mrb[0].mxu0
      %2708 = vmatprep.mubr.bf16.mxu0 0
      %2709 = vmatmul.mubr.bf16.gmra.mrb[0].mxu0 %v2236
      %v2710 = vpop.f32.mrb[0].mxu0
      %v2711 = vadd.f32 %v2550, %v2710
      %v2712 = vpop.f32.mrb[0].mxu0
      %v2713 = vpop.f32.mrb[0].mxu0
      %v2714 = vadd.f32 %v2553, %v2713
      %v2715 = vpop.f32.mrb[0].mxu0
      %2716 = vmatprep.mubr.bf16.mxu0 0
      %2717 = vmatmul.mubr.bf16.gmra.mrb[0].mxu0 %v2239
      %v2718 = vpop.f32.mrb[0].mxu0
      %v2719 = vadd.f32 %v2558, %v2718
      %v2720 = vpop.f32.mrb[0].mxu0
      %v2721 = vpop.f32.mrb[0].mxu0
      %v2722 = vadd.f32 %v2561, %v2721
      %v2723 = vpop.f32.mrb[0].mxu0
      %2724 = vmatprep.mubr.bf16.mxu0 0
      %2725 = vmatmul.mubr.bf16.gmra.mrb[0].mxu0 %v2242
      %v2726 = vpop.f32.mrb[0].mxu0
      %v2727 = vadd.f32 %v2566, %v2726
      %v2728 = vpop.f32.mrb[0].mxu0
      %v2729 = vpop.f32.mrb[0].mxu0
      %v2730 = vadd.f32 %v2569, %v2729
      %v2731 = vpop.f32.mrb[0].mxu0
      %2732 = vmatprep.mubr.bf16.mxu0 0
      %2733 = vmatmul.mubr.bf16.gmra.mrb[0].mxu0 %v2245
      %v2734 = vpop.f32.mrb[0].mxu0
      %v2735 = vadd.f32 %v2574, %v2734
      %v2736 = vpop.f32.mrb[0].mxu0
      %v2737 = vpop.f32.mrb[0].mxu0
      %v2738 = vadd.f32 %v2577, %v2737
      %v2739 = vpop.f32.mrb[0].mxu0
      %2740 = vmatprep.mubr.bf16.mxu0 0
      %2741 = vmatmul.mubr.bf16.gmra.mrb[0].mxu0 %v2248
      %v2742 = vpop.f32.mrb[0].mxu0
      %v2743 = vadd.f32 %v2582, %v2742
      %v2744 = vpop.f32.mrb[0].mxu0
      %v2745 = vpop.f32.mrb[0].mxu0
      %v2746 = vadd.f32 %v2585, %v2745
      %v2747 = vpop.f32.mrb[0].mxu0
      %2748 = vmatprep.mubr.bf16.mxu0 0
      %2749 = vmatmul.mubr.bf16.gmra.mrb[0].mxu0 %v2251
      %v2750 = vpop.f32.mrb[0].mxu0
      %v2751 = vadd.f32 %v2590, %v2750
      %v2752 = vpop.f32.mrb[0].mxu0
      %v2753 = vpop.f32.mrb[0].mxu0
      %v2754 = vadd.f32 %v2593, %v2753
      %v2755 = vpop.f32.mrb[0].mxu0
      %2756 = vmatprep.mubr.bf16.mxu0 0
      %2757 = vmatmul.mubr.bf16.gmra.mrb[0].mxu0 %v2254
      %v2758 = vpop.f32.mrb[0].mxu0
      %v2759 = vadd.f32 %v2598, %v2758
      %v2760 = vpop.f32.mrb[0].mxu0
      %v2761 = vpop.f32.mrb[0].mxu0
      %v2762 = vadd.f32 %v2601, %v2761
      %v2763 = vpop.f32.mrb[0].mxu0
      %2764 = vmatprep.mubr.bf16.mxu0 0
      %2765 = vmatmul.mubr.bf16.gmra.mrb[0].mxu0 %v2257
      %v2766 = vpop.f32.mrb[0].mxu0
      %v2767 = vadd.f32 %v2606, %v2766
      %v2768 = vpop.f32.mrb[0].mxu0
      %v2769 = vpop.f32.mrb[0].mxu0
      %v2770 = vadd.f32 %v2609, %v2769
      %v2771 = vpop.f32.mrb[0].mxu0
      %2772 = vdwg.mxu0
      %v2821 = vunpack.c.l.b16 %v2161
      %v2822 = vunpack.c.l.b16 %v2162
      %v2823 = vunpack.c.l.b16 %v2163
      %v2824 = vunpack.c.l.b16 %v2164
      %v2825 = vunpack.c.l.b16 %v2165
      %v2826 = vunpack.c.l.b16 %v2166
      %v2827 = vunpack.c.l.b16 %v2167
      %v2828 = vunpack.c.l.b16 %v2168
      %v2829 = vunpack.c.l.b16 %v2169
      %v2830 = vunpack.c.l.b16 %v2170
      %v2831 = vunpack.c.l.b16 %v2171
      %v2832 = vunpack.c.l.b16 %v2172
      %v2833 = vunpack.c.l.b16 %v2173
      %v2834 = vunpack.c.l.b16 %v2174
      %v2835 = vunpack.c.l.b16 %v2175
      %v2836 = vunpack.c.l.b16 %v2176
      %v2837 = vunpack.c.l.b16 %v2177
      %v2838 = vunpack.c.l.b16 %v2178
      %v2839 = vunpack.c.l.b16 %v2179
      %v2840 = vunpack.c.l.b16 %v2180
      %v2841 = vunpack.c.l.b16 %v2181
      %v2842 = vunpack.c.l.b16 %v2182
      %v2843 = vunpack.c.l.b16 %v2183
      %v2844 = vunpack.c.l.b16 %v2184
      %v2845 = vunpack.c.l.b16 %v2185
      %v2846 = vunpack.c.l.b16 %v2186
      %v2847 = vunpack.c.l.b16 %v2187
      %v2848 = vunpack.c.l.b16 %v2188
      %v2849 = vunpack.c.l.b16 %v2189
      %v2850 = vunpack.c.l.b16 %v2190
      %v2851 = vunpack.c.l.b16 %v2191
      %v2852 = vunpack.c.l.b16 %v2192
      %v2853 = vunpack.c.l.b16 %v2193
      %v2854 = vunpack.c.l.b16 %v2194
      %v2855 = vunpack.c.l.b16 %v2195
      %v2856 = vunpack.c.l.b16 %v2196
      %v2857 = vunpack.c.l.b16 %v2197
      %v2858 = vunpack.c.l.b16 %v2198
      %v2859 = vunpack.c.l.b16 %v2199
      %v2860 = vunpack.c.l.b16 %v2200
      %v2861 = vunpack.c.l.b16 %v2201
      %v2862 = vunpack.c.l.b16 %v2202
      %v2863 = vunpack.c.l.b16 %v2203
      %v2864 = vunpack.c.l.b16 %v2204
      %v2865 = vunpack.c.l.b16 %v2205
      %v2866 = vunpack.c.l.b16 %v2206
      %v2867 = vunpack.c.l.b16 %v2207
      %v2868 = vunpack.c.l.b16 %v2208
      %v2869 = vpack.c.b16 %v2822, %v2821
      %v2870 = vpack.c.b16 %v2824, %v2823
      %v2871 = vpack.c.b16 %v2826, %v2825
      %v2872 = vpack.c.b16 %v2828, %v2827
      %v2873 = vpack.c.b16 %v2830, %v2829
      %v2874 = vpack.c.b16 %v2832, %v2831
      %v2875 = vpack.c.b16 %v2834, %v2833
      %v2876 = vpack.c.b16 %v2836, %v2835
      %v2877 = vpack.c.b16 %v2838, %v2837
      %v2878 = vpack.c.b16 %v2840, %v2839
      %v2879 = vpack.c.b16 %v2842, %v2841
      %v2880 = vpack.c.b16 %v2844, %v2843
      %v2881 = vpack.c.b16 %v2846, %v2845
      %v2882 = vpack.c.b16 %v2848, %v2847
      %v2883 = vpack.c.b16 %v2850, %v2849
      %v2884 = vpack.c.b16 %v2852, %v2851
      %v2885 = vpack.c.b16 %v2854, %v2853
      %v2886 = vpack.c.b16 %v2856, %v2855
      %v2887 = vpack.c.b16 %v2858, %v2857
      %v2888 = vpack.c.b16 %v2860, %v2859
      %v2889 = vpack.c.b16 %v2862, %v2861
      %v2890 = vpack.c.b16 %v2864, %v2863
      %v2891 = vpack.c.b16 %v2866, %v2865
      %v2892 = vpack.c.b16 %v2868, %v2867
      %2917 = vmatprep.subr.bf16.mxu0 0
      %2918 = vmatpush1.bf16.msra.mxu0 %v2869
      %2919 = vmatprep.subr.bf16.mxu0 0
      %2920 = vmatpush1.bf16.msra.mxu0 %v2870
      %2921 = vmatprep.subr.bf16.mxu0 0
      %2922 = vmatpush1.bf16.msra.mxu0 %v2871
      %2923 = vmatprep.subr.bf16.mxu0 0
      %2924 = vmatpush1.bf16.msra.mxu0 %v2872
      %2925 = vmatprep.subr.bf16.mxu0 0
      %2926 = vmatpush1.bf16.msra.mxu0 %v2873
      %2927 = vmatprep.subr.bf16.mxu0 0
      %2928 = vmatpush1.bf16.msra.mxu0 %v2874
      %2929 = vmatprep.subr.bf16.mxu0 0
      %2930 = vmatpush1.bf16.msra.mxu0 %v2875
      %2931 = vmatprep.subr.bf16.mxu0 0
      %2932 = vmatpush1.bf16.msra.mxu0 %v2876
      %2933 = vmatprep.subr.bf16.mxu0 0
      %2934 = vmatpush1.bf16.msra.mxu0 %v2877
      %2935 = vmatprep.subr.bf16.mxu0 0
      %2936 = vmatpush1.bf16.msra.mxu0 %v2878
      %2937 = vmatprep.subr.bf16.mxu0 0
      %2938 = vmatpush1.bf16.msra.mxu0 %v2879
      %2939 = vmatprep.subr.bf16.mxu0 0
      %2940 = vmatpush1.bf16.msra.mxu0 %v2880
      %2941 = vmatprep.subr.bf16.mxu0 0
      %2942 = vmatpush1.bf16.msra.mxu0 %v2881
      %2943 = vmatprep.subr.bf16.mxu0 0
      %2944 = vmatpush1.bf16.msra.mxu0 %v2882
      %2945 = vmatprep.subr.bf16.mxu0 0
      %2946 = vmatpush1.bf16.msra.mxu0 %v2883
      %2947 = vmatprep.subr.bf16.mxu0 0
      %2948 = vmatpush1.bf16.msra.mxu0 %v2884
      %2949 = vmatprep.mubr.bf16.mxu0 %v2114
      %2950 = vmatmul.mubr.bf16.gmra.mrb[0].mxu0 %v2113
      %v2951 = vpop.f32.mrb[0].mxu0
      %v2952 = vadd.f32 %v2647, %v2951
      %v2953 = vpop.f32.mrb[0].mxu0
      %v2954 = vpop.f32.mrb[0].mxu0
      %v2955 = vadd.f32 %v2650, %v2954
      %v2956 = vpop.f32.mrb[0].mxu0
      %2957 = vmatprep.mubr.bf16.mxu0 %v2117
      %2958 = vmatmul.mubr.bf16.gmra.mrb[0].mxu0 %v2116
      %v2959 = vpop.f32.mrb[0].mxu0
      %v2960 = vadd.f32 %v2655, %v2959
      %v2961 = vpop.f32.mrb[0].mxu0
      %v2962 = vpop.f32.mrb[0].mxu0
      %v2963 = vadd.f32 %v2658, %v2962
      %v2964 = vpop.f32.mrb[0].mxu0
      %2965 = vmatprep.mubr.bf16.mxu0 %v2120
      %2966 = vmatmul.mubr.bf16.gmra.mrb[0].mxu0 %v2119
      %v2967 = vpop.f32.mrb[0].mxu0
      %v2968 = vadd.f32 %v2663, %v2967
      %v2969 = vpop.f32.mrb[0].mxu0
      %v2970 = vpop.f32.mrb[0].mxu0
      %v2971 = vadd.f32 %v2666, %v2970
      %v2972 = vpop.f32.mrb[0].mxu0
      %2973 = vmatprep.mubr.bf16.mxu0 %v2123
      %2974 = vmatmul.mubr.bf16.gmra.mrb[0].mxu0 %v2122
      %v2975 = vpop.f32.mrb[0].mxu0
      %v2976 = vadd.f32 %v2671, %v2975
      %v2977 = vpop.f32.mrb[0].mxu0
      %v2978 = vpop.f32.mrb[0].mxu0
      %v2979 = vadd.f32 %v2674, %v2978
      %v2980 = vpop.f32.mrb[0].mxu0
      %2981 = vmatprep.mubr.bf16.mxu0 %v2126
      %2982 = vmatmul.mubr.bf16.gmra.mrb[0].mxu0 %v2125
      %v2983 = vpop.f32.mrb[0].mxu0
      %v2984 = vadd.f32 %v2679, %v2983
      %v2985 = vpop.f32.mrb[0].mxu0
      %v2986 = vpop.f32.mrb[0].mxu0
      %v2987 = vadd.f32 %v2682, %v2986
      %v2988 = vpop.f32.mrb[0].mxu0
      %2989 = vmatprep.mubr.bf16.mxu0 %v2129
      %2990 = vmatmul.mubr.bf16.gmra.mrb[0].mxu0 %v2128
      %v2991 = vpop.f32.mrb[0].mxu0
      %v2992 = vadd.f32 %v2687, %v2991
      %v2993 = vpop.f32.mrb[0].mxu0
      %v2994 = vpop.f32.mrb[0].mxu0
      %v2995 = vadd.f32 %v2690, %v2994
      %v2996 = vpop.f32.mrb[0].mxu0
      %2997 = vmatprep.mubr.bf16.mxu0 %v2132
      %2998 = vmatmul.mubr.bf16.gmra.mrb[0].mxu0 %v2131
      %v2999 = vpop.f32.mrb[0].mxu0
      %v3000 = vadd.f32 %v2695, %v2999
      %v3001 = vpop.f32.mrb[0].mxu0
      %v3002 = vpop.f32.mrb[0].mxu0
      %v3003 = vadd.f32 %v2698, %v3002
      %v3004 = vpop.f32.mrb[0].mxu0
      %3005 = vmatprep.mubr.bf16.mxu0 %v2135
      %3006 = vmatmul.mubr.bf16.gmra.mrb[0].mxu0 %v2134
      %v3007 = vpop.f32.mrb[0].mxu0
      %v3008 = vadd.f32 %v2703, %v3007
      %v3009 = vpop.f32.mrb[0].mxu0
      %v3010 = vpop.f32.mrb[0].mxu0
      %v3011 = vadd.f32 %v2706, %v3010
      %v3012 = vpop.f32.mrb[0].mxu0
      %3013 = vmatprep.mubr.bf16.mxu0 %v2138
      %3014 = vmatmul.mubr.bf16.gmra.mrb[0].mxu0 %v2137
      %v3015 = vpop.f32.mrb[0].mxu0
      %v3016 = vadd.f32 %v2711, %v3015
      %v3017 = vpop.f32.mrb[0].mxu0
      %v3018 = vpop.f32.mrb[0].mxu0
      %v3019 = vadd.f32 %v2714, %v3018
      %v3020 = vpop.f32.mrb[0].mxu0
      %3021 = vmatprep.mubr.bf16.mxu0 %v2141
      %3022 = vmatmul.mubr.bf16.gmra.mrb[0].mxu0 %v2140
      %v3023 = vpop.f32.mrb[0].mxu0
      %v3024 = vadd.f32 %v2719, %v3023
      %v3025 = vpop.f32.mrb[0].mxu0
      %v3026 = vpop.f32.mrb[0].mxu0
      %v3027 = vadd.f32 %v2722, %v3026
      %v3028 = vpop.f32.mrb[0].mxu0
      %3029 = vmatprep.mubr.bf16.mxu0 %v2144
      %3030 = vmatmul.mubr.bf16.gmra.mrb[0].mxu0 %v2143
      %v3031 = vpop.f32.mrb[0].mxu0
      %v3032 = vadd.f32 %v2727, %v3031
      %v3033 = vpop.f32.mrb[0].mxu0
      %v3034 = vpop.f32.mrb[0].mxu0
      %v3035 = vadd.f32 %v2730, %v3034
      %v3036 = vpop.f32.mrb[0].mxu0
      %3037 = vmatprep.mubr.bf16.mxu0 %v2147
      %3038 = vmatmul.mubr.bf16.gmra.mrb[0].mxu0 %v2146
      %v3039 = vpop.f32.mrb[0].mxu0
      %v3040 = vadd.f32 %v2735, %v3039
      %v3041 = vpop.f32.mrb[0].mxu0
      %v3042 = vpop.f32.mrb[0].mxu0
      %v3043 = vadd.f32 %v2738, %v3042
      %v3044 = vpop.f32.mrb[0].mxu0
      %3045 = vmatprep.mubr.bf16.mxu0 %v2150
      %3046 = vmatmul.mubr.bf16.gmra.mrb[0].mxu0 %v2149
      %v3047 = vpop.f32.mrb[0].mxu0
      %v3048 = vadd.f32 %v2743, %v3047
      %v3049 = vpop.f32.mrb[0].mxu0
      %v3050 = vpop.f32.mrb[0].mxu0
      %v3051 = vadd.f32 %v2746, %v3050
      %v3052 = vpop.f32.mrb[0].mxu0
      %3053 = vmatprep.mubr.bf16.mxu0 %v2153
      %3054 = vmatmul.mubr.bf16.gmra.mrb[0].mxu0 %v2152
      %v3055 = vpop.f32.mrb[0].mxu0
      %v3056 = vadd.f32 %v2751, %v3055
      %v3057 = vpop.f32.mrb[0].mxu0
      %v3058 = vpop.f32.mrb[0].mxu0
      %v3059 = vadd.f32 %v2754, %v3058
      %v3060 = vpop.f32.mrb[0].mxu0
      %3061 = vmatprep.mubr.bf16.mxu0 %v2156
      %3062 = vmatmul.mubr.bf16.gmra.mrb[0].mxu0 %v2155
      %v3063 = vpop.f32.mrb[0].mxu0
      %v3064 = vadd.f32 %v2759, %v3063
      %v3065 = vpop.f32.mrb[0].mxu0
      %v3066 = vpop.f32.mrb[0].mxu0
      %v3067 = vadd.f32 %v2762, %v3066
      %v3068 = vpop.f32.mrb[0].mxu0
      %3069 = vmatprep.mubr.bf16.mxu0 %v2159
      %3070 = vmatmul.mubr.bf16.gmra.mrb[0].mxu0 %v2158
      %v3071 = vpop.f32.mrb[0].mxu0
      %v3072 = vadd.f32 %v2767, %v3071
      %v3073 = vpop.f32.mrb[0].mxu0
      %v3074 = vpop.f32.mrb[0].mxu0
      %v3075 = vadd.f32 %v2770, %v3074
      %v3076 = vpop.f32.mrb[0].mxu0
      %3077 = vdwg.mxu0
      %3078 = vmatprep.subr.bf16.mxu0 0
      %3079 = vmatpush1.bf16.msra.mxu0 %v2885
      %3080 = vmatprep.subr.bf16.mxu0 0
      %3081 = vmatpush1.bf16.msra.mxu0 %v2886
      %3082 = vmatprep.subr.bf16.mxu0 0
      %3083 = vmatpush1.bf16.msra.mxu0 %v2887
      %3084 = vmatprep.subr.bf16.mxu0 0
      %3085 = vmatpush1.bf16.msra.mxu0 %v2888
      %3086 = vmatprep.subr.bf16.mxu0 0
      %3087 = vmatpush1.bf16.msra.mxu0 %v2889
      %3088 = vmatprep.subr.bf16.mxu0 0
      %3089 = vmatpush1.bf16.msra.mxu0 %v2890
      %3090 = vmatprep.subr.bf16.mxu0 0
      %3091 = vmatpush1.bf16.msra.mxu0 %v2891
      %3092 = vmatprep.subr.bf16.mxu0 0
      %3093 = vmatpush1.bf16.msra.mxu0 %v2892
      %3094 = vmatprep.subr.bf16.mxu0 0
      %3095 = vmatpush1.bf16.msra.mxu0 0
      %3096 = vmatprep.subr.bf16.mxu0 0
      %3097 = vmatpush1.bf16.msra.mxu0 0
      %3098 = vmatprep.subr.bf16.mxu0 0
      %3099 = vmatpush1.bf16.msra.mxu0 0
      %3100 = vmatprep.subr.bf16.mxu0 0
      %3101 = vmatpush1.bf16.msra.mxu0 0
      %3102 = vmatprep.subr.bf16.mxu0 0
      %3103 = vmatpush1.bf16.msra.mxu0 0
      %3104 = vmatprep.subr.bf16.mxu0 0
      %3105 = vmatpush1.bf16.msra.mxu0 0
      %3106 = vmatprep.subr.bf16.mxu0 0
      %3107 = vmatpush1.bf16.msra.mxu0 0
      %3108 = vmatprep.subr.bf16.mxu0 0
      %3109 = vmatpush1.bf16.msra.mxu0 0
      %3110 = vmatprep.mubr.bf16.mxu0 0
      %3111 = vmatmul.mubr.bf16.gmra.mrb[0].mxu0 %v2115
      %v3112 = vpop.f32.mrb[0].mxu0
      %v3113 = vadd.f32 %v2952, %v3112
      %v3114 = vpop.f32.mrb[0].mxu0
      %v3115 = vpop.f32.mrb[0].mxu0
      %v3116 = vadd.f32 %v2955, %v3115
      %v3117 = vpop.f32.mrb[0].mxu0
      %3118 = vmatprep.mubr.bf16.mxu0 0
      %3119 = vmatmul.mubr.bf16.gmra.mrb[0].mxu0 %v2118
      %v3120 = vpop.f32.mrb[0].mxu0
      %v3121 = vadd.f32 %v2960, %v3120
      %v3122 = vpop.f32.mrb[0].mxu0
      %v3123 = vpop.f32.mrb[0].mxu0
      %v3124 = vadd.f32 %v2963, %v3123
      %v3125 = vpop.f32.mrb[0].mxu0
      %3126 = vmatprep.mubr.bf16.mxu0 0
      %3127 = vmatmul.mubr.bf16.gmra.mrb[0].mxu0 %v2121
      %v3128 = vpop.f32.mrb[0].mxu0
      %v3129 = vadd.f32 %v2968, %v3128
      %v3130 = vpop.f32.mrb[0].mxu0
      %v3131 = vpop.f32.mrb[0].mxu0
      %v3132 = vadd.f32 %v2971, %v3131
      %v3133 = vpop.f32.mrb[0].mxu0
      %3134 = vmatprep.mubr.bf16.mxu0 0
      %3135 = vmatmul.mubr.bf16.gmra.mrb[0].mxu0 %v2124
      %v3136 = vpop.f32.mrb[0].mxu0
      %v3137 = vadd.f32 %v2976, %v3136
      %v3138 = vpop.f32.mrb[0].mxu0
      %v3139 = vpop.f32.mrb[0].mxu0
      %v3140 = vadd.f32 %v2979, %v3139
      %v3141 = vpop.f32.mrb[0].mxu0
      %3142 = vmatprep.mubr.bf16.mxu0 0
      %3143 = vmatmul.mubr.bf16.gmra.mrb[0].mxu0 %v2127
      %v3144 = vpop.f32.mrb[0].mxu0
      %v3145 = vadd.f32 %v2984, %v3144
      %v3146 = vpop.f32.mrb[0].mxu0
      %v3147 = vpop.f32.mrb[0].mxu0
      %v3148 = vadd.f32 %v2987, %v3147
      %v3149 = vpop.f32.mrb[0].mxu0
      %3150 = vmatprep.mubr.bf16.mxu0 0
      %3151 = vmatmul.mubr.bf16.gmra.mrb[0].mxu0 %v2130
      %v3152 = vpop.f32.mrb[0].mxu0
      %v3153 = vadd.f32 %v2992, %v3152
      %v3154 = vpop.f32.mrb[0].mxu0
      %v3155 = vpop.f32.mrb[0].mxu0
      %v3156 = vadd.f32 %v2995, %v3155
      %v3157 = vpop.f32.mrb[0].mxu0
      %3158 = vmatprep.mubr.bf16.mxu0 0
      %3159 = vmatmul.mubr.bf16.gmra.mrb[0].mxu0 %v2133
      %v3160 = vpop.f32.mrb[0].mxu0
      %v3161 = vadd.f32 %v3000, %v3160
      %v3162 = vpop.f32.mrb[0].mxu0
      %v3163 = vpop.f32.mrb[0].mxu0
      %v3164 = vadd.f32 %v3003, %v3163
      %v3165 = vpop.f32.mrb[0].mxu0
      %3166 = vmatprep.mubr.bf16.mxu0 0
      %3167 = vmatmul.mubr.bf16.gmra.mrb[0].mxu0 %v2136
      %v3168 = vpop.f32.mrb[0].mxu0
      %v3169 = vadd.f32 %v3008, %v3168
      %v3170 = vpop.f32.mrb[0].mxu0
      %v3171 = vpop.f32.mrb[0].mxu0
      %v3172 = vadd.f32 %v3011, %v3171
      %v3173 = vpop.f32.mrb[0].mxu0
      %3174 = vmatprep.mubr.bf16.mxu0 0
      %3175 = vmatmul.mubr.bf16.gmra.mrb[0].mxu0 %v2139
      %v3176 = vpop.f32.mrb[0].mxu0
      %v3177 = vadd.f32 %v3016, %v3176
      %v3178 = vpop.f32.mrb[0].mxu0
      %v3179 = vpop.f32.mrb[0].mxu0
      %v3180 = vadd.f32 %v3019, %v3179
      %v3181 = vpop.f32.mrb[0].mxu0
      %3182 = vmatprep.mubr.bf16.mxu0 0
      %3183 = vmatmul.mubr.bf16.gmra.mrb[0].mxu0 %v2142
      %v3184 = vpop.f32.mrb[0].mxu0
      %v3185 = vadd.f32 %v3024, %v3184
      %v3186 = vpop.f32.mrb[0].mxu0
      %v3187 = vpop.f32.mrb[0].mxu0
      %v3188 = vadd.f32 %v3027, %v3187
      %v3189 = vpop.f32.mrb[0].mxu0
      %3190 = vmatprep.mubr.bf16.mxu0 0
      %3191 = vmatmul.mubr.bf16.gmra.mrb[0].mxu0 %v2145
      %v3192 = vpop.f32.mrb[0].mxu0
      %v3193 = vadd.f32 %v3032, %v3192
      %v3194 = vpop.f32.mrb[0].mxu0
      %v3195 = vpop.f32.mrb[0].mxu0
      %v3196 = vadd.f32 %v3035, %v3195
      %v3197 = vpop.f32.mrb[0].mxu0
      %3198 = vmatprep.mubr.bf16.mxu0 0
      %3199 = vmatmul.mubr.bf16.gmra.mrb[0].mxu0 %v2148
      %v3200 = vpop.f32.mrb[0].mxu0
      %v3201 = vadd.f32 %v3040, %v3200
      %v3202 = vpop.f32.mrb[0].mxu0
      %v3203 = vpop.f32.mrb[0].mxu0
      %v3204 = vadd.f32 %v3043, %v3203
      %v3205 = vpop.f32.mrb[0].mxu0
      %3206 = vmatprep.mubr.bf16.mxu0 0
      %3207 = vmatmul.mubr.bf16.gmra.mrb[0].mxu0 %v2151
      %v3208 = vpop.f32.mrb[0].mxu0
      %v3209 = vadd.f32 %v3048, %v3208
      %v3210 = vpop.f32.mrb[0].mxu0
      %v3211 = vpop.f32.mrb[0].mxu0
      %v3212 = vadd.f32 %v3051, %v3211
      %v3213 = vpop.f32.mrb[0].mxu0
      %3214 = vmatprep.mubr.bf16.mxu0 0
      %3215 = vmatmul.mubr.bf16.gmra.mrb[0].mxu0 %v2154
      %v3216 = vpop.f32.mrb[0].mxu0
      %v3217 = vadd.f32 %v3056, %v3216
      %v3218 = vpop.f32.mrb[0].mxu0
      %v3219 = vpop.f32.mrb[0].mxu0
      %v3220 = vadd.f32 %v3059, %v3219
      %v3221 = vpop.f32.mrb[0].mxu0
      %3222 = vmatprep.mubr.bf16.mxu0 0
      %3223 = vmatmul.mubr.bf16.gmra.mrb[0].mxu0 %v2157
      %v3224 = vpop.f32.mrb[0].mxu0
      %v3225 = vadd.f32 %v3064, %v3224
      %v3226 = vpop.f32.mrb[0].mxu0
      %v3227 = vpop.f32.mrb[0].mxu0
      %v3228 = vadd.f32 %v3067, %v3227
      %v3229 = vpop.f32.mrb[0].mxu0
      %3230 = vmatprep.mubr.bf16.mxu0 0
      %3231 = vmatmul.mubr.bf16.gmra.mrb[0].mxu0 %v2160
      %v3232 = vpop.f32.mrb[0].mxu0
      %v3233 = vadd.f32 %v3072, %v3232
      %v3234 = vpop.f32.mrb[0].mxu0
      %v3235 = vpop.f32.mrb[0].mxu0
      %v3236 = vadd.f32 %v3075, %v3235
      %v3237 = vpop.f32.mrb[0].mxu0
      %3238 = vdwg.mxu0
      %s3239 = scalar_lea.vmem [#allocation3], 48
      %v3240 = vld [vmem:[%s3239] sm:$0xff]
      %v3241 = vld [vmem:[%s3239 + $0x8] sm:$0xff]
      %v3242 = vld [vmem:[%s3239 + $0x10] sm:$0xff]
      %v3243 = vld [vmem:[%s3239 + $0x18] sm:$0xff]
      %v3244 = vld [vmem:[%s3239 + $0x20] sm:$0xff]
      %v3245 = vld [vmem:[%s3239 + $0x28] sm:$0xff]
      %v3246 = vld [vmem:[%s3239 + $0x30] sm:$0xff]
      %v3247 = vld [vmem:[%s3239 + $0x38] sm:$0xff]
      %v3248 = vld [vmem:[%s3239 + $0x40] sm:$0xff]
      %v3249 = vld [vmem:[%s3239 + $0x48] sm:$0xff]
      %v3250 = vld [vmem:[%s3239 + $0x50] sm:$0xff]
      %v3251 = vld [vmem:[%s3239 + $0x58] sm:$0xff]
      %v3252 = vld [vmem:[%s3239 + $0x60] sm:$0xff]
      %v3253 = vld [vmem:[%s3239 + $0x68] sm:$0xff]
      %v3254 = vld [vmem:[%s3239 + $0x70] sm:$0xff]
      %v3255 = vld [vmem:[%s3239 + $0x78] sm:$0xff]
      %v3256 = vld [vmem:[%s3239 + $0x80] sm:$0xff]
      %v3257 = vld [vmem:[%s3239 + $0x88] sm:$0xff]
      %v3258 = vld [vmem:[%s3239 + $0x90] sm:$0xff]
      %v3259 = vld [vmem:[%s3239 + $0x98] sm:$0xff]
      %v3260 = vld [vmem:[%s3239 + $0xa0] sm:$0xff]
      %v3261 = vld [vmem:[%s3239 + $0xa8] sm:$0xff]
      %v3262 = vld [vmem:[%s3239 + $0xb0] sm:$0xff]
      %v3263 = vld [vmem:[%s3239 + $0xb8] sm:$0xff]
      %v3264 = vld [vmem:[%s3239 + $0xc0] sm:$0xff]
      %v3265 = vld [vmem:[%s3239 + $0xc8] sm:$0xff]
      %v3266 = vld [vmem:[%s3239 + $0xd0] sm:$0xff]
      %v3267 = vld [vmem:[%s3239 + $0xd8] sm:$0xff]
      %v3268 = vld [vmem:[%s3239 + $0xe0] sm:$0xff]
      %v3269 = vld [vmem:[%s3239 + $0xe8] sm:$0xff]
      %v3270 = vld [vmem:[%s3239 + $0xf0] sm:$0xff]
      %v3271 = vld [vmem:[%s3239 + $0xf8] sm:$0xff]
      %v3272 = vld [vmem:[%s3239 + $0x100] sm:$0xff]
      %v3273 = vld [vmem:[%s3239 + $0x108] sm:$0xff]
      %v3274 = vld [vmem:[%s3239 + $0x110] sm:$0xff]
      %v3275 = vld [vmem:[%s3239 + $0x118] sm:$0xff]
      %v3276 = vld [vmem:[%s3239 + $0x120] sm:$0xff]
      %v3277 = vld [vmem:[%s3239 + $0x128] sm:$0xff]
      %v3278 = vld [vmem:[%s3239 + $0x130] sm:$0xff]
      %v3279 = vld [vmem:[%s3239 + $0x138] sm:$0xff]
      %v3280 = vld [vmem:[%s3239 + $0x140] sm:$0xff]
      %v3281 = vld [vmem:[%s3239 + $0x148] sm:$0xff]
      %v3282 = vld [vmem:[%s3239 + $0x150] sm:$0xff]
      %v3283 = vld [vmem:[%s3239 + $0x158] sm:$0xff]
      %v3284 = vld [vmem:[%s3239 + $0x160] sm:$0xff]
      %v3285 = vld [vmem:[%s3239 + $0x168] sm:$0xff]
      %v3286 = vld [vmem:[%s3239 + $0x170] sm:$0xff]
      %v3287 = vld [vmem:[%s3239 + $0x178] sm:$0xff]
      %s3288 = scalar_lea.vmem %s2, 384
      %v3289 = vld [vmem:[%s3288] sm:$0xf]
      %v3290 = vld [vmem:[%s3288 + $0x4] sm:$0xf]
      %v3291 = vld [vmem:[%s3288 + $0x8] sm:$0xf]
      %v3292 = vld [vmem:[%s3288 + $0xc] sm:$0xf]
      %v3293 = vld [vmem:[%s3288 + $0x10] sm:$0xf]
      %v3294 = vld [vmem:[%s3288 + $0x14] sm:$0xf]
      %v3295 = vld [vmem:[%s3288 + $0x18] sm:$0xf]
      %v3296 = vld [vmem:[%s3288 + $0x1c] sm:$0xf]
      %v3297 = vld [vmem:[%s3288 + $0x20] sm:$0xf]
      %v3298 = vld [vmem:[%s3288 + $0x24] sm:$0xf]
      %v3299 = vld [vmem:[%s3288 + $0x28] sm:$0xf]
      %v3300 = vld [vmem:[%s3288 + $0x2c] sm:$0xf]
      %v3301 = vld [vmem:[%s3288 + $0x30] sm:$0xf]
      %v3302 = vld [vmem:[%s3288 + $0x34] sm:$0xf]
      %v3303 = vld [vmem:[%s3288 + $0x38] sm:$0xf]
      %v3304 = vld [vmem:[%s3288 + $0x3c] sm:$0xf]
      %v3305 = vld [vmem:[%s3288 + $0x40] sm:$0xf]
      %v3306 = vld [vmem:[%s3288 + $0x44] sm:$0xf]
      %v3307 = vld [vmem:[%s3288 + $0x48] sm:$0xf]
      %v3308 = vld [vmem:[%s3288 + $0x4c] sm:$0xf]
      %v3309 = vld [vmem:[%s3288 + $0x50] sm:$0xf]
      %v3310 = vld [vmem:[%s3288 + $0x54] sm:$0xf]
      %v3311 = vld [vmem:[%s3288 + $0x58] sm:$0xf]
      %v3312 = vld [vmem:[%s3288 + $0x5c] sm:$0xf]
      %v3313 = vld [vmem:[%s3288 + $0x60] sm:$0xf]
      %v3314 = vld [vmem:[%s3288 + $0x64] sm:$0xf]
      %v3315 = vld [vmem:[%s3288 + $0x68] sm:$0xf]
      %v3316 = vld [vmem:[%s3288 + $0x6c] sm:$0xf]
      %v3317 = vld [vmem:[%s3288 + $0x70] sm:$0xf]
      %v3318 = vld [vmem:[%s3288 + $0x74] sm:$0xf]
      %v3319 = vld [vmem:[%s3288 + $0x78] sm:$0xf]
      %v3320 = vld [vmem:[%s3288 + $0x7c] sm:$0xf]
      %v3321 = vld [vmem:[%s3288 + $0x80] sm:$0xf]
      %v3322 = vld [vmem:[%s3288 + $0x84] sm:$0xf]
      %v3323 = vld [vmem:[%s3288 + $0x88] sm:$0xf]
      %v3324 = vld [vmem:[%s3288 + $0x8c] sm:$0xf]
      %v3325 = vld [vmem:[%s3288 + $0x90] sm:$0xf]
      %v3326 = vld [vmem:[%s3288 + $0x94] sm:$0xf]
      %v3327 = vld [vmem:[%s3288 + $0x98] sm:$0xf]
      %v3328 = vld [vmem:[%s3288 + $0x9c] sm:$0xf]
      %v3329 = vld [vmem:[%s3288 + $0xa0] sm:$0xf]
      %v3330 = vld [vmem:[%s3288 + $0xa4] sm:$0xf]
      %v3331 = vld [vmem:[%s3288 + $0xa8] sm:$0xf]
      %v3332 = vld [vmem:[%s3288 + $0xac] sm:$0xf]
      %v3333 = vld [vmem:[%s3288 + $0xb0] sm:$0xf]
      %v3334 = vld [vmem:[%s3288 + $0xb4] sm:$0xf]
      %v3335 = vld [vmem:[%s3288 + $0xb8] sm:$0xf]
      %v3336 = vld [vmem:[%s3288 + $0xbc] sm:$0xf]
      %v3385 = vunpack.c.l.b16 %v3289
      %v3386 = vunpack.c.l.b16 %v3290
      %v3387 = vunpack.c.l.b16 %v3291
      %v3388 = vunpack.c.l.b16 %v3292
      %v3389 = vunpack.c.l.b16 %v3293
      %v3390 = vunpack.c.l.b16 %v3294
      %v3391 = vunpack.c.l.b16 %v3295
      %v3392 = vunpack.c.l.b16 %v3296
      %v3393 = vunpack.c.l.b16 %v3297
      %v3394 = vunpack.c.l.b16 %v3298
      %v3395 = vunpack.c.l.b16 %v3299
      %v3396 = vunpack.c.l.b16 %v3300
      %v3397 = vunpack.c.l.b16 %v3301
      %v3398 = vunpack.c.l.b16 %v3302
      %v3399 = vunpack.c.l.b16 %v3303
      %v3400 = vunpack.c.l.b16 %v3304
      %v3401 = vunpack.c.l.b16 %v3305
      %v3402 = vunpack.c.l.b16 %v3306
      %v3403 = vunpack.c.l.b16 %v3307
      %v3404 = vunpack.c.l.b16 %v3308
      %v3405 = vunpack.c.l.b16 %v3309
      %v3406 = vunpack.c.l.b16 %v3310
      %v3407 = vunpack.c.l.b16 %v3311
      %v3408 = vunpack.c.l.b16 %v3312
      %v3409 = vunpack.c.l.b16 %v3313
      %v3410 = vunpack.c.l.b16 %v3314
      %v3411 = vunpack.c.l.b16 %v3315
      %v3412 = vunpack.c.l.b16 %v3316
      %v3413 = vunpack.c.l.b16 %v3317
      %v3414 = vunpack.c.l.b16 %v3318
      %v3415 = vunpack.c.l.b16 %v3319
      %v3416 = vunpack.c.l.b16 %v3320
      %v3417 = vunpack.c.l.b16 %v3321
      %v3418 = vunpack.c.l.b16 %v3322
      %v3419 = vunpack.c.l.b16 %v3323
      %v3420 = vunpack.c.l.b16 %v3324
      %v3421 = vunpack.c.l.b16 %v3325
      %v3422 = vunpack.c.l.b16 %v3326
      %v3423 = vunpack.c.l.b16 %v3327
      %v3424 = vunpack.c.l.b16 %v3328
      %v3425 = vunpack.c.l.b16 %v3329
      %v3426 = vunpack.c.l.b16 %v3330
      %v3427 = vunpack.c.l.b16 %v3331
      %v3428 = vunpack.c.l.b16 %v3332
      %v3429 = vunpack.c.l.b16 %v3333
      %v3430 = vunpack.c.l.b16 %v3334
      %v3431 = vunpack.c.l.b16 %v3335
      %v3432 = vunpack.c.l.b16 %v3336
      %v3433 = vpack.c.b16 %v3386, %v3385
      %v3434 = vpack.c.b16 %v3388, %v3387
      %v3435 = vpack.c.b16 %v3390, %v3389
      %v3436 = vpack.c.b16 %v3392, %v3391
      %v3437 = vpack.c.b16 %v3394, %v3393
      %v3438 = vpack.c.b16 %v3396, %v3395
      %v3439 = vpack.c.b16 %v3398, %v3397
      %v3440 = vpack.c.b16 %v3400, %v3399
      %v3441 = vpack.c.b16 %v3402, %v3401
      %v3442 = vpack.c.b16 %v3404, %v3403
      %v3443 = vpack.c.b16 %v3406, %v3405
      %v3444 = vpack.c.b16 %v3408, %v3407
      %v3445 = vpack.c.b16 %v3410, %v3409
      %v3446 = vpack.c.b16 %v3412, %v3411
      %v3447 = vpack.c.b16 %v3414, %v3413
      %v3448 = vpack.c.b16 %v3416, %v3415
      %v3449 = vpack.c.b16 %v3418, %v3417
      %v3450 = vpack.c.b16 %v3420, %v3419
      %v3451 = vpack.c.b16 %v3422, %v3421
      %v3452 = vpack.c.b16 %v3424, %v3423
      %v3453 = vpack.c.b16 %v3426, %v3425
      %v3454 = vpack.c.b16 %v3428, %v3427
      %v3455 = vpack.c.b16 %v3430, %v3429
      %v3456 = vpack.c.b16 %v3432, %v3431
      %3481 = vmatprep.subr.bf16.mxu0 0
      %3482 = vmatpush1.bf16.msra.mxu0 %v3433
      %3483 = vmatprep.subr.bf16.mxu0 0
      %3484 = vmatpush1.bf16.msra.mxu0 %v3434
      %3485 = vmatprep.subr.bf16.mxu0 0
      %3486 = vmatpush1.bf16.msra.mxu0 %v3435
      %3487 = vmatprep.subr.bf16.mxu0 0
      %3488 = vmatpush1.bf16.msra.mxu0 %v3436
      %3489 = vmatprep.subr.bf16.mxu0 0
      %3490 = vmatpush1.bf16.msra.mxu0 %v3437
      %3491 = vmatprep.subr.bf16.mxu0 0
      %3492 = vmatpush1.bf16.msra.mxu0 %v3438
      %3493 = vmatprep.subr.bf16.mxu0 0
      %3494 = vmatpush1.bf16.msra.mxu0 %v3439
      %3495 = vmatprep.subr.bf16.mxu0 0
      %3496 = vmatpush1.bf16.msra.mxu0 %v3440
      %3497 = vmatprep.subr.bf16.mxu0 0
      %3498 = vmatpush1.bf16.msra.mxu0 %v3441
      %3499 = vmatprep.subr.bf16.mxu0 0
      %3500 = vmatpush1.bf16.msra.mxu0 %v3442
      %3501 = vmatprep.subr.bf16.mxu0 0
      %3502 = vmatpush1.bf16.msra.mxu0 %v3443
      %3503 = vmatprep.subr.bf16.mxu0 0
      %3504 = vmatpush1.bf16.msra.mxu0 %v3444
      %3505 = vmatprep.subr.bf16.mxu0 0
      %3506 = vmatpush1.bf16.msra.mxu0 %v3445
      %3507 = vmatprep.subr.bf16.mxu0 0
      %3508 = vmatpush1.bf16.msra.mxu0 %v3446
      %3509 = vmatprep.subr.bf16.mxu0 0
      %3510 = vmatpush1.bf16.msra.mxu0 %v3447
      %3511 = vmatprep.subr.bf16.mxu0 0
      %3512 = vmatpush1.bf16.msra.mxu0 %v3448
      %3513 = vmatprep.mubr.bf16.mxu0 %v3241
      %3514 = vmatmul.mubr.bf16.gmra.mrb[0].mxu0 %v3240
      %v3515 = vpop.f32.mrb[0].mxu0
      %v3516 = vadd.f32 0.0, %v3515
      %v3517 = vpop.f32.mrb[0].mxu0
      %v3518 = vpop.f32.mrb[0].mxu0
      %v3519 = vadd.f32 0.0, %v3518
      %v3520 = vpop.f32.mrb[0].mxu0
      %3521 = vmatprep.mubr.bf16.mxu0 %v3244
      %3522 = vmatmul.mubr.bf16.gmra.mrb[0].mxu0 %v3243
      %v3523 = vpop.f32.mrb[0].mxu0
      %v3524 = vadd.f32 0.0, %v3523
      %v3525 = vpop.f32.mrb[0].mxu0
      %v3526 = vpop.f32.mrb[0].mxu0
      %v3527 = vadd.f32 0.0, %v3526
      %v3528 = vpop.f32.mrb[0].mxu0
      %3529 = vmatprep.mubr.bf16.mxu0 %v3247
      %3530 = vmatmul.mubr.bf16.gmra.mrb[0].mxu0 %v3246
      %v3531 = vpop.f32.mrb[0].mxu0
      %v3532 = vadd.f32 0.0, %v3531
      %v3533 = vpop.f32.mrb[0].mxu0
      %v3534 = vpop.f32.mrb[0].mxu0
      %v3535 = vadd.f32 0.0, %v3534
      %v3536 = vpop.f32.mrb[0].mxu0
      %3537 = vmatprep.mubr.bf16.mxu0 %v3250
      %3538 = vmatmul.mubr.bf16.gmra.mrb[0].mxu0 %v3249
      %v3539 = vpop.f32.mrb[0].mxu0
      %v3540 = vadd.f32 0.0, %v3539
      %v3541 = vpop.f32.mrb[0].mxu0
      %v3542 = vpop.f32.mrb[0].mxu0
      %v3543 = vadd.f32 0.0, %v3542
      %v3544 = vpop.f32.mrb[0].mxu0
      %3545 = vmatprep.mubr.bf16.mxu0 %v3253
      %3546 = vmatmul.mubr.bf16.gmra.mrb[0].mxu0 %v3252
      %v3547 = vpop.f32.mrb[0].mxu0
      %v3548 = vadd.f32 0.0, %v3547
      %v3549 = vpop.f32.mrb[0].mxu0
      %v3550 = vpop.f32.mrb[0].mxu0
      %v3551 = vadd.f32 0.0, %v3550
      %v3552 = vpop.f32.mrb[0].mxu0
      %3553 = vmatprep.mubr.bf16.mxu0 %v3256
      %3554 = vmatmul.mubr.bf16.gmra.mrb[0].mxu0 %v3255
      %v3555 = vpop.f32.mrb[0].mxu0
      %v3556 = vadd.f32 0.0, %v3555
      %v3557 = vpop.f32.mrb[0].mxu0
      %v3558 = vpop.f32.mrb[0].mxu0
      %v3559 = vadd.f32 0.0, %v3558
      %v3560 = vpop.f32.mrb[0].mxu0
      %3561 = vmatprep.mubr.bf16.mxu0 %v3259
      %3562 = vmatmul.mubr.bf16.gmra.mrb[0].mxu0 %v3258
      %v3563 = vpop.f32.mrb[0].mxu0
      %v3564 = vadd.f32 0.0, %v3563
      %v3565 = vpop.f32.mrb[0].mxu0
      %v3566 = vpop.f32.mrb[0].mxu0
      %v3567 = vadd.f32 0.0, %v3566
      %v3568 = vpop.f32.mrb[0].mxu0
      %3569 = vmatprep.mubr.bf16.mxu0 %v3262
      %3570 = vmatmul.mubr.bf16.gmra.mrb[0].mxu0 %v3261
      %v3571 = vpop.f32.mrb[0].mxu0
      %v3572 = vadd.f32 0.0, %v3571
      %v3573 = vpop.f32.mrb[0].mxu0
      %v3574 = vpop.f32.mrb[0].mxu0
      %v3575 = vadd.f32 0.0, %v3574
      %v3576 = vpop.f32.mrb[0].mxu0
      %3577 = vmatprep.mubr.bf16.mxu0 %v3265
      %3578 = vmatmul.mubr.bf16.gmra.mrb[0].mxu0 %v3264
      %v3579 = vpop.f32.mrb[0].mxu0
      %v3580 = vadd.f32 0.0, %v3579
      %v3581 = vpop.f32.mrb[0].mxu0
      %v3582 = vpop.f32.mrb[0].mxu0
      %v3583 = vadd.f32 0.0, %v3582
      %v3584 = vpop.f32.mrb[0].mxu0
      %3585 = vmatprep.mubr.bf16.mxu0 %v3268
      %3586 = vmatmul.mubr.bf16.gmra.mrb[0].mxu0 %v3267
      %v3587 = vpop.f32.mrb[0].mxu0
      %v3588 = vadd.f32 0.0, %v3587
      %v3589 = vpop.f32.mrb[0].mxu0
      %v3590 = vpop.f32.mrb[0].mxu0
      %v3591 = vadd.f32 0.0, %v3590
      %v3592 = vpop.f32.mrb[0].mxu0
      %3593 = vmatprep.mubr.bf16.mxu0 %v3271
      %3594 = vmatmul.mubr.bf16.gmra.mrb[0].mxu0 %v3270
      %v3595 = vpop.f32.mrb[0].mxu0
      %v3596 = vadd.f32 0.0, %v3595
      %v3597 = vpop.f32.mrb[0].mxu0
      %v3598 = vpop.f32.mrb[0].mxu0
      %v3599 = vadd.f32 0.0, %v3598
      %v3600 = vpop.f32.mrb[0].mxu0
      %3601 = vmatprep.mubr.bf16.mxu0 %v3274
      %3602 = vmatmul.mubr.bf16.gmra.mrb[0].mxu0 %v3273
      %v3603 = vpop.f32.mrb[0].mxu0
      %v3604 = vadd.f32 0.0, %v3603
      %v3605 = vpop.f32.mrb[0].mxu0
      %v3606 = vpop.f32.mrb[0].mxu0
      %v3607 = vadd.f32 0.0, %v3606
      %v3608 = vpop.f32.mrb[0].mxu0
      %3609 = vmatprep.mubr.bf16.mxu0 %v3277
      %3610 = vmatmul.mubr.bf16.gmra.mrb[0].mxu0 %v3276
      %v3611 = vpop.f32.mrb[0].mxu0
      %v3612 = vadd.f32 0.0, %v3611
      %v3613 = vpop.f32.mrb[0].mxu0
      %v3614 = vpop.f32.mrb[0].mxu0
      %v3615 = vadd.f32 0.0, %v3614
      %v3616 = vpop.f32.mrb[0].mxu0
      %3617 = vmatprep.mubr.bf16.mxu0 %v3280
      %3618 = vmatmul.mubr.bf16.gmra.mrb[0].mxu0 %v3279
      %v3619 = vpop.f32.mrb[0].mxu0
      %v3620 = vadd.f32 0.0, %v3619
      %v3621 = vpop.f32.mrb[0].mxu0
      %v3622 = vpop.f32.mrb[0].mxu0
      %v3623 = vadd.f32 0.0, %v3622
      %v3624 = vpop.f32.mrb[0].mxu0
      %3625 = vmatprep.mubr.bf16.mxu0 %v3283
      %3626 = vmatmul.mubr.bf16.gmra.mrb[0].mxu0 %v3282
      %v3627 = vpop.f32.mrb[0].mxu0
      %v3628 = vadd.f32 0.0, %v3627
      %v3629 = vpop.f32.mrb[0].mxu0
      %v3630 = vpop.f32.mrb[0].mxu0
      %v3631 = vadd.f32 0.0, %v3630
      %v3632 = vpop.f32.mrb[0].mxu0
      %3633 = vmatprep.mubr.bf16.mxu0 %v3286
      %3634 = vmatmul.mubr.bf16.gmra.mrb[0].mxu0 %v3285
      %v3635 = vpop.f32.mrb[0].mxu0
      %v3636 = vadd.f32 0.0, %v3635
      %v3637 = vpop.f32.mrb[0].mxu0
      %v3638 = vpop.f32.mrb[0].mxu0
      %v3639 = vadd.f32 0.0, %v3638
      %v3640 = vpop.f32.mrb[0].mxu0
      %3641 = vdwg.mxu0
      %3642 = vmatprep.subr.bf16.mxu0 0
      %3643 = vmatpush1.bf16.msra.mxu0 %v3449
      %3644 = vmatprep.subr.bf16.mxu0 0
      %3645 = vmatpush1.bf16.msra.mxu0 %v3450
      %3646 = vmatprep.subr.bf16.mxu0 0
      %3647 = vmatpush1.bf16.msra.mxu0 %v3451
      %3648 = vmatprep.subr.bf16.mxu0 0
      %3649 = vmatpush1.bf16.msra.mxu0 %v3452
      %3650 = vmatprep.subr.bf16.mxu0 0
      %3651 = vmatpush1.bf16.msra.mxu0 %v3453
      %3652 = vmatprep.subr.bf16.mxu0 0
      %3653 = vmatpush1.bf16.msra.mxu0 %v3454
      %3654 = vmatprep.subr.bf16.mxu0 0
      %3655 = vmatpush1.bf16.msra.mxu0 %v3455
      %3656 = vmatprep.subr.bf16.mxu0 0
      %3657 = vmatpush1.bf16.msra.mxu0 %v3456
      %3658 = vmatprep.subr.bf16.mxu0 0
      %3659 = vmatpush1.bf16.msra.mxu0 0
      %3660 = vmatprep.subr.bf16.mxu0 0
      %3661 = vmatpush1.bf16.msra.mxu0 0
      %3662 = vmatprep.subr.bf16.mxu0 0
      %3663 = vmatpush1.bf16.msra.mxu0 0
      %3664 = vmatprep.subr.bf16.mxu0 0
      %3665 = vmatpush1.bf16.msra.mxu0 0
      %3666 = vmatprep.subr.bf16.mxu0 0
      %3667 = vmatpush1.bf16.msra.mxu0 0
      %3668 = vmatprep.subr.bf16.mxu0 0
      %3669 = vmatpush1.bf16.msra.mxu0 0
      %3670 = vmatprep.subr.bf16.mxu0 0
      %3671 = vmatpush1.bf16.msra.mxu0 0
      %3672 = vmatprep.subr.bf16.mxu0 0
      %3673 = vmatpush1.bf16.msra.mxu0 0
      %3674 = vmatprep.mubr.bf16.mxu0 0
      %3675 = vmatmul.mubr.bf16.gmra.mrb[0].mxu0 %v3242
      %v3676 = vpop.f32.mrb[0].mxu0
      %v3677 = vadd.f32 %v3516, %v3676
      %v3678 = vpop.f32.mrb[0].mxu0
      %v3679 = vpop.f32.mrb[0].mxu0
      %v3680 = vadd.f32 %v3519, %v3679
      %v3681 = vpop.f32.mrb[0].mxu0
      %3682 = vmatprep.mubr.bf16.mxu0 0
      %3683 = vmatmul.mubr.bf16.gmra.mrb[0].mxu0 %v3245
      %v3684 = vpop.f32.mrb[0].mxu0
      %v3685 = vadd.f32 %v3524, %v3684
      %v3686 = vpop.f32.mrb[0].mxu0
      %v3687 = vpop.f32.mrb[0].mxu0
      %v3688 = vadd.f32 %v3527, %v3687
      %v3689 = vpop.f32.mrb[0].mxu0
      %3690 = vmatprep.mubr.bf16.mxu0 0
      %3691 = vmatmul.mubr.bf16.gmra.mrb[0].mxu0 %v3248
      %v3692 = vpop.f32.mrb[0].mxu0
      %v3693 = vadd.f32 %v3532, %v3692
      %v3694 = vpop.f32.mrb[0].mxu0
      %v3695 = vpop.f32.mrb[0].mxu0
      %v3696 = vadd.f32 %v3535, %v3695
      %v3697 = vpop.f32.mrb[0].mxu0
      %3698 = vmatprep.mubr.bf16.mxu0 0
      %3699 = vmatmul.mubr.bf16.gmra.mrb[0].mxu0 %v3251
      %v3700 = vpop.f32.mrb[0].mxu0
      %v3701 = vadd.f32 %v3540, %v3700
      %v3702 = vpop.f32.mrb[0].mxu0
      %v3703 = vpop.f32.mrb[0].mxu0
      %v3704 = vadd.f32 %v3543, %v3703
      %v3705 = vpop.f32.mrb[0].mxu0
      %3706 = vmatprep.mubr.bf16.mxu0 0
      %3707 = vmatmul.mubr.bf16.gmra.mrb[0].mxu0 %v3254
      %v3708 = vpop.f32.mrb[0].mxu0
      %v3709 = vadd.f32 %v3548, %v3708
      %v3710 = vpop.f32.mrb[0].mxu0
      %v3711 = vpop.f32.mrb[0].mxu0
      %v3712 = vadd.f32 %v3551, %v3711
      %v3713 = vpop.f32.mrb[0].mxu0
      %3714 = vmatprep.mubr.bf16.mxu0 0
      %3715 = vmatmul.mubr.bf16.gmra.mrb[0].mxu0 %v3257
      %v3716 = vpop.f32.mrb[0].mxu0
      %v3717 = vadd.f32 %v3556, %v3716
      %v3718 = vpop.f32.mrb[0].mxu0
      %v3719 = vpop.f32.mrb[0].mxu0
      %v3720 = vadd.f32 %v3559, %v3719
      %v3721 = vpop.f32.mrb[0].mxu0
      %3722 = vmatprep.mubr.bf16.mxu0 0
      %3723 = vmatmul.mubr.bf16.gmra.mrb[0].mxu0 %v3260
      %v3724 = vpop.f32.mrb[0].mxu0
      %v3725 = vadd.f32 %v3564, %v3724
      %v3726 = vpop.f32.mrb[0].mxu0
      %v3727 = vpop.f32.mrb[0].mxu0
      %v3728 = vadd.f32 %v3567, %v3727
      %v3729 = vpop.f32.mrb[0].mxu0
      %3730 = vmatprep.mubr.bf16.mxu0 0
      %3731 = vmatmul.mubr.bf16.gmra.mrb[0].mxu0 %v3263
      %v3732 = vpop.f32.mrb[0].mxu0
      %v3733 = vadd.f32 %v3572, %v3732
      %v3734 = vpop.f32.mrb[0].mxu0
      %v3735 = vpop.f32.mrb[0].mxu0
      %v3736 = vadd.f32 %v3575, %v3735
      %v3737 = vpop.f32.mrb[0].mxu0
      %3738 = vmatprep.mubr.bf16.mxu0 0
      %3739 = vmatmul.mubr.bf16.gmra.mrb[0].mxu0 %v3266
      %v3740 = vpop.f32.mrb[0].mxu0
      %v3741 = vadd.f32 %v3580, %v3740
      %v3742 = vpop.f32.mrb[0].mxu0
      %v3743 = vpop.f32.mrb[0].mxu0
      %v3744 = vadd.f32 %v3583, %v3743
      %v3745 = vpop.f32.mrb[0].mxu0
      %3746 = vmatprep.mubr.bf16.mxu0 0
      %3747 = vmatmul.mubr.bf16.gmra.mrb[0].mxu0 %v3269
      %v3748 = vpop.f32.mrb[0].mxu0
      %v3749 = vadd.f32 %v3588, %v3748
      %v3750 = vpop.f32.mrb[0].mxu0
      %v3751 = vpop.f32.mrb[0].mxu0
      %v3752 = vadd.f32 %v3591, %v3751
      %v3753 = vpop.f32.mrb[0].mxu0
      %3754 = vmatprep.mubr.bf16.mxu0 0
      %3755 = vmatmul.mubr.bf16.gmra.mrb[0].mxu0 %v3272
      %v3756 = vpop.f32.mrb[0].mxu0
      %v3757 = vadd.f32 %v3596, %v3756
      %v3758 = vpop.f32.mrb[0].mxu0
      %v3759 = vpop.f32.mrb[0].mxu0
      %v3760 = vadd.f32 %v3599, %v3759
      %v3761 = vpop.f32.mrb[0].mxu0
      %3762 = vmatprep.mubr.bf16.mxu0 0
      %3763 = vmatmul.mubr.bf16.gmra.mrb[0].mxu0 %v3275
      %v3764 = vpop.f32.mrb[0].mxu0
      %v3765 = vadd.f32 %v3604, %v3764
      %v3766 = vpop.f32.mrb[0].mxu0
      %v3767 = vpop.f32.mrb[0].mxu0
      %v3768 = vadd.f32 %v3607, %v3767
      %v3769 = vpop.f32.mrb[0].mxu0
      %3770 = vmatprep.mubr.bf16.mxu0 0
      %3771 = vmatmul.mubr.bf16.gmra.mrb[0].mxu0 %v3278
      %v3772 = vpop.f32.mrb[0].mxu0
      %v3773 = vadd.f32 %v3612, %v3772
      %v3774 = vpop.f32.mrb[0].mxu0
      %v3775 = vpop.f32.mrb[0].mxu0
      %v3776 = vadd.f32 %v3615, %v3775
      %v3777 = vpop.f32.mrb[0].mxu0
      %3778 = vmatprep.mubr.bf16.mxu0 0
      %3779 = vmatmul.mubr.bf16.gmra.mrb[0].mxu0 %v3281
      %v3780 = vpop.f32.mrb[0].mxu0
      %v3781 = vadd.f32 %v3620, %v3780
      %v3782 = vpop.f32.mrb[0].mxu0
      %v3783 = vpop.f32.mrb[0].mxu0
      %v3784 = vadd.f32 %v3623, %v3783
      %v3785 = vpop.f32.mrb[0].mxu0
      %3786 = vmatprep.mubr.bf16.mxu0 0
      %3787 = vmatmul.mubr.bf16.gmra.mrb[0].mxu0 %v3284
      %v3788 = vpop.f32.mrb[0].mxu0
      %v3789 = vadd.f32 %v3628, %v3788
      %v3790 = vpop.f32.mrb[0].mxu0
      %v3791 = vpop.f32.mrb[0].mxu0
      %v3792 = vadd.f32 %v3631, %v3791
      %v3793 = vpop.f32.mrb[0].mxu0
      %3794 = vmatprep.mubr.bf16.mxu0 0
      %3795 = vmatmul.mubr.bf16.gmra.mrb[0].mxu0 %v3287
      %v3796 = vpop.f32.mrb[0].mxu0
      %v3797 = vadd.f32 %v3636, %v3796
      %v3798 = vpop.f32.mrb[0].mxu0
      %v3799 = vpop.f32.mrb[0].mxu0
      %v3800 = vadd.f32 %v3639, %v3799
      %v3801 = vpop.f32.mrb[0].mxu0
      %3802 = vdwg.mxu0
      %v3803 = vadd.f32 %v3113, %v3677
      %v3804 = vadd.f32 %v3116, %v3680
      %v3805 = vadd.f32 %v3121, %v3685
      %v3806 = vadd.f32 %v3124, %v3688
      %v3807 = vadd.f32 %v3129, %v3693
      %v3808 = vadd.f32 %v3132, %v3696
      %v3809 = vadd.f32 %v3137, %v3701
      %v3810 = vadd.f32 %v3140, %v3704
      %v3811 = vadd.f32 %v3145, %v3709
      %v3812 = vadd.f32 %v3148, %v3712
      %v3813 = vadd.f32 %v3153, %v3717
      %v3814 = vadd.f32 %v3156, %v3720
      %v3815 = vadd.f32 %v3161, %v3725
      %v3816 = vadd.f32 %v3164, %v3728
      %v3817 = vadd.f32 %v3169, %v3733
      %v3818 = vadd.f32 %v3172, %v3736
      %v3819 = vadd.f32 %v3177, %v3741
      %v3820 = vadd.f32 %v3180, %v3744
      %v3821 = vadd.f32 %v3185, %v3749
      %v3822 = vadd.f32 %v3188, %v3752
      %v3823 = vadd.f32 %v3193, %v3757
      %v3824 = vadd.f32 %v3196, %v3760
      %v3825 = vadd.f32 %v3201, %v3765
      %v3826 = vadd.f32 %v3204, %v3768
      %v3827 = vadd.f32 %v3209, %v3773
      %v3828 = vadd.f32 %v3212, %v3776
      %v3829 = vadd.f32 %v3217, %v3781
      %v3830 = vadd.f32 %v3220, %v3784
      %v3831 = vadd.f32 %v3225, %v3789
      %v3832 = vadd.f32 %v3228, %v3792
      %v3833 = vadd.f32 %v3233, %v3797
      %v3834 = vadd.f32 %v3236, %v3800
      %v3835 = vld [vmem:[%s3] sm:$0x1]
      %v3837 = vlaneseq
      %v3838 = vshrl.u32 %v3837, 7
      %v3839 = vsub.s32 0, %v3838
      %v3840 = vrot.slane %v3835, %v3839
      %v3842 = vmul.f32 %v3803, %v3840
      %v3843 = vmul.f32 %v3804, %v3840
      %v3844 = vmul.f32 %v3805, %v3840
      %v3845 = vmul.f32 %v3806, %v3840
      %v3846 = vmul.f32 %v3807, %v3840
      %v3847 = vmul.f32 %v3808, %v3840
      %v3848 = vmul.f32 %v3809, %v3840
      %v3849 = vmul.f32 %v3810, %v3840
      %v3850 = vmul.f32 %v3811, %v3840
      %v3851 = vmul.f32 %v3812, %v3840
      %v3852 = vmul.f32 %v3813, %v3840
      %v3853 = vmul.f32 %v3814, %v3840
      %v3854 = vmul.f32 %v3815, %v3840
      %v3855 = vmul.f32 %v3816, %v3840
      %v3856 = vmul.f32 %v3817, %v3840
      %v3857 = vmul.f32 %v3818, %v3840
      %v3858 = vmul.f32 %v3819, %v3840
      %v3859 = vmul.f32 %v3820, %v3840
      %v3860 = vmul.f32 %v3821, %v3840
      %v3861 = vmul.f32 %v3822, %v3840
      %v3862 = vmul.f32 %v3823, %v3840
      %v3863 = vmul.f32 %v3824, %v3840
      %v3864 = vmul.f32 %v3825, %v3840
      %v3865 = vmul.f32 %v3826, %v3840
      %v3866 = vmul.f32 %v3827, %v3840
      %v3867 = vmul.f32 %v3828, %v3840
      %v3868 = vmul.f32 %v3829, %v3840
      %v3869 = vmul.f32 %v3830, %v3840
      %v3870 = vmul.f32 %v3831, %v3840
      %v3871 = vmul.f32 %v3832, %v3840
      %v3872 = vmul.f32 %v3833, %v3840
      %v3873 = vmul.f32 %v3834, %v3840
      %v3874 = vld [vmem:[%s4] sm:$0x1]
      %v3876 = vlaneseq
      %v3877 = vshrl.u32 %v3876, 7
      %v3878 = vsub.s32 0, %v3877
      %v3879 = vrot.slane %v3874, %v3878
      %v3881 = vadd.f32 %v3842, %v3879
      %v3882 = vadd.f32 %v3843, %v3879
      %v3883 = vadd.f32 %v3844, %v3879
      %v3884 = vadd.f32 %v3845, %v3879
      %v3885 = vadd.f32 %v3846, %v3879
      %v3886 = vadd.f32 %v3847, %v3879
      %v3887 = vadd.f32 %v3848, %v3879
      %v3888 = vadd.f32 %v3849, %v3879
      %v3889 = vadd.f32 %v3850, %v3879
      %v3890 = vadd.f32 %v3851, %v3879
      %v3891 = vadd.f32 %v3852, %v3879
      %v3892 = vadd.f32 %v3853, %v3879
      %v3893 = vadd.f32 %v3854, %v3879
      %v3894 = vadd.f32 %v3855, %v3879
      %v3895 = vadd.f32 %v3856, %v3879
      %v3896 = vadd.f32 %v3857, %v3879
      %v3897 = vadd.f32 %v3858, %v3879
      %v3898 = vadd.f32 %v3859, %v3879
      %v3899 = vadd.f32 %v3860, %v3879
      %v3900 = vadd.f32 %v3861, %v3879
      %v3901 = vadd.f32 %v3862, %v3879
      %v3902 = vadd.f32 %v3863, %v3879
      %v3903 = vadd.f32 %v3864, %v3879
      %v3904 = vadd.f32 %v3865, %v3879
      %v3905 = vadd.f32 %v3866, %v3879
      %v3906 = vadd.f32 %v3867, %v3879
      %v3907 = vadd.f32 %v3868, %v3879
      %v3908 = vadd.f32 %v3869, %v3879
      %v3909 = vadd.f32 %v3870, %v3879
      %v3910 = vadd.f32 %v3871, %v3879
      %v3911 = vadd.f32 %v3872, %v3879
      %v3912 = vadd.f32 %v3873, %v3879
      %v3913 = vmax.f32 %v3881, 0.0
      %v3914 = vmax.f32 %v3882, 0.0
      %v3915 = vmax.f32 %v3883, 0.0
      %v3916 = vmax.f32 %v3884, 0.0
      %v3917 = vmax.f32 %v3885, 0.0
      %v3918 = vmax.f32 %v3886, 0.0
      %v3919 = vmax.f32 %v3887, 0.0
      %v3920 = vmax.f32 %v3888, 0.0
      %v3921 = vmax.f32 %v3889, 0.0
      %v3922 = vmax.f32 %v3890, 0.0
      %v3923 = vmax.f32 %v3891, 0.0
      %v3924 = vmax.f32 %v3892, 0.0
      %v3925 = vmax.f32 %v3893, 0.0
      %v3926 = vmax.f32 %v3894, 0.0
      %v3927 = vmax.f32 %v3895, 0.0
      %v3928 = vmax.f32 %v3896, 0.0
      %v3929 = vmax.f32 %v3897, 0.0
      %v3930 = vmax.f32 %v3898, 0.0
      %v3931 = vmax.f32 %v3899, 0.0
      %v3932 = vmax.f32 %v3900, 0.0
      %v3933 = vmax.f32 %v3901, 0.0
      %v3934 = vmax.f32 %v3902, 0.0
      %v3935 = vmax.f32 %v3903, 0.0
      %v3936 = vmax.f32 %v3904, 0.0
      %v3937 = vmax.f32 %v3905, 0.0
      %v3938 = vmax.f32 %v3906, 0.0
      %v3939 = vmax.f32 %v3907, 0.0
      %v3940 = vmax.f32 %v3908, 0.0
      %v3941 = vmax.f32 %v3909, 0.0
      %v3942 = vmax.f32 %v3910, 0.0
      %v3943 = vmax.f32 %v3911, 0.0
      %v3944 = vmax.f32 %v3912, 0.0
      %v3945 = vpack.c.bf16 %v3914, %v3913
      %v3946 = vpack.c.bf16 %v3916, %v3915
      %v3947 = vpack.c.bf16 %v3918, %v3917
      %v3948 = vpack.c.bf16 %v3920, %v3919
      %v3949 = vpack.c.bf16 %v3922, %v3921
      %v3950 = vpack.c.bf16 %v3924, %v3923
      %v3951 = vpack.c.bf16 %v3926, %v3925
      %v3952 = vpack.c.bf16 %v3928, %v3927
      %v3953 = vpack.c.bf16 %v3930, %v3929
      %v3954 = vpack.c.bf16 %v3932, %v3931
      %v3955 = vpack.c.bf16 %v3934, %v3933
      %v3956 = vpack.c.bf16 %v3936, %v3935
      %v3957 = vpack.c.bf16 %v3938, %v3937
      %v3958 = vpack.c.bf16 %v3940, %v3939
      %v3959 = vpack.c.bf16 %v3942, %v3941
      %v3960 = vpack.c.bf16 %v3944, %v3943
      %3961 = vst [vmem:[#allocation4] sm:$0xff] 0
      %3962 = vst [vmem:[#allocation4 + $0x8] sm:$0xff] 0
      %3963 = vst [vmem:[#allocation4 + $0x10] sm:$0xff] 0
      %s3964 = scalar_lea.vmem [#allocation4], 408
      %3965 = vst [vmem:[%s3964] sm:$0xff] 0
      %3966 = vst [vmem:[%s3964 + $0x8] sm:$0xff] 0
      %3967 = vst [vmem:[%s3964 + $0x10] sm:$0xff] 0
      %s3968 = scalar_lea.vmem [#allocation4], 24
      %3969 = vst [vmem:[%s3968 + $0x8] sm:$0xff] %v3945
      %3970 = vst [vmem:[%s3968 + $0x20] sm:$0xff] %v3946
      %3971 = vst [vmem:[%s3968 + $0x38] sm:$0xff] %v3947
      %3972 = vst [vmem:[%s3968 + $0x50] sm:$0xff] %v3948
      %3973 = vst [vmem:[%s3968 + $0x68] sm:$0xff] %v3949
      %3974 = vst [vmem:[%s3968 + $0x80] sm:$0xff] %v3950
      %3975 = vst [vmem:[%s3968 + $0x98] sm:$0xff] %v3951
      %3976 = vst [vmem:[%s3968 + $0xb0] sm:$0xff] %v3952
      %3977 = vst [vmem:[%s3968 + $0xc8] sm:$0xff] %v3953
      %3978 = vst [vmem:[%s3968 + $0xe0] sm:$0xff] %v3954
      %3979 = vst [vmem:[%s3968 + $0xf8] sm:$0xff] %v3955
      %3980 = vst [vmem:[%s3968 + $0x110] sm:$0xff] %v3956
      %3981 = vst [vmem:[%s3968 + $0x128] sm:$0xff] %v3957
      %3982 = vst [vmem:[%s3968 + $0x140] sm:$0xff] %v3958
      %3983 = vst [vmem:[%s3968 + $0x158] sm:$0xff] %v3959
      %3984 = vst [vmem:[%s3968 + $0x170] sm:$0xff] %v3960
      %v3986 = vshrl.u32 %v3945, 16
      %v3988 = vrot.slane %v3986, 7
      %v3989 = vshll.u32 %v3945, 16
      %v3991 = vor.u32 %v3988, %v3989
      %v3993 = vshrl.u32 %v3946, 16
      %v3995 = vrot.slane %v3993, 7
      %v3996 = vshll.u32 %v3946, 16
      %v3998 = vor.u32 %v3995, %v3996
      %v4000 = vshrl.u32 %v3947, 16
      %v4002 = vrot.slane %v4000, 7
      %v4003 = vshll.u32 %v3947, 16
      %v4005 = vor.u32 %v4002, %v4003
      %v4007 = vshrl.u32 %v3948, 16
      %v4009 = vrot.slane %v4007, 7
      %v4010 = vshll.u32 %v3948, 16
      %v4012 = vor.u32 %v4009, %v4010
      %v4014 = vshrl.u32 %v3949, 16
      %v4016 = vrot.slane %v4014, 7
      %v4017 = vshll.u32 %v3949, 16
      %v4019 = vor.u32 %v4016, %v4017
      %v4021 = vshrl.u32 %v3950, 16
      %v4023 = vrot.slane %v4021, 7
      %v4024 = vshll.u32 %v3950, 16
      %v4026 = vor.u32 %v4023, %v4024
      %v4028 = vshrl.u32 %v3951, 16
      %v4030 = vrot.slane %v4028, 7
      %v4031 = vshll.u32 %v3951, 16
      %v4033 = vor.u32 %v4030, %v4031
      %v4035 = vshrl.u32 %v3952, 16
      %v4037 = vrot.slane %v4035, 7
      %v4038 = vshll.u32 %v3952, 16
      %v4040 = vor.u32 %v4037, %v4038
      %v4042 = vshrl.u32 %v3953, 16
      %v4044 = vrot.slane %v4042, 7
      %v4045 = vshll.u32 %v3953, 16
      %v4047 = vor.u32 %v4044, %v4045
      %v4049 = vshrl.u32 %v3954, 16
      %v4051 = vrot.slane %v4049, 7
      %v4052 = vshll.u32 %v3954, 16
      %v4054 = vor.u32 %v4051, %v4052
      %v4056 = vshrl.u32 %v3955, 16
      %v4058 = vrot.slane %v4056, 7
      %v4059 = vshll.u32 %v3955, 16
      %v4061 = vor.u32 %v4058, %v4059
      %v4063 = vshrl.u32 %v3956, 16
      %v4065 = vrot.slane %v4063, 7
      %v4066 = vshll.u32 %v3956, 16
      %v4068 = vor.u32 %v4065, %v4066
      %v4070 = vshrl.u32 %v3957, 16
      %v4072 = vrot.slane %v4070, 7
      %v4073 = vshll.u32 %v3957, 16
      %v4075 = vor.u32 %v4072, %v4073
      %v4077 = vshrl.u32 %v3958, 16
      %v4079 = vrot.slane %v4077, 7
      %v4080 = vshll.u32 %v3958, 16
      %v4082 = vor.u32 %v4079, %v4080
      %v4084 = vshrl.u32 %v3959, 16
      %v4086 = vrot.slane %v4084, 7
      %v4087 = vshll.u32 %v3959, 16
      %v4089 = vor.u32 %v4086, %v4087
      %v4091 = vshrl.u32 %v3960, 16
      %v4093 = vrot.slane %v4091, 7
      %v4094 = vshll.u32 %v3960, 16
      %v4096 = vor.u32 %v4093, %v4094
      %vm4113 = vcmask 1047552
      %vm4114 = vmand %vm4113, %vm386
      %v4115 = vld [vmem:[%s3968] sm:$0xff]
      %v4116 = vsel %vm4114, %v3991, %v4115
      %4117 = vst [vmem:[%s3968] sm:$0xff] %v4116
      %v4118 = vld [vmem:[%s3968 + $0x18] sm:$0xff]
      %v4119 = vsel %vm4114, %v3998, %v4118
      %4120 = vst [vmem:[%s3968 + $0x18] sm:$0xff] %v4119
      %v4121 = vld [vmem:[%s3968 + $0x30] sm:$0xff]
      %v4122 = vsel %vm4114, %v4005, %v4121
      %4123 = vst [vmem:[%s3968 + $0x30] sm:$0xff] %v4122
      %v4124 = vld [vmem:[%s3968 + $0x48] sm:$0xff]
      %v4125 = vsel %vm4114, %v4012, %v4124
      %4126 = vst [vmem:[%s3968 + $0x48] sm:$0xff] %v4125
      %v4127 = vld [vmem:[%s3968 + $0x60] sm:$0xff]
      %v4128 = vsel %vm4114, %v4019, %v4127
      %4129 = vst [vmem:[%s3968 + $0x60] sm:$0xff] %v4128
      %v4130 = vld [vmem:[%s3968 + $0x78] sm:$0xff]
      %v4131 = vsel %vm4114, %v4026, %v4130
      %4132 = vst [vmem:[%s3968 + $0x78] sm:$0xff] %v4131
      %v4133 = vld [vmem:[%s3968 + $0x90] sm:$0xff]
      %v4134 = vsel %vm4114, %v4033, %v4133
      %4135 = vst [vmem:[%s3968 + $0x90] sm:$0xff] %v4134
      %v4136 = vld [vmem:[%s3968 + $0xa8] sm:$0xff]
      %v4137 = vsel %vm4114, %v4040, %v4136
      %4138 = vst [vmem:[%s3968 + $0xa8] sm:$0xff] %v4137
      %v4139 = vld [vmem:[%s3968 + $0xc0] sm:$0xff]
      %v4140 = vsel %vm4114, %v4047, %v4139
      %4141 = vst [vmem:[%s3968 + $0xc0] sm:$0xff] %v4140
      %v4142 = vld [vmem:[%s3968 + $0xd8] sm:$0xff]
      %v4143 = vsel %vm4114, %v4054, %v4142
      %4144 = vst [vmem:[%s3968 + $0xd8] sm:$0xff] %v4143
      %v4145 = vld [vmem:[%s3968 + $0xf0] sm:$0xff]
      %v4146 = vsel %vm4114, %v4061, %v4145
      %4147 = vst [vmem:[%s3968 + $0xf0] sm:$0xff] %v4146
      %v4148 = vld [vmem:[%s3968 + $0x108] sm:$0xff]
      %v4149 = vsel %vm4114, %v4068, %v4148
      %4150 = vst [vmem:[%s3968 + $0x108] sm:$0xff] %v4149
      %v4151 = vld [vmem:[%s3968 + $0x120] sm:$0xff]
      %v4152 = vsel %vm4114, %v4075, %v4151
      %4153 = vst [vmem:[%s3968 + $0x120] sm:$0xff] %v4152
      %v4154 = vld [vmem:[%s3968 + $0x138] sm:$0xff]
      %v4155 = vsel %vm4114, %v4082, %v4154
      %4156 = vst [vmem:[%s3968 + $0x138] sm:$0xff] %v4155
      %v4157 = vld [vmem:[%s3968 + $0x150] sm:$0xff]
      %v4158 = vsel %vm4114, %v4089, %v4157
      %4159 = vst [vmem:[%s3968 + $0x150] sm:$0xff] %v4158
      %v4160 = vld [vmem:[%s3968 + $0x168] sm:$0xff]
      %v4161 = vsel %vm4114, %v4096, %v4160
      %4162 = vst [vmem:[%s3968 + $0x168] sm:$0xff] %v4161
      %v4163 = vld [vmem:[%s3968] sm:$0x1]
      %v4164 = vsel %vm337, 0, %v4163
      %4165 = vst [vmem:[%s3968] sm:$0x1] %v4164
      %v4166 = vld [vmem:[%s3968 + $0x18] sm:$0x1]
      %v4167 = vsel %vm337, 0, %v4166
      %4168 = vst [vmem:[%s3968 + $0x18] sm:$0x1] %v4167
      %v4169 = vld [vmem:[%s3968 + $0x30] sm:$0x1]
      %v4170 = vsel %vm337, 0, %v4169
      %4171 = vst [vmem:[%s3968 + $0x30] sm:$0x1] %v4170
      %v4172 = vld [vmem:[%s3968 + $0x48] sm:$0x1]
      %v4173 = vsel %vm337, 0, %v4172
      %4174 = vst [vmem:[%s3968 + $0x48] sm:$0x1] %v4173
      %v4175 = vld [vmem:[%s3968 + $0x60] sm:$0x1]
      %v4176 = vsel %vm337, 0, %v4175
      %4177 = vst [vmem:[%s3968 + $0x60] sm:$0x1] %v4176
      %v4178 = vld [vmem:[%s3968 + $0x78] sm:$0x1]
      %v4179 = vsel %vm337, 0, %v4178
      %4180 = vst [vmem:[%s3968 + $0x78] sm:$0x1] %v4179
      %v4181 = vld [vmem:[%s3968 + $0x90] sm:$0x1]
      %v4182 = vsel %vm337, 0, %v4181
      %4183 = vst [vmem:[%s3968 + $0x90] sm:$0x1] %v4182
      %v4184 = vld [vmem:[%s3968 + $0xa8] sm:$0x1]
      %v4185 = vsel %vm337, 0, %v4184
      %4186 = vst [vmem:[%s3968 + $0xa8] sm:$0x1] %v4185
      %v4187 = vld [vmem:[%s3968 + $0xc0] sm:$0x1]
      %v4188 = vsel %vm337, 0, %v4187
      %4189 = vst [vmem:[%s3968 + $0xc0] sm:$0x1] %v4188
      %v4190 = vld [vmem:[%s3968 + $0xd8] sm:$0x1]
      %v4191 = vsel %vm337, 0, %v4190
      %4192 = vst [vmem:[%s3968 + $0xd8] sm:$0x1] %v4191
      %v4193 = vld [vmem:[%s3968 + $0xf0] sm:$0x1]
      %v4194 = vsel %vm337, 0, %v4193
      %4195 = vst [vmem:[%s3968 + $0xf0] sm:$0x1] %v4194
      %v4196 = vld [vmem:[%s3968 + $0x108] sm:$0x1]
      %v4197 = vsel %vm337, 0, %v4196
      %4198 = vst [vmem:[%s3968 + $0x108] sm:$0x1] %v4197
      %v4199 = vld [vmem:[%s3968 + $0x120] sm:$0x1]
      %v4200 = vsel %vm337, 0, %v4199
      %4201 = vst [vmem:[%s3968 + $0x120] sm:$0x1] %v4200
      %v4202 = vld [vmem:[%s3968 + $0x138] sm:$0x1]
      %v4203 = vsel %vm337, 0, %v4202
      %4204 = vst [vmem:[%s3968 + $0x138] sm:$0x1] %v4203
      %v4205 = vld [vmem:[%s3968 + $0x150] sm:$0x1]
      %v4206 = vsel %vm337, 0, %v4205
      %4207 = vst [vmem:[%s3968 + $0x150] sm:$0x1] %v4206
      %v4208 = vld [vmem:[%s3968 + $0x168] sm:$0x1]
      %v4209 = vsel %vm337, 0, %v4208
      %4210 = vst [vmem:[%s3968 + $0x168] sm:$0x1] %v4209
      %v4211 = vrot.slane %v3989, 1
      %v4212 = vor.u32 %v3986, %v4211
      %v4213 = vrot.slane %v3996, 1
      %v4214 = vor.u32 %v3993, %v4213
      %v4215 = vrot.slane %v4003, 1
      %v4216 = vor.u32 %v4000, %v4215
      %v4217 = vrot.slane %v4010, 1
      %v4218 = vor.u32 %v4007, %v4217
      %v4219 = vrot.slane %v4017, 1
      %v4220 = vor.u32 %v4014, %v4219
      %v4221 = vrot.slane %v4024, 1
      %v4222 = vor.u32 %v4021, %v4221
      %v4223 = vrot.slane %v4031, 1
      %v4224 = vor.u32 %v4028, %v4223
      %v4225 = vrot.slane %v4038, 1
      %v4226 = vor.u32 %v4035, %v4225
      %v4227 = vrot.slane %v4045, 1
      %v4228 = vor.u32 %v4042, %v4227
      %v4229 = vrot.slane %v4052, 1
      %v4230 = vor.u32 %v4049, %v4229
      %v4231 = vrot.slane %v4059, 1
      %v4232 = vor.u32 %v4056, %v4231
      %v4233 = vrot.slane %v4066, 1
      %v4234 = vor.u32 %v4063, %v4233
      %v4235 = vrot.slane %v4073, 1
      %v4236 = vor.u32 %v4070, %v4235
      %v4237 = vrot.slane %v4080, 1
      %v4238 = vor.u32 %v4077, %v4237
      %v4239 = vrot.slane %v4087, 1
      %v4240 = vor.u32 %v4084, %v4239
      %v4241 = vrot.slane %v4094, 1
      %v4242 = vor.u32 %v4091, %v4241
      %vm4259 = vmand %vm4113, %vm1571
      %v4260 = vld [vmem:[%s3968 + $0x10] sm:$0xff]
      %v4261 = vsel %vm4259, %v4212, %v4260
      %4262 = vst [vmem:[%s3968 + $0x10] sm:$0xff] %v4261
      %v4263 = vld [vmem:[%s3968 + $0x28] sm:$0xff]
      %v4264 = vsel %vm4259, %v4214, %v4263
      %4265 = vst [vmem:[%s3968 + $0x28] sm:$0xff] %v4264
      %v4266 = vld [vmem:[%s3968 + $0x40] sm:$0xff]
      %v4267 = vsel %vm4259, %v4216, %v4266
      %4268 = vst [vmem:[%s3968 + $0x40] sm:$0xff] %v4267
      %v4269 = vld [vmem:[%s3968 + $0x58] sm:$0xff]
      %v4270 = vsel %vm4259, %v4218, %v4269
      %4271 = vst [vmem:[%s3968 + $0x58] sm:$0xff] %v4270
      %v4272 = vld [vmem:[%s3968 + $0x70] sm:$0xff]
      %v4273 = vsel %vm4259, %v4220, %v4272
      %4274 = vst [vmem:[%s3968 + $0x70] sm:$0xff] %v4273
      %v4275 = vld [vmem:[%s3968 + $0x88] sm:$0xff]
      %v4276 = vsel %vm4259, %v4222, %v4275
      %4277 = vst [vmem:[%s3968 + $0x88] sm:$0xff] %v4276
      %v4278 = vld [vmem:[%s3968 + $0xa0] sm:$0xff]
      %v4279 = vsel %vm4259, %v4224, %v4278
      %4280 = vst [vmem:[%s3968 + $0xa0] sm:$0xff] %v4279
      %v4281 = vld [vmem:[%s3968 + $0xb8] sm:$0xff]
      %v4282 = vsel %vm4259, %v4226, %v4281
      %4283 = vst [vmem:[%s3968 + $0xb8] sm:$0xff] %v4282
      %v4284 = vld [vmem:[%s3968 + $0xd0] sm:$0xff]
      %v4285 = vsel %vm4259, %v4228, %v4284
      %4286 = vst [vmem:[%s3968 + $0xd0] sm:$0xff] %v4285
      %v4287 = vld [vmem:[%s3968 + $0xe8] sm:$0xff]
      %v4288 = vsel %vm4259, %v4230, %v4287
      %4289 = vst [vmem:[%s3968 + $0xe8] sm:$0xff] %v4288
      %v4290 = vld [vmem:[%s3968 + $0x100] sm:$0xff]
      %v4291 = vsel %vm4259, %v4232, %v4290
      %4292 = vst [vmem:[%s3968 + $0x100] sm:$0xff] %v4291
      %v4293 = vld [vmem:[%s3968 + $0x118] sm:$0xff]
      %v4294 = vsel %vm4259, %v4234, %v4293
      %4295 = vst [vmem:[%s3968 + $0x118] sm:$0xff] %v4294
      %v4296 = vld [vmem:[%s3968 + $0x130] sm:$0xff]
      %v4297 = vsel %vm4259, %v4236, %v4296
      %4298 = vst [vmem:[%s3968 + $0x130] sm:$0xff] %v4297
      %v4299 = vld [vmem:[%s3968 + $0x148] sm:$0xff]
      %v4300 = vsel %vm4259, %v4238, %v4299
      %4301 = vst [vmem:[%s3968 + $0x148] sm:$0xff] %v4300
      %v4302 = vld [vmem:[%s3968 + $0x160] sm:$0xff]
      %v4303 = vsel %vm4259, %v4240, %v4302
      %4304 = vst [vmem:[%s3968 + $0x160] sm:$0xff] %v4303
      %v4305 = vld [vmem:[%s3968 + $0x178] sm:$0xff]
      %v4306 = vsel %vm4259, %v4242, %v4305
      %4307 = vst [vmem:[%s3968 + $0x178] sm:$0xff] %v4306
      %vm4308 = vcmask 1047559
      %vm4309 = vsmask.f32 7966
      %vm4310 = vmand %vm4308, %vm4309
      %v4311 = vld [vmem:[%s3968 + $0x10] sm:$0x80]
      %v4312 = vsel %vm4310, 0, %v4311
      %4313 = vst [vmem:[%s3968 + $0x10] sm:$0x80] %v4312
      %v4314 = vld [vmem:[%s3968 + $0x28] sm:$0x80]
      %v4315 = vsel %vm4310, 0, %v4314
      %4316 = vst [vmem:[%s3968 + $0x28] sm:$0x80] %v4315
      %v4317 = vld [vmem:[%s3968 + $0x40] sm:$0x80]
      %v4318 = vsel %vm4310, 0, %v4317
      %4319 = vst [vmem:[%s3968 + $0x40] sm:$0x80] %v4318
      %v4320 = vld [vmem:[%s3968 + $0x58] sm:$0x80]
      %v4321 = vsel %vm4310, 0, %v4320
      %4322 = vst [vmem:[%s3968 + $0x58] sm:$0x80] %v4321
      %v4323 = vld [vmem:[%s3968 + $0x70] sm:$0x80]
      %v4324 = vsel %vm4310, 0, %v4323
      %4325 = vst [vmem:[%s3968 + $0x70] sm:$0x80] %v4324
      %v4326 = vld [vmem:[%s3968 + $0x88] sm:$0x80]
      %v4327 = vsel %vm4310, 0, %v4326
      %4328 = vst [vmem:[%s3968 + $0x88] sm:$0x80] %v4327
      %v4329 = vld [vmem:[%s3968 + $0xa0] sm:$0x80]
      %v4330 = vsel %vm4310, 0, %v4329
      %4331 = vst [vmem:[%s3968 + $0xa0] sm:$0x80] %v4330
      %v4332 = vld [vmem:[%s3968 + $0xb8] sm:$0x80]
      %v4333 = vsel %vm4310, 0, %v4332
      %4334 = vst [vmem:[%s3968 + $0xb8] sm:$0x80] %v4333
      %v4335 = vld [vmem:[%s3968 + $0xd0] sm:$0x80]
      %v4336 = vsel %vm4310, 0, %v4335
      %4337 = vst [vmem:[%s3968 + $0xd0] sm:$0x80] %v4336
      %v4338 = vld [vmem:[%s3968 + $0xe8] sm:$0x80]
      %v4339 = vsel %vm4310, 0, %v4338
      %4340 = vst [vmem:[%s3968 + $0xe8] sm:$0x80] %v4339
      %v4341 = vld [vmem:[%s3968 + $0x100] sm:$0x80]
      %v4342 = vsel %vm4310, 0, %v4341
      %4343 = vst [vmem:[%s3968 + $0x100] sm:$0x80] %v4342
      %v4344 = vld [vmem:[%s3968 + $0x118] sm:$0x80]
      %v4345 = vsel %vm4310, 0, %v4344
      %4346 = vst [vmem:[%s3968 + $0x118] sm:$0x80] %v4345
      %v4347 = vld [vmem:[%s3968 + $0x130] sm:$0x80]
      %v4348 = vsel %vm4310, 0, %v4347
      %4349 = vst [vmem:[%s3968 + $0x130] sm:$0x80] %v4348
      %v4350 = vld [vmem:[%s3968 + $0x148] sm:$0x80]
      %v4351 = vsel %vm4310, 0, %v4350
      %4352 = vst [vmem:[%s3968 + $0x148] sm:$0x80] %v4351
      %v4353 = vld [vmem:[%s3968 + $0x160] sm:$0x80]
      %v4354 = vsel %vm4310, 0, %v4353
      %4355 = vst [vmem:[%s3968 + $0x160] sm:$0x80] %v4354
      %v4356 = vld [vmem:[%s3968 + $0x178] sm:$0x80]
      %v4357 = vsel %vm4310, 0, %v4356
      %4358 = vst [vmem:[%s3968 + $0x178] sm:$0x80] %v4357
      %v4359 = vld [vmem:[#allocation4] sm:$0xff]
      %v4360 = vld [vmem:[#allocation4 + $0x8] sm:$0xff]
      %v4361 = vld [vmem:[#allocation4 + $0x10] sm:$0xff]
      %v4362 = vld [vmem:[#allocation4 + $0x18] sm:$0xff]
      %v4363 = vld [vmem:[#allocation4 + $0x20] sm:$0xff]
      %v4364 = vld [vmem:[#allocation4 + $0x28] sm:$0xff]
      %v4365 = vld [vmem:[#allocation4 + $0x30] sm:$0xff]
      %v4366 = vld [vmem:[#allocation4 + $0x38] sm:$0xff]
      %v4367 = vld [vmem:[#allocation4 + $0x40] sm:$0xff]
      %v4368 = vld [vmem:[#allocation4 + $0x48] sm:$0xff]
      %v4369 = vld [vmem:[#allocation4 + $0x50] sm:$0xff]
      %v4370 = vld [vmem:[#allocation4 + $0x58] sm:$0xff]
      %v4371 = vld [vmem:[#allocation4 + $0x60] sm:$0xff]
      %v4372 = vld [vmem:[#allocation4 + $0x68] sm:$0xff]
      %v4373 = vld [vmem:[#allocation4 + $0x70] sm:$0xff]
      %v4374 = vld [vmem:[#allocation4 + $0x78] sm:$0xff]
      %v4375 = vld [vmem:[#allocation4 + $0x80] sm:$0xff]
      %v4376 = vld [vmem:[#allocation4 + $0x88] sm:$0xff]
      %v4377 = vld [vmem:[#allocation4 + $0x90] sm:$0xff]
      %v4378 = vld [vmem:[#allocation4 + $0x98] sm:$0xff]
      %v4379 = vld [vmem:[#allocation4 + $0xa0] sm:$0xff]
      %v4380 = vld [vmem:[#allocation4 + $0xa8] sm:$0xff]
      %v4381 = vld [vmem:[#allocation4 + $0xb0] sm:$0xff]
      %v4382 = vld [vmem:[#allocation4 + $0xb8] sm:$0xff]
      %v4383 = vld [vmem:[#allocation4 + $0xc0] sm:$0xff]
      %v4384 = vld [vmem:[#allocation4 + $0xc8] sm:$0xff]
      %v4385 = vld [vmem:[#allocation4 + $0xd0] sm:$0xff]
      %v4386 = vld [vmem:[#allocation4 + $0xd8] sm:$0xff]
      %v4387 = vld [vmem:[#allocation4 + $0xe0] sm:$0xff]
      %v4388 = vld [vmem:[#allocation4 + $0xe8] sm:$0xff]
      %v4389 = vld [vmem:[#allocation4 + $0xf0] sm:$0xff]
      %v4390 = vld [vmem:[#allocation4 + $0xf8] sm:$0xff]
      %v4391 = vld [vmem:[#allocation4 + $0x100] sm:$0xff]
      %v4392 = vld [vmem:[#allocation4 + $0x108] sm:$0xff]
      %v4393 = vld [vmem:[#allocation4 + $0x110] sm:$0xff]
      %v4394 = vld [vmem:[#allocation4 + $0x118] sm:$0xff]
      %v4395 = vld [vmem:[#allocation4 + $0x120] sm:$0xff]
      %v4396 = vld [vmem:[#allocation4 + $0x128] sm:$0xff]
      %v4397 = vld [vmem:[#allocation4 + $0x130] sm:$0xff]
      %v4398 = vld [vmem:[#allocation4 + $0x138] sm:$0xff]
      %v4399 = vld [vmem:[#allocation4 + $0x140] sm:$0xff]
      %v4400 = vld [vmem:[#allocation4 + $0x148] sm:$0xff]
      %v4401 = vld [vmem:[#allocation4 + $0x150] sm:$0xff]
      %v4402 = vld [vmem:[#allocation4 + $0x158] sm:$0xff]
      %v4403 = vld [vmem:[#allocation4 + $0x160] sm:$0xff]
      %v4404 = vld [vmem:[#allocation4 + $0x168] sm:$0xff]
      %v4405 = vld [vmem:[#allocation4 + $0x170] sm:$0xff]
      %v4406 = vld [vmem:[#allocation4 + $0x178] sm:$0xff]
      %v4407 = vld [vmem:[%s5] sm:$0xf]
      %v4408 = vld [vmem:[%s5 + $0x4] sm:$0xf]
      %v4409 = vld [vmem:[%s5 + $0x8] sm:$0xf]
      %v4410 = vld [vmem:[%s5 + $0xc] sm:$0xf]
      %v4411 = vld [vmem:[%s5 + $0x10] sm:$0xf]
      %v4412 = vld [vmem:[%s5 + $0x14] sm:$0xf]
      %v4413 = vld [vmem:[%s5 + $0x18] sm:$0xf]
      %v4414 = vld [vmem:[%s5 + $0x1c] sm:$0xf]
      %v4415 = vld [vmem:[%s5 + $0x20] sm:$0xf]
      %v4416 = vld [vmem:[%s5 + $0x24] sm:$0xf]
      %v4417 = vld [vmem:[%s5 + $0x28] sm:$0xf]
      %v4418 = vld [vmem:[%s5 + $0x2c] sm:$0xf]
      %v4419 = vld [vmem:[%s5 + $0x30] sm:$0xf]
      %v4420 = vld [vmem:[%s5 + $0x34] sm:$0xf]
      %v4421 = vld [vmem:[%s5 + $0x38] sm:$0xf]
      %v4422 = vld [vmem:[%s5 + $0x3c] sm:$0xf]
      %v4423 = vld [vmem:[%s5 + $0x40] sm:$0xf]
      %v4424 = vld [vmem:[%s5 + $0x44] sm:$0xf]
      %v4425 = vld [vmem:[%s5 + $0x48] sm:$0xf]
      %v4426 = vld [vmem:[%s5 + $0x4c] sm:$0xf]
      %v4427 = vld [vmem:[%s5 + $0x50] sm:$0xf]
      %v4428 = vld [vmem:[%s5 + $0x54] sm:$0xf]
      %v4429 = vld [vmem:[%s5 + $0x58] sm:$0xf]
      %v4430 = vld [vmem:[%s5 + $0x5c] sm:$0xf]
      %v4431 = vld [vmem:[%s5 + $0x60] sm:$0xf]
      %v4432 = vld [vmem:[%s5 + $0x64] sm:$0xf]
      %v4433 = vld [vmem:[%s5 + $0x68] sm:$0xf]
      %v4434 = vld [vmem:[%s5 + $0x6c] sm:$0xf]
      %v4435 = vld [vmem:[%s5 + $0x70] sm:$0xf]
      %v4436 = vld [vmem:[%s5 + $0x74] sm:$0xf]
      %v4437 = vld [vmem:[%s5 + $0x78] sm:$0xf]
      %v4438 = vld [vmem:[%s5 + $0x7c] sm:$0xf]
      %v4439 = vld [vmem:[%s5 + $0x80] sm:$0xf]
      %v4440 = vld [vmem:[%s5 + $0x84] sm:$0xf]
      %v4441 = vld [vmem:[%s5 + $0x88] sm:$0xf]
      %v4442 = vld [vmem:[%s5 + $0x8c] sm:$0xf]
      %v4443 = vld [vmem:[%s5 + $0x90] sm:$0xf]
      %v4444 = vld [vmem:[%s5 + $0x94] sm:$0xf]
      %v4445 = vld [vmem:[%s5 + $0x98] sm:$0xf]
      %v4446 = vld [vmem:[%s5 + $0x9c] sm:$0xf]
      %v4447 = vld [vmem:[%s5 + $0xa0] sm:$0xf]
      %v4448 = vld [vmem:[%s5 + $0xa4] sm:$0xf]
      %v4449 = vld [vmem:[%s5 + $0xa8] sm:$0xf]
      %v4450 = vld [vmem:[%s5 + $0xac] sm:$0xf]
      %v4451 = vld [vmem:[%s5 + $0xb0] sm:$0xf]
      %v4452 = vld [vmem:[%s5 + $0xb4] sm:$0xf]
      %v4453 = vld [vmem:[%s5 + $0xb8] sm:$0xf]
      %v4454 = vld [vmem:[%s5 + $0xbc] sm:$0xf]
      %v4455 = vld [vmem:[%s3968] sm:$0xff]
      %v4456 = vld [vmem:[%s3968 + $0x8] sm:$0xff]
      %v4457 = vld [vmem:[%s3968 + $0x10] sm:$0xff]
      %v4458 = vld [vmem:[%s3968 + $0x18] sm:$0xff]
      %v4459 = vld [vmem:[%s3968 + $0x20] sm:$0xff]
      %v4460 = vld [vmem:[%s3968 + $0x28] sm:$0xff]
      %v4461 = vld [vmem:[%s3968 + $0x30] sm:$0xff]
      %v4462 = vld [vmem:[%s3968 + $0x38] sm:$0xff]
      %v4463 = vld [vmem:[%s3968 + $0x40] sm:$0xff]
      %v4464 = vld [vmem:[%s3968 + $0x48] sm:$0xff]
      %v4465 = vld [vmem:[%s3968 + $0x50] sm:$0xff]
      %v4466 = vld [vmem:[%s3968 + $0x58] sm:$0xff]
      %v4467 = vld [vmem:[%s3968 + $0x60] sm:$0xff]
      %v4468 = vld [vmem:[%s3968 + $0x68] sm:$0xff]
      %v4469 = vld [vmem:[%s3968 + $0x70] sm:$0xff]
      %v4470 = vld [vmem:[%s3968 + $0x78] sm:$0xff]
      %v4471 = vld [vmem:[%s3968 + $0x80] sm:$0xff]
      %v4472 = vld [vmem:[%s3968 + $0x88] sm:$0xff]
      %v4473 = vld [vmem:[%s3968 + $0x90] sm:$0xff]
      %v4474 = vld [vmem:[%s3968 + $0x98] sm:$0xff]
      %v4475 = vld [vmem:[%s3968 + $0xa0] sm:$0xff]
      %v4476 = vld [vmem:[%s3968 + $0xa8] sm:$0xff]
      %v4477 = vld [vmem:[%s3968 + $0xb0] sm:$0xff]
      %v4478 = vld [vmem:[%s3968 + $0xb8] sm:$0xff]
      %v4479 = vld [vmem:[%s3968 + $0xc0] sm:$0xff]
      %v4480 = vld [vmem:[%s3968 + $0xc8] sm:$0xff]
      %v4481 = vld [vmem:[%s3968 + $0xd0] sm:$0xff]
      %v4482 = vld [vmem:[%s3968 + $0xd8] sm:$0xff]
      %v4483 = vld [vmem:[%s3968 + $0xe0] sm:$0xff]
      %v4484 = vld [vmem:[%s3968 + $0xe8] sm:$0xff]
      %v4485 = vld [vmem:[%s3968 + $0xf0] sm:$0xff]
      %v4486 = vld [vmem:[%s3968 + $0xf8] sm:$0xff]
      %v4487 = vld [vmem:[%s3968 + $0x100] sm:$0xff]
      %v4488 = vld [vmem:[%s3968 + $0x108] sm:$0xff]
      %v4489 = vld [vmem:[%s3968 + $0x110] sm:$0xff]
      %v4490 = vld [vmem:[%s3968 + $0x118] sm:$0xff]
      %v4491 = vld [vmem:[%s3968 + $0x120] sm:$0xff]
      %v4492 = vld [vmem:[%s3968 + $0x128] sm:$0xff]
      %v4493 = vld [vmem:[%s3968 + $0x130] sm:$0xff]
      %v4494 = vld [vmem:[%s3968 + $0x138] sm:$0xff]
      %v4495 = vld [vmem:[%s3968 + $0x140] sm:$0xff]
      %v4496 = vld [vmem:[%s3968 + $0x148] sm:$0xff]
      %v4497 = vld [vmem:[%s3968 + $0x150] sm:$0xff]
      %v4498 = vld [vmem:[%s3968 + $0x158] sm:$0xff]
      %v4499 = vld [vmem:[%s3968 + $0x160] sm:$0xff]
      %v4500 = vld [vmem:[%s3968 + $0x168] sm:$0xff]
      %v4501 = vld [vmem:[%s3968 + $0x170] sm:$0xff]
      %v4502 = vld [vmem:[%s3968 + $0x178] sm:$0xff]
      %s4503 = scalar_lea.vmem %s5, 192
      %v4504 = vld [vmem:[%s4503] sm:$0xf]
      %v4505 = vld [vmem:[%s4503 + $0x4] sm:$0xf]
      %v4506 = vld [vmem:[%s4503 + $0x8] sm:$0xf]
      %v4507 = vld [vmem:[%s4503 + $0xc] sm:$0xf]
      %v4508 = vld [vmem:[%s4503 + $0x10] sm:$0xf]
      %v4509 = vld [vmem:[%s4503 + $0x14] sm:$0xf]
      %v4510 = vld [vmem:[%s4503 + $0x18] sm:$0xf]
      %v4511 = vld [vmem:[%s4503 + $0x1c] sm:$0xf]
      %v4512 = vld [vmem:[%s4503 + $0x20] sm:$0xf]
      %v4513 = vld [vmem:[%s4503 + $0x24] sm:$0xf]
      %v4514 = vld [vmem:[%s4503 + $0x28] sm:$0xf]
      %v4515 = vld [vmem:[%s4503 + $0x2c] sm:$0xf]
      %v4516 = vld [vmem:[%s4503 + $0x30] sm:$0xf]
      %v4517 = vld [vmem:[%s4503 + $0x34] sm:$0xf]
      %v4518 = vld [vmem:[%s4503 + $0x38] sm:$0xf]
      %v4519 = vld [vmem:[%s4503 + $0x3c] sm:$0xf]
      %v4520 = vld [vmem:[%s4503 + $0x40] sm:$0xf]
      %v4521 = vld [vmem:[%s4503 + $0x44] sm:$0xf]
      %v4522 = vld [vmem:[%s4503 + $0x48] sm:$0xf]
      %v4523 = vld [vmem:[%s4503 + $0x4c] sm:$0xf]
      %v4524 = vld [vmem:[%s4503 + $0x50] sm:$0xf]
      %v4525 = vld [vmem:[%s4503 + $0x54] sm:$0xf]
      %v4526 = vld [vmem:[%s4503 + $0x58] sm:$0xf]
      %v4527 = vld [vmem:[%s4503 + $0x5c] sm:$0xf]
      %v4528 = vld [vmem:[%s4503 + $0x60] sm:$0xf]
      %v4529 = vld [vmem:[%s4503 + $0x64] sm:$0xf]
      %v4530 = vld [vmem:[%s4503 + $0x68] sm:$0xf]
      %v4531 = vld [vmem:[%s4503 + $0x6c] sm:$0xf]
      %v4532 = vld [vmem:[%s4503 + $0x70] sm:$0xf]
      %v4533 = vld [vmem:[%s4503 + $0x74] sm:$0xf]
      %v4534 = vld [vmem:[%s4503 + $0x78] sm:$0xf]
      %v4535 = vld [vmem:[%s4503 + $0x7c] sm:$0xf]
      %v4536 = vld [vmem:[%s4503 + $0x80] sm:$0xf]
      %v4537 = vld [vmem:[%s4503 + $0x84] sm:$0xf]
      %v4538 = vld [vmem:[%s4503 + $0x88] sm:$0xf]
      %v4539 = vld [vmem:[%s4503 + $0x8c] sm:$0xf]
      %v4540 = vld [vmem:[%s4503 + $0x90] sm:$0xf]
      %v4541 = vld [vmem:[%s4503 + $0x94] sm:$0xf]
      %v4542 = vld [vmem:[%s4503 + $0x98] sm:$0xf]
      %v4543 = vld [vmem:[%s4503 + $0x9c] sm:$0xf]
      %v4544 = vld [vmem:[%s4503 + $0xa0] sm:$0xf]
      %v4545 = vld [vmem:[%s4503 + $0xa4] sm:$0xf]
      %v4546 = vld [vmem:[%s4503 + $0xa8] sm:$0xf]
      %v4547 = vld [vmem:[%s4503 + $0xac] sm:$0xf]
      %v4548 = vld [vmem:[%s4503 + $0xb0] sm:$0xf]
      %v4549 = vld [vmem:[%s4503 + $0xb4] sm:$0xf]
      %v4550 = vld [vmem:[%s4503 + $0xb8] sm:$0xf]
      %v4551 = vld [vmem:[%s4503 + $0xbc] sm:$0xf]
      %v4600 = vunpack.c.l.b16 %v4504
      %v4601 = vunpack.c.l.b16 %v4505
      %v4602 = vunpack.c.l.b16 %v4506
      %v4603 = vunpack.c.l.b16 %v4507
      %v4604 = vunpack.c.l.b16 %v4508
      %v4605 = vunpack.c.l.b16 %v4509
      %v4606 = vunpack.c.l.b16 %v4510
      %v4607 = vunpack.c.l.b16 %v4511
      %v4608 = vunpack.c.l.b16 %v4512
      %v4609 = vunpack.c.l.b16 %v4513
      %v4610 = vunpack.c.l.b16 %v4514
      %v4611 = vunpack.c.l.b16 %v4515
      %v4612 = vunpack.c.l.b16 %v4516
      %v4613 = vunpack.c.l.b16 %v4517
      %v4614 = vunpack.c.l.b16 %v4518
      %v4615 = vunpack.c.l.b16 %v4519
      %v4616 = vunpack.c.l.b16 %v4520
      %v4617 = vunpack.c.l.b16 %v4521
      %v4618 = vunpack.c.l.b16 %v4522
      %v4619 = vunpack.c.l.b16 %v4523
      %v4620 = vunpack.c.l.b16 %v4524
      %v4621 = vunpack.c.l.b16 %v4525
      %v4622 = vunpack.c.l.b16 %v4526
      %v4623 = vunpack.c.l.b16 %v4527
      %v4624 = vunpack.c.l.b16 %v4528
      %v4625 = vunpack.c.l.b16 %v4529
      %v4626 = vunpack.c.l.b16 %v4530
      %v4627 = vunpack.c.l.b16 %v4531
      %v4628 = vunpack.c.l.b16 %v4532
      %v4629 = vunpack.c.l.b16 %v4533
      %v4630 = vunpack.c.l.b16 %v4534
      %v4631 = vunpack.c.l.b16 %v4535
      %v4632 = vunpack.c.l.b16 %v4536
      %v4633 = vunpack.c.l.b16 %v4537
      %v4634 = vunpack.c.l.b16 %v4538
      %v4635 = vunpack.c.l.b16 %v4539
      %v4636 = vunpack.c.l.b16 %v4540
      %v4637 = vunpack.c.l.b16 %v4541
      %v4638 = vunpack.c.l.b16 %v4542
      %v4639 = vunpack.c.l.b16 %v4543
      %v4640 = vunpack.c.l.b16 %v4544
      %v4641 = vunpack.c.l.b16 %v4545
      %v4642 = vunpack.c.l.b16 %v4546
      %v4643 = vunpack.c.l.b16 %v4547
      %v4644 = vunpack.c.l.b16 %v4548
      %v4645 = vunpack.c.l.b16 %v4549
      %v4646 = vunpack.c.l.b16 %v4550
      %v4647 = vunpack.c.l.b16 %v4551
      %v4648 = vpack.c.b16 %v4601, %v4600
      %v4649 = vpack.c.b16 %v4603, %v4602
      %v4650 = vpack.c.b16 %v4605, %v4604
      %v4651 = vpack.c.b16 %v4607, %v4606
      %v4652 = vpack.c.b16 %v4609, %v4608
      %v4653 = vpack.c.b16 %v4611, %v4610
      %v4654 = vpack.c.b16 %v4613, %v4612
      %v4655 = vpack.c.b16 %v4615, %v4614
      %v4656 = vpack.c.b16 %v4617, %v4616
      %v4657 = vpack.c.b16 %v4619, %v4618
      %v4658 = vpack.c.b16 %v4621, %v4620
      %v4659 = vpack.c.b16 %v4623, %v4622
      %v4660 = vpack.c.b16 %v4625, %v4624
      %v4661 = vpack.c.b16 %v4627, %v4626
      %v4662 = vpack.c.b16 %v4629, %v4628
      %v4663 = vpack.c.b16 %v4631, %v4630
      %v4664 = vpack.c.b16 %v4633, %v4632
      %v4665 = vpack.c.b16 %v4635, %v4634
      %v4666 = vpack.c.b16 %v4637, %v4636
      %v4667 = vpack.c.b16 %v4639, %v4638
      %v4668 = vpack.c.b16 %v4641, %v4640
      %v4669 = vpack.c.b16 %v4643, %v4642
      %v4670 = vpack.c.b16 %v4645, %v4644
      %v4671 = vpack.c.b16 %v4647, %v4646
      %4696 = vmatprep.subr.bf16.mxu0 0
      %4697 = vmatpush1.bf16.msra.mxu0 %v4648
      %4698 = vmatprep.subr.bf16.mxu0 0
      %4699 = vmatpush1.bf16.msra.mxu0 %v4649
      %4700 = vmatprep.subr.bf16.mxu0 0
      %4701 = vmatpush1.bf16.msra.mxu0 %v4650
      %4702 = vmatprep.subr.bf16.mxu0 0
      %4703 = vmatpush1.bf16.msra.mxu0 %v4651
      %4704 = vmatprep.subr.bf16.mxu0 0
      %4705 = vmatpush1.bf16.msra.mxu0 %v4652
      %4706 = vmatprep.subr.bf16.mxu0 0
      %4707 = vmatpush1.bf16.msra.mxu0 %v4653
      %4708 = vmatprep.subr.bf16.mxu0 0
      %4709 = vmatpush1.bf16.msra.mxu0 %v4654
      %4710 = vmatprep.subr.bf16.mxu0 0
      %4711 = vmatpush1.bf16.msra.mxu0 %v4655
      %4712 = vmatprep.subr.bf16.mxu0 0
      %4713 = vmatpush1.bf16.msra.mxu0 %v4656
      %4714 = vmatprep.subr.bf16.mxu0 0
      %4715 = vmatpush1.bf16.msra.mxu0 %v4657
      %4716 = vmatprep.subr.bf16.mxu0 0
      %4717 = vmatpush1.bf16.msra.mxu0 %v4658
      %4718 = vmatprep.subr.bf16.mxu0 0
      %4719 = vmatpush1.bf16.msra.mxu0 %v4659
      %4720 = vmatprep.subr.bf16.mxu0 0
      %4721 = vmatpush1.bf16.msra.mxu0 %v4660
      %4722 = vmatprep.subr.bf16.mxu0 0
      %4723 = vmatpush1.bf16.msra.mxu0 %v4661
      %4724 = vmatprep.subr.bf16.mxu0 0
      %4725 = vmatpush1.bf16.msra.mxu0 %v4662
      %4726 = vmatprep.subr.bf16.mxu0 0
      %4727 = vmatpush1.bf16.msra.mxu0 %v4663
      %4728 = vmatprep.mubr.bf16.mxu0 %v4456
      %4729 = vmatmul.mubr.bf16.gmra.mrb[0].mxu0 %v4455
      %v4730 = vpop.f32.mrb[0].mxu0
      %v4731 = vadd.f32 0.0, %v4730
      %v4732 = vpop.f32.mrb[0].mxu0
      %v4733 = vpop.f32.mrb[0].mxu0
      %v4734 = vadd.f32 0.0, %v4733
      %v4735 = vpop.f32.mrb[0].mxu0
      %4736 = vmatprep.mubr.bf16.mxu0 %v4459
      %4737 = vmatmul.mubr.bf16.gmra.mrb[0].mxu0 %v4458
      %v4738 = vpop.f32.mrb[0].mxu0
      %v4739 = vadd.f32 0.0, %v4738
      %v4740 = vpop.f32.mrb[0].mxu0
      %v4741 = vpop.f32.mrb[0].mxu0
      %v4742 = vadd.f32 0.0, %v4741
      %v4743 = vpop.f32.mrb[0].mxu0
      %4744 = vmatprep.mubr.bf16.mxu0 %v4462
      %4745 = vmatmul.mubr.bf16.gmra.mrb[0].mxu0 %v4461
      %v4746 = vpop.f32.mrb[0].mxu0
      %v4747 = vadd.f32 0.0, %v4746
      %v4748 = vpop.f32.mrb[0].mxu0
      %v4749 = vpop.f32.mrb[0].mxu0
      %v4750 = vadd.f32 0.0, %v4749
      %v4751 = vpop.f32.mrb[0].mxu0
      %4752 = vmatprep.mubr.bf16.mxu0 %v4465
      %4753 = vmatmul.mubr.bf16.gmra.mrb[0].mxu0 %v4464
      %v4754 = vpop.f32.mrb[0].mxu0
      %v4755 = vadd.f32 0.0, %v4754
      %v4756 = vpop.f32.mrb[0].mxu0
      %v4757 = vpop.f32.mrb[0].mxu0
      %v4758 = vadd.f32 0.0, %v4757
      %v4759 = vpop.f32.mrb[0].mxu0
      %4760 = vmatprep.mubr.bf16.mxu0 %v4468
      %4761 = vmatmul.mubr.bf16.gmra.mrb[0].mxu0 %v4467
      %v4762 = vpop.f32.mrb[0].mxu0
      %v4763 = vadd.f32 0.0, %v4762
      %v4764 = vpop.f32.mrb[0].mxu0
      %v4765 = vpop.f32.mrb[0].mxu0
      %v4766 = vadd.f32 0.0, %v4765
      %v4767 = vpop.f32.mrb[0].mxu0
      %4768 = vmatprep.mubr.bf16.mxu0 %v4471
      %4769 = vmatmul.mubr.bf16.gmra.mrb[0].mxu0 %v4470
      %v4770 = vpop.f32.mrb[0].mxu0
      %v4771 = vadd.f32 0.0, %v4770
      %v4772 = vpop.f32.mrb[0].mxu0
      %v4773 = vpop.f32.mrb[0].mxu0
      %v4774 = vadd.f32 0.0, %v4773
      %v4775 = vpop.f32.mrb[0].mxu0
      %4776 = vmatprep.mubr.bf16.mxu0 %v4474
      %4777 = vmatmul.mubr.bf16.gmra.mrb[0].mxu0 %v4473
      %v4778 = vpop.f32.mrb[0].mxu0
      %v4779 = vadd.f32 0.0, %v4778
      %v4780 = vpop.f32.mrb[0].mxu0
      %v4781 = vpop.f32.mrb[0].mxu0
      %v4782 = vadd.f32 0.0, %v4781
      %v4783 = vpop.f32.mrb[0].mxu0
      %4784 = vmatprep.mubr.bf16.mxu0 %v4477
      %4785 = vmatmul.mubr.bf16.gmra.mrb[0].mxu0 %v4476
      %v4786 = vpop.f32.mrb[0].mxu0
      %v4787 = vadd.f32 0.0, %v4786
      %v4788 = vpop.f32.mrb[0].mxu0
      %v4789 = vpop.f32.mrb[0].mxu0
      %v4790 = vadd.f32 0.0, %v4789
      %v4791 = vpop.f32.mrb[0].mxu0
      %4792 = vmatprep.mubr.bf16.mxu0 %v4480
      %4793 = vmatmul.mubr.bf16.gmra.mrb[0].mxu0 %v4479
      %v4794 = vpop.f32.mrb[0].mxu0
      %v4795 = vadd.f32 0.0, %v4794
      %v4796 = vpop.f32.mrb[0].mxu0
      %v4797 = vpop.f32.mrb[0].mxu0
      %v4798 = vadd.f32 0.0, %v4797
      %v4799 = vpop.f32.mrb[0].mxu0
      %4800 = vmatprep.mubr.bf16.mxu0 %v4483
      %4801 = vmatmul.mubr.bf16.gmra.mrb[0].mxu0 %v4482
      %v4802 = vpop.f32.mrb[0].mxu0
      %v4803 = vadd.f32 0.0, %v4802
      %v4804 = vpop.f32.mrb[0].mxu0
      %v4805 = vpop.f32.mrb[0].mxu0
      %v4806 = vadd.f32 0.0, %v4805
      %v4807 = vpop.f32.mrb[0].mxu0
      %4808 = vmatprep.mubr.bf16.mxu0 %v4486
      %4809 = vmatmul.mubr.bf16.gmra.mrb[0].mxu0 %v4485
      %v4810 = vpop.f32.mrb[0].mxu0
      %v4811 = vadd.f32 0.0, %v4810
      %v4812 = vpop.f32.mrb[0].mxu0
      %v4813 = vpop.f32.mrb[0].mxu0
      %v4814 = vadd.f32 0.0, %v4813
      %v4815 = vpop.f32.mrb[0].mxu0
      %4816 = vmatprep.mubr.bf16.mxu0 %v4489
      %4817 = vmatmul.mubr.bf16.gmra.mrb[0].mxu0 %v4488
      %v4818 = vpop.f32.mrb[0].mxu0
      %v4819 = vadd.f32 0.0, %v4818
      %v4820 = vpop.f32.mrb[0].mxu0
      %v4821 = vpop.f32.mrb[0].mxu0
      %v4822 = vadd.f32 0.0, %v4821
      %v4823 = vpop.f32.mrb[0].mxu0
      %4824 = vmatprep.mubr.bf16.mxu0 %v4492
      %4825 = vmatmul.mubr.bf16.gmra.mrb[0].mxu0 %v4491
      %v4826 = vpop.f32.mrb[0].mxu0
      %v4827 = vadd.f32 0.0, %v4826
      %v4828 = vpop.f32.mrb[0].mxu0
      %v4829 = vpop.f32.mrb[0].mxu0
      %v4830 = vadd.f32 0.0, %v4829
      %v4831 = vpop.f32.mrb[0].mxu0
      %4832 = vmatprep.mubr.bf16.mxu0 %v4495
      %4833 = vmatmul.mubr.bf16.gmra.mrb[0].mxu0 %v4494
      %v4834 = vpop.f32.mrb[0].mxu0
      %v4835 = vadd.f32 0.0, %v4834
      %v4836 = vpop.f32.mrb[0].mxu0
      %v4837 = vpop.f32.mrb[0].mxu0
      %v4838 = vadd.f32 0.0, %v4837
      %v4839 = vpop.f32.mrb[0].mxu0
      %4840 = vmatprep.mubr.bf16.mxu0 %v4498
      %4841 = vmatmul.mubr.bf16.gmra.mrb[0].mxu0 %v4497
      %v4842 = vpop.f32.mrb[0].mxu0
      %v4843 = vadd.f32 0.0, %v4842
      %v4844 = vpop.f32.mrb[0].mxu0
      %v4845 = vpop.f32.mrb[0].mxu0
      %v4846 = vadd.f32 0.0, %v4845
      %v4847 = vpop.f32.mrb[0].mxu0
      %4848 = vmatprep.mubr.bf16.mxu0 %v4501
      %4849 = vmatmul.mubr.bf16.gmra.mrb[0].mxu0 %v4500
      %v4850 = vpop.f32.mrb[0].mxu0
      %v4851 = vadd.f32 0.0, %v4850
      %v4852 = vpop.f32.mrb[0].mxu0
      %v4853 = vpop.f32.mrb[0].mxu0
      %v4854 = vadd.f32 0.0, %v4853
      %v4855 = vpop.f32.mrb[0].mxu0
      %4856 = vdwg.mxu0
      %4857 = vmatprep.subr.bf16.mxu0 0
      %4858 = vmatpush1.bf16.msra.mxu0 %v4664
      %4859 = vmatprep.subr.bf16.mxu0 0
      %4860 = vmatpush1.bf16.msra.mxu0 %v4665
      %4861 = vmatprep.subr.bf16.mxu0 0
      %4862 = vmatpush1.bf16.msra.mxu0 %v4666
      %4863 = vmatprep.subr.bf16.mxu0 0
      %4864 = vmatpush1.bf16.msra.mxu0 %v4667
      %4865 = vmatprep.subr.bf16.mxu0 0
      %4866 = vmatpush1.bf16.msra.mxu0 %v4668
      %4867 = vmatprep.subr.bf16.mxu0 0
      %4868 = vmatpush1.bf16.msra.mxu0 %v4669
      %4869 = vmatprep.subr.bf16.mxu0 0
      %4870 = vmatpush1.bf16.msra.mxu0 %v4670
      %4871 = vmatprep.subr.bf16.mxu0 0
      %4872 = vmatpush1.bf16.msra.mxu0 %v4671
      %4873 = vmatprep.subr.bf16.mxu0 0
      %4874 = vmatpush1.bf16.msra.mxu0 0
      %4875 = vmatprep.subr.bf16.mxu0 0
      %4876 = vmatpush1.bf16.msra.mxu0 0
      %4877 = vmatprep.subr.bf16.mxu0 0
      %4878 = vmatpush1.bf16.msra.mxu0 0
      %4879 = vmatprep.subr.bf16.mxu0 0
      %4880 = vmatpush1.bf16.msra.mxu0 0
      %4881 = vmatprep.subr.bf16.mxu0 0
      %4882 = vmatpush1.bf16.msra.mxu0 0
      %4883 = vmatprep.subr.bf16.mxu0 0
      %4884 = vmatpush1.bf16.msra.mxu0 0
      %4885 = vmatprep.subr.bf16.mxu0 0
      %4886 = vmatpush1.bf16.msra.mxu0 0
      %4887 = vmatprep.subr.bf16.mxu0 0
      %4888 = vmatpush1.bf16.msra.mxu0 0
      %4889 = vmatprep.mubr.bf16.mxu0 0
      %4890 = vmatmul.mubr.bf16.gmra.mrb[0].mxu0 %v4457
      %v4891 = vpop.f32.mrb[0].mxu0
      %v4892 = vadd.f32 %v4731, %v4891
      %v4893 = vpop.f32.mrb[0].mxu0
      %v4894 = vpop.f32.mrb[0].mxu0
      %v4895 = vadd.f32 %v4734, %v4894
      %v4896 = vpop.f32.mrb[0].mxu0
      %4897 = vmatprep.mubr.bf16.mxu0 0
      %4898 = vmatmul.mubr.bf16.gmra.mrb[0].mxu0 %v4460
      %v4899 = vpop.f32.mrb[0].mxu0
      %v4900 = vadd.f32 %v4739, %v4899
      %v4901 = vpop.f32.mrb[0].mxu0
      %v4902 = vpop.f32.mrb[0].mxu0
      %v4903 = vadd.f32 %v4742, %v4902
      %v4904 = vpop.f32.mrb[0].mxu0
      %4905 = vmatprep.mubr.bf16.mxu0 0
      %4906 = vmatmul.mubr.bf16.gmra.mrb[0].mxu0 %v4463
      %v4907 = vpop.f32.mrb[0].mxu0
      %v4908 = vadd.f32 %v4747, %v4907
      %v4909 = vpop.f32.mrb[0].mxu0
      %v4910 = vpop.f32.mrb[0].mxu0
      %v4911 = vadd.f32 %v4750, %v4910
      %v4912 = vpop.f32.mrb[0].mxu0
      %4913 = vmatprep.mubr.bf16.mxu0 0
      %4914 = vmatmul.mubr.bf16.gmra.mrb[0].mxu0 %v4466
      %v4915 = vpop.f32.mrb[0].mxu0
      %v4916 = vadd.f32 %v4755, %v4915
      %v4917 = vpop.f32.mrb[0].mxu0
      %v4918 = vpop.f32.mrb[0].mxu0
      %v4919 = vadd.f32 %v4758, %v4918
      %v4920 = vpop.f32.mrb[0].mxu0
      %4921 = vmatprep.mubr.bf16.mxu0 0
      %4922 = vmatmul.mubr.bf16.gmra.mrb[0].mxu0 %v4469
      %v4923 = vpop.f32.mrb[0].mxu0
      %v4924 = vadd.f32 %v4763, %v4923
      %v4925 = vpop.f32.mrb[0].mxu0
      %v4926 = vpop.f32.mrb[0].mxu0
      %v4927 = vadd.f32 %v4766, %v4926
      %v4928 = vpop.f32.mrb[0].mxu0
      %4929 = vmatprep.mubr.bf16.mxu0 0
      %4930 = vmatmul.mubr.bf16.gmra.mrb[0].mxu0 %v4472
      %v4931 = vpop.f32.mrb[0].mxu0
      %v4932 = vadd.f32 %v4771, %v4931
      %v4933 = vpop.f32.mrb[0].mxu0
      %v4934 = vpop.f32.mrb[0].mxu0
      %v4935 = vadd.f32 %v4774, %v4934
      %v4936 = vpop.f32.mrb[0].mxu0
      %4937 = vmatprep.mubr.bf16.mxu0 0
      %4938 = vmatmul.mubr.bf16.gmra.mrb[0].mxu0 %v4475
      %v4939 = vpop.f32.mrb[0].mxu0
      %v4940 = vadd.f32 %v4779, %v4939
      %v4941 = vpop.f32.mrb[0].mxu0
      %v4942 = vpop.f32.mrb[0].mxu0
      %v4943 = vadd.f32 %v4782, %v4942
      %v4944 = vpop.f32.mrb[0].mxu0
      %4945 = vmatprep.mubr.bf16.mxu0 0
      %4946 = vmatmul.mubr.bf16.gmra.mrb[0].mxu0 %v4478
      %v4947 = vpop.f32.mrb[0].mxu0
      %v4948 = vadd.f32 %v4787, %v4947
      %v4949 = vpop.f32.mrb[0].mxu0
      %v4950 = vpop.f32.mrb[0].mxu0
      %v4951 = vadd.f32 %v4790, %v4950
      %v4952 = vpop.f32.mrb[0].mxu0
      %4953 = vmatprep.mubr.bf16.mxu0 0
      %4954 = vmatmul.mubr.bf16.gmra.mrb[0].mxu0 %v4481
      %v4955 = vpop.f32.mrb[0].mxu0
      %v4956 = vadd.f32 %v4795, %v4955
      %v4957 = vpop.f32.mrb[0].mxu0
      %v4958 = vpop.f32.mrb[0].mxu0
      %v4959 = vadd.f32 %v4798, %v4958
      %v4960 = vpop.f32.mrb[0].mxu0
      %4961 = vmatprep.mubr.bf16.mxu0 0
      %4962 = vmatmul.mubr.bf16.gmra.mrb[0].mxu0 %v4484
      %v4963 = vpop.f32.mrb[0].mxu0
      %v4964 = vadd.f32 %v4803, %v4963
      %v4965 = vpop.f32.mrb[0].mxu0
      %v4966 = vpop.f32.mrb[0].mxu0
      %v4967 = vadd.f32 %v4806, %v4966
      %v4968 = vpop.f32.mrb[0].mxu0
      %4969 = vmatprep.mubr.bf16.mxu0 0
      %4970 = vmatmul.mubr.bf16.gmra.mrb[0].mxu0 %v4487
      %v4971 = vpop.f32.mrb[0].mxu0
      %v4972 = vadd.f32 %v4811, %v4971
      %v4973 = vpop.f32.mrb[0].mxu0
      %v4974 = vpop.f32.mrb[0].mxu0
      %v4975 = vadd.f32 %v4814, %v4974
      %v4976 = vpop.f32.mrb[0].mxu0
      %4977 = vmatprep.mubr.bf16.mxu0 0
      %4978 = vmatmul.mubr.bf16.gmra.mrb[0].mxu0 %v4490
      %v4979 = vpop.f32.mrb[0].mxu0
      %v4980 = vadd.f32 %v4819, %v4979
      %v4981 = vpop.f32.mrb[0].mxu0
      %v4982 = vpop.f32.mrb[0].mxu0
      %v4983 = vadd.f32 %v4822, %v4982
      %v4984 = vpop.f32.mrb[0].mxu0
      %4985 = vmatprep.mubr.bf16.mxu0 0
      %4986 = vmatmul.mubr.bf16.gmra.mrb[0].mxu0 %v4493
      %v4987 = vpop.f32.mrb[0].mxu0
      %v4988 = vadd.f32 %v4827, %v4987
      %v4989 = vpop.f32.mrb[0].mxu0
      %v4990 = vpop.f32.mrb[0].mxu0
      %v4991 = vadd.f32 %v4830, %v4990
      %v4992 = vpop.f32.mrb[0].mxu0
      %4993 = vmatprep.mubr.bf16.mxu0 0
      %4994 = vmatmul.mubr.bf16.gmra.mrb[0].mxu0 %v4496
      %v4995 = vpop.f32.mrb[0].mxu0
      %v4996 = vadd.f32 %v4835, %v4995
      %v4997 = vpop.f32.mrb[0].mxu0
      %v4998 = vpop.f32.mrb[0].mxu0
      %v4999 = vadd.f32 %v4838, %v4998
      %v5000 = vpop.f32.mrb[0].mxu0
      %5001 = vmatprep.mubr.bf16.mxu0 0
      %5002 = vmatmul.mubr.bf16.gmra.mrb[0].mxu0 %v4499
      %v5003 = vpop.f32.mrb[0].mxu0
      %v5004 = vadd.f32 %v4843, %v5003
      %v5005 = vpop.f32.mrb[0].mxu0
      %v5006 = vpop.f32.mrb[0].mxu0
      %v5007 = vadd.f32 %v4846, %v5006
      %v5008 = vpop.f32.mrb[0].mxu0
      %5009 = vmatprep.mubr.bf16.mxu0 0
      %5010 = vmatmul.mubr.bf16.gmra.mrb[0].mxu0 %v4502
      %v5011 = vpop.f32.mrb[0].mxu0
      %v5012 = vadd.f32 %v4851, %v5011
      %v5013 = vpop.f32.mrb[0].mxu0
      %v5014 = vpop.f32.mrb[0].mxu0
      %v5015 = vadd.f32 %v4854, %v5014
      %v5016 = vpop.f32.mrb[0].mxu0
      %5017 = vdwg.mxu0
      %v5066 = vunpack.c.l.b16 %v4407
      %v5067 = vunpack.c.l.b16 %v4408
      %v5068 = vunpack.c.l.b16 %v4409
      %v5069 = vunpack.c.l.b16 %v4410
      %v5070 = vunpack.c.l.b16 %v4411
      %v5071 = vunpack.c.l.b16 %v4412
      %v5072 = vunpack.c.l.b16 %v4413
      %v5073 = vunpack.c.l.b16 %v4414
      %v5074 = vunpack.c.l.b16 %v4415
      %v5075 = vunpack.c.l.b16 %v4416
      %v5076 = vunpack.c.l.b16 %v4417
      %v5077 = vunpack.c.l.b16 %v4418
      %v5078 = vunpack.c.l.b16 %v4419
      %v5079 = vunpack.c.l.b16 %v4420
      %v5080 = vunpack.c.l.b16 %v4421
      %v5081 = vunpack.c.l.b16 %v4422
      %v5082 = vunpack.c.l.b16 %v4423
      %v5083 = vunpack.c.l.b16 %v4424
      %v5084 = vunpack.c.l.b16 %v4425
      %v5085 = vunpack.c.l.b16 %v4426
      %v5086 = vunpack.c.l.b16 %v4427
      %v5087 = vunpack.c.l.b16 %v4428
      %v5088 = vunpack.c.l.b16 %v4429
      %v5089 = vunpack.c.l.b16 %v4430
      %v5090 = vunpack.c.l.b16 %v4431
      %v5091 = vunpack.c.l.b16 %v4432
      %v5092 = vunpack.c.l.b16 %v4433
      %v5093 = vunpack.c.l.b16 %v4434
      %v5094 = vunpack.c.l.b16 %v4435
      %v5095 = vunpack.c.l.b16 %v4436
      %v5096 = vunpack.c.l.b16 %v4437
      %v5097 = vunpack.c.l.b16 %v4438
      %v5098 = vunpack.c.l.b16 %v4439
      %v5099 = vunpack.c.l.b16 %v4440
      %v5100 = vunpack.c.l.b16 %v4441
      %v5101 = vunpack.c.l.b16 %v4442
      %v5102 = vunpack.c.l.b16 %v4443
      %v5103 = vunpack.c.l.b16 %v4444
      %v5104 = vunpack.c.l.b16 %v4445
      %v5105 = vunpack.c.l.b16 %v4446
      %v5106 = vunpack.c.l.b16 %v4447
      %v5107 = vunpack.c.l.b16 %v4448
      %v5108 = vunpack.c.l.b16 %v4449
      %v5109 = vunpack.c.l.b16 %v4450
      %v5110 = vunpack.c.l.b16 %v4451
      %v5111 = vunpack.c.l.b16 %v4452
      %v5112 = vunpack.c.l.b16 %v4453
      %v5113 = vunpack.c.l.b16 %v4454
      %v5114 = vpack.c.b16 %v5067, %v5066
      %v5115 = vpack.c.b16 %v5069, %v5068
      %v5116 = vpack.c.b16 %v5071, %v5070
      %v5117 = vpack.c.b16 %v5073, %v5072
      %v5118 = vpack.c.b16 %v5075, %v5074
      %v5119 = vpack.c.b16 %v5077, %v5076
      %v5120 = vpack.c.b16 %v5079, %v5078
      %v5121 = vpack.c.b16 %v5081, %v5080
      %v5122 = vpack.c.b16 %v5083, %v5082
      %v5123 = vpack.c.b16 %v5085, %v5084
      %v5124 = vpack.c.b16 %v5087, %v5086
      %v5125 = vpack.c.b16 %v5089, %v5088
      %v5126 = vpack.c.b16 %v5091, %v5090
      %v5127 = vpack.c.b16 %v5093, %v5092
      %v5128 = vpack.c.b16 %v5095, %v5094
      %v5129 = vpack.c.b16 %v5097, %v5096
      %v5130 = vpack.c.b16 %v5099, %v5098
      %v5131 = vpack.c.b16 %v5101, %v5100
      %v5132 = vpack.c.b16 %v5103, %v5102
      %v5133 = vpack.c.b16 %v5105, %v5104
      %v5134 = vpack.c.b16 %v5107, %v5106
      %v5135 = vpack.c.b16 %v5109, %v5108
      %v5136 = vpack.c.b16 %v5111, %v5110
      %v5137 = vpack.c.b16 %v5113, %v5112
      %5162 = vmatprep.subr.bf16.mxu0 0
      %5163 = vmatpush1.bf16.msra.mxu0 %v5114
      %5164 = vmatprep.subr.bf16.mxu0 0
      %5165 = vmatpush1.bf16.msra.mxu0 %v5115
      %5166 = vmatprep.subr.bf16.mxu0 0
      %5167 = vmatpush1.bf16.msra.mxu0 %v5116
      %5168 = vmatprep.subr.bf16.mxu0 0
      %5169 = vmatpush1.bf16.msra.mxu0 %v5117
      %5170 = vmatprep.subr.bf16.mxu0 0
      %5171 = vmatpush1.bf16.msra.mxu0 %v5118
      %5172 = vmatprep.subr.bf16.mxu0 0
      %5173 = vmatpush1.bf16.msra.mxu0 %v5119
      %5174 = vmatprep.subr.bf16.mxu0 0
      %5175 = vmatpush1.bf16.msra.mxu0 %v5120
      %5176 = vmatprep.subr.bf16.mxu0 0
      %5177 = vmatpush1.bf16.msra.mxu0 %v5121
      %5178 = vmatprep.subr.bf16.mxu0 0
      %5179 = vmatpush1.bf16.msra.mxu0 %v5122
      %5180 = vmatprep.subr.bf16.mxu0 0
      %5181 = vmatpush1.bf16.msra.mxu0 %v5123
      %5182 = vmatprep.subr.bf16.mxu0 0
      %5183 = vmatpush1.bf16.msra.mxu0 %v5124
      %5184 = vmatprep.subr.bf16.mxu0 0
      %5185 = vmatpush1.bf16.msra.mxu0 %v5125
      %5186 = vmatprep.subr.bf16.mxu0 0
      %5187 = vmatpush1.bf16.msra.mxu0 %v5126
      %5188 = vmatprep.subr.bf16.mxu0 0
      %5189 = vmatpush1.bf16.msra.mxu0 %v5127
      %5190 = vmatprep.subr.bf16.mxu0 0
      %5191 = vmatpush1.bf16.msra.mxu0 %v5128
      %5192 = vmatprep.subr.bf16.mxu0 0
      %5193 = vmatpush1.bf16.msra.mxu0 %v5129
      %5194 = vmatprep.mubr.bf16.mxu0 %v4360
      %5195 = vmatmul.mubr.bf16.gmra.mrb[0].mxu0 %v4359
      %v5196 = vpop.f32.mrb[0].mxu0
      %v5197 = vadd.f32 %v4892, %v5196
      %v5198 = vpop.f32.mrb[0].mxu0
      %v5199 = vpop.f32.mrb[0].mxu0
      %v5200 = vadd.f32 %v4895, %v5199
      %v5201 = vpop.f32.mrb[0].mxu0
      %5202 = vmatprep.mubr.bf16.mxu0 %v4363
      %5203 = vmatmul.mubr.bf16.gmra.mrb[0].mxu0 %v4362
      %v5204 = vpop.f32.mrb[0].mxu0
      %v5205 = vadd.f32 %v4900, %v5204
      %v5206 = vpop.f32.mrb[0].mxu0
      %v5207 = vpop.f32.mrb[0].mxu0
      %v5208 = vadd.f32 %v4903, %v5207
      %v5209 = vpop.f32.mrb[0].mxu0
      %5210 = vmatprep.mubr.bf16.mxu0 %v4366
      %5211 = vmatmul.mubr.bf16.gmra.mrb[0].mxu0 %v4365
      %v5212 = vpop.f32.mrb[0].mxu0
      %v5213 = vadd.f32 %v4908, %v5212
      %v5214 = vpop.f32.mrb[0].mxu0
      %v5215 = vpop.f32.mrb[0].mxu0
      %v5216 = vadd.f32 %v4911, %v5215
      %v5217 = vpop.f32.mrb[0].mxu0
      %5218 = vmatprep.mubr.bf16.mxu0 %v4369
      %5219 = vmatmul.mubr.bf16.gmra.mrb[0].mxu0 %v4368
      %v5220 = vpop.f32.mrb[0].mxu0
      %v5221 = vadd.f32 %v4916, %v5220
      %v5222 = vpop.f32.mrb[0].mxu0
      %v5223 = vpop.f32.mrb[0].mxu0
      %v5224 = vadd.f32 %v4919, %v5223
      %v5225 = vpop.f32.mrb[0].mxu0
      %5226 = vmatprep.mubr.bf16.mxu0 %v4372
      %5227 = vmatmul.mubr.bf16.gmra.mrb[0].mxu0 %v4371
      %v5228 = vpop.f32.mrb[0].mxu0
      %v5229 = vadd.f32 %v4924, %v5228
      %v5230 = vpop.f32.mrb[0].mxu0
      %v5231 = vpop.f32.mrb[0].mxu0
      %v5232 = vadd.f32 %v4927, %v5231
      %v5233 = vpop.f32.mrb[0].mxu0
      %5234 = vmatprep.mubr.bf16.mxu0 %v4375
      %5235 = vmatmul.mubr.bf16.gmra.mrb[0].mxu0 %v4374
      %v5236 = vpop.f32.mrb[0].mxu0
      %v5237 = vadd.f32 %v4932, %v5236
      %v5238 = vpop.f32.mrb[0].mxu0
      %v5239 = vpop.f32.mrb[0].mxu0
      %v5240 = vadd.f32 %v4935, %v5239
      %v5241 = vpop.f32.mrb[0].mxu0
      %5242 = vmatprep.mubr.bf16.mxu0 %v4378
      %5243 = vmatmul.mubr.bf16.gmra.mrb[0].mxu0 %v4377
      %v5244 = vpop.f32.mrb[0].mxu0
      %v5245 = vadd.f32 %v4940, %v5244
      %v5246 = vpop.f32.mrb[0].mxu0
      %v5247 = vpop.f32.mrb[0].mxu0
      %v5248 = vadd.f32 %v4943, %v5247
      %v5249 = vpop.f32.mrb[0].mxu0
      %5250 = vmatprep.mubr.bf16.mxu0 %v4381
      %5251 = vmatmul.mubr.bf16.gmra.mrb[0].mxu0 %v4380
      %v5252 = vpop.f32.mrb[0].mxu0
      %v5253 = vadd.f32 %v4948, %v5252
      %v5254 = vpop.f32.mrb[0].mxu0
      %v5255 = vpop.f32.mrb[0].mxu0
      %v5256 = vadd.f32 %v4951, %v5255
      %v5257 = vpop.f32.mrb[0].mxu0
      %5258 = vmatprep.mubr.bf16.mxu0 %v4384
      %5259 = vmatmul.mubr.bf16.gmra.mrb[0].mxu0 %v4383
      %v5260 = vpop.f32.mrb[0].mxu0
      %v5261 = vadd.f32 %v4956, %v5260
      %v5262 = vpop.f32.mrb[0].mxu0
      %v5263 = vpop.f32.mrb[0].mxu0
      %v5264 = vadd.f32 %v4959, %v5263
      %v5265 = vpop.f32.mrb[0].mxu0
      %5266 = vmatprep.mubr.bf16.mxu0 %v4387
      %5267 = vmatmul.mubr.bf16.gmra.mrb[0].mxu0 %v4386
      %v5268 = vpop.f32.mrb[0].mxu0
      %v5269 = vadd.f32 %v4964, %v5268
      %v5270 = vpop.f32.mrb[0].mxu0
      %v5271 = vpop.f32.mrb[0].mxu0
      %v5272 = vadd.f32 %v4967, %v5271
      %v5273 = vpop.f32.mrb[0].mxu0
      %5274 = vmatprep.mubr.bf16.mxu0 %v4390
      %5275 = vmatmul.mubr.bf16.gmra.mrb[0].mxu0 %v4389
      %v5276 = vpop.f32.mrb[0].mxu0
      %v5277 = vadd.f32 %v4972, %v5276
      %v5278 = vpop.f32.mrb[0].mxu0
      %v5279 = vpop.f32.mrb[0].mxu0
      %v5280 = vadd.f32 %v4975, %v5279
      %v5281 = vpop.f32.mrb[0].mxu0
      %5282 = vmatprep.mubr.bf16.mxu0 %v4393
      %5283 = vmatmul.mubr.bf16.gmra.mrb[0].mxu0 %v4392
      %v5284 = vpop.f32.mrb[0].mxu0
      %v5285 = vadd.f32 %v4980, %v5284
      %v5286 = vpop.f32.mrb[0].mxu0
      %v5287 = vpop.f32.mrb[0].mxu0
      %v5288 = vadd.f32 %v4983, %v5287
      %v5289 = vpop.f32.mrb[0].mxu0
      %5290 = vmatprep.mubr.bf16.mxu0 %v4396
      %5291 = vmatmul.mubr.bf16.gmra.mrb[0].mxu0 %v4395
      %v5292 = vpop.f32.mrb[0].mxu0
      %v5293 = vadd.f32 %v4988, %v5292
      %v5294 = vpop.f32.mrb[0].mxu0
      %v5295 = vpop.f32.mrb[0].mxu0
      %v5296 = vadd.f32 %v4991, %v5295
      %v5297 = vpop.f32.mrb[0].mxu0
      %5298 = vmatprep.mubr.bf16.mxu0 %v4399
      %5299 = vmatmul.mubr.bf16.gmra.mrb[0].mxu0 %v4398
      %v5300 = vpop.f32.mrb[0].mxu0
      %v5301 = vadd.f32 %v4996, %v5300
      %v5302 = vpop.f32.mrb[0].mxu0
      %v5303 = vpop.f32.mrb[0].mxu0
      %v5304 = vadd.f32 %v4999, %v5303
      %v5305 = vpop.f32.mrb[0].mxu0
      %5306 = vmatprep.mubr.bf16.mxu0 %v4402
      %5307 = vmatmul.mubr.bf16.gmra.mrb[0].mxu0 %v4401
      %v5308 = vpop.f32.mrb[0].mxu0
      %v5309 = vadd.f32 %v5004, %v5308
      %v5310 = vpop.f32.mrb[0].mxu0
      %v5311 = vpop.f32.mrb[0].mxu0
      %v5312 = vadd.f32 %v5007, %v5311
      %v5313 = vpop.f32.mrb[0].mxu0
      %5314 = vmatprep.mubr.bf16.mxu0 %v4405
      %5315 = vmatmul.mubr.bf16.gmra.mrb[0].mxu0 %v4404
      %v5316 = vpop.f32.mrb[0].mxu0
      %v5317 = vadd.f32 %v5012, %v5316
      %v5318 = vpop.f32.mrb[0].mxu0
      %v5319 = vpop.f32.mrb[0].mxu0
      %v5320 = vadd.f32 %v5015, %v5319
      %v5321 = vpop.f32.mrb[0].mxu0
      %5322 = vdwg.mxu0
      %5323 = vmatprep.subr.bf16.mxu0 0
      %5324 = vmatpush1.bf16.msra.mxu0 %v5130
      %5325 = vmatprep.subr.bf16.mxu0 0
      %5326 = vmatpush1.bf16.msra.mxu0 %v5131
      %5327 = vmatprep.subr.bf16.mxu0 0
      %5328 = vmatpush1.bf16.msra.mxu0 %v5132
      %5329 = vmatprep.subr.bf16.mxu0 0
      %5330 = vmatpush1.bf16.msra.mxu0 %v5133
      %5331 = vmatprep.subr.bf16.mxu0 0
      %5332 = vmatpush1.bf16.msra.mxu0 %v5134
      %5333 = vmatprep.subr.bf16.mxu0 0
      %5334 = vmatpush1.bf16.msra.mxu0 %v5135
      %5335 = vmatprep.subr.bf16.mxu0 0
      %5336 = vmatpush1.bf16.msra.mxu0 %v5136
      %5337 = vmatprep.subr.bf16.mxu0 0
      %5338 = vmatpush1.bf16.msra.mxu0 %v5137
      %5339 = vmatprep.subr.bf16.mxu0 0
      %5340 = vmatpush1.bf16.msra.mxu0 0
      %5341 = vmatprep.subr.bf16.mxu0 0
      %5342 = vmatpush1.bf16.msra.mxu0 0
      %5343 = vmatprep.subr.bf16.mxu0 0
      %5344 = vmatpush1.bf16.msra.mxu0 0
      %5345 = vmatprep.subr.bf16.mxu0 0
      %5346 = vmatpush1.bf16.msra.mxu0 0
      %5347 = vmatprep.subr.bf16.mxu0 0
      %5348 = vmatpush1.bf16.msra.mxu0 0
      %5349 = vmatprep.subr.bf16.mxu0 0
      %5350 = vmatpush1.bf16.msra.mxu0 0
      %5351 = vmatprep.subr.bf16.mxu0 0
      %5352 = vmatpush1.bf16.msra.mxu0 0
      %5353 = vmatprep.subr.bf16.mxu0 0
      %5354 = vmatpush1.bf16.msra.mxu0 0
      %5355 = vmatprep.mubr.bf16.mxu0 0
      %5356 = vmatmul.mubr.bf16.gmra.mrb[0].mxu0 %v4361
      %v5357 = vpop.f32.mrb[0].mxu0
      %v5358 = vadd.f32 %v5197, %v5357
      %v5359 = vpop.f32.mrb[0].mxu0
      %v5360 = vpop.f32.mrb[0].mxu0
      %v5361 = vadd.f32 %v5200, %v5360
      %v5362 = vpop.f32.mrb[0].mxu0
      %5363 = vmatprep.mubr.bf16.mxu0 0
      %5364 = vmatmul.mubr.bf16.gmra.mrb[0].mxu0 %v4364
      %v5365 = vpop.f32.mrb[0].mxu0
      %v5366 = vadd.f32 %v5205, %v5365
      %v5367 = vpop.f32.mrb[0].mxu0
      %v5368 = vpop.f32.mrb[0].mxu0
      %v5369 = vadd.f32 %v5208, %v5368
      %v5370 = vpop.f32.mrb[0].mxu0
      %5371 = vmatprep.mubr.bf16.mxu0 0
      %5372 = vmatmul.mubr.bf16.gmra.mrb[0].mxu0 %v4367
      %v5373 = vpop.f32.mrb[0].mxu0
      %v5374 = vadd.f32 %v5213, %v5373
      %v5375 = vpop.f32.mrb[0].mxu0
      %v5376 = vpop.f32.mrb[0].mxu0
      %v5377 = vadd.f32 %v5216, %v5376
      %v5378 = vpop.f32.mrb[0].mxu0
      %5379 = vmatprep.mubr.bf16.mxu0 0
      %5380 = vmatmul.mubr.bf16.gmra.mrb[0].mxu0 %v4370
      %v5381 = vpop.f32.mrb[0].mxu0
      %v5382 = vadd.f32 %v5221, %v5381
      %v5383 = vpop.f32.mrb[0].mxu0
      %v5384 = vpop.f32.mrb[0].mxu0
      %v5385 = vadd.f32 %v5224, %v5384
      %v5386 = vpop.f32.mrb[0].mxu0
      %5387 = vmatprep.mubr.bf16.mxu0 0
      %5388 = vmatmul.mubr.bf16.gmra.mrb[0].mxu0 %v4373
      %v5389 = vpop.f32.mrb[0].mxu0
      %v5390 = vadd.f32 %v5229, %v5389
      %v5391 = vpop.f32.mrb[0].mxu0
      %v5392 = vpop.f32.mrb[0].mxu0
      %v5393 = vadd.f32 %v5232, %v5392
      %v5394 = vpop.f32.mrb[0].mxu0
      %5395 = vmatprep.mubr.bf16.mxu0 0
      %5396 = vmatmul.mubr.bf16.gmra.mrb[0].mxu0 %v4376
      %v5397 = vpop.f32.mrb[0].mxu0
      %v5398 = vadd.f32 %v5237, %v5397
      %v5399 = vpop.f32.mrb[0].mxu0
      %v5400 = vpop.f32.mrb[0].mxu0
      %v5401 = vadd.f32 %v5240, %v5400
      %v5402 = vpop.f32.mrb[0].mxu0
      %5403 = vmatprep.mubr.bf16.mxu0 0
      %5404 = vmatmul.mubr.bf16.gmra.mrb[0].mxu0 %v4379
      %v5405 = vpop.f32.mrb[0].mxu0
      %v5406 = vadd.f32 %v5245, %v5405
      %v5407 = vpop.f32.mrb[0].mxu0
      %v5408 = vpop.f32.mrb[0].mxu0
      %v5409 = vadd.f32 %v5248, %v5408
      %v5410 = vpop.f32.mrb[0].mxu0
      %5411 = vmatprep.mubr.bf16.mxu0 0
      %5412 = vmatmul.mubr.bf16.gmra.mrb[0].mxu0 %v4382
      %v5413 = vpop.f32.mrb[0].mxu0
      %v5414 = vadd.f32 %v5253, %v5413
      %v5415 = vpop.f32.mrb[0].mxu0
      %v5416 = vpop.f32.mrb[0].mxu0
      %v5417 = vadd.f32 %v5256, %v5416
      %v5418 = vpop.f32.mrb[0].mxu0
      %5419 = vmatprep.mubr.bf16.mxu0 0
      %5420 = vmatmul.mubr.bf16.gmra.mrb[0].mxu0 %v4385
      %v5421 = vpop.f32.mrb[0].mxu0
      %v5422 = vadd.f32 %v5261, %v5421
      %v5423 = vpop.f32.mrb[0].mxu0
      %v5424 = vpop.f32.mrb[0].mxu0
      %v5425 = vadd.f32 %v5264, %v5424
      %v5426 = vpop.f32.mrb[0].mxu0
      %5427 = vmatprep.mubr.bf16.mxu0 0
      %5428 = vmatmul.mubr.bf16.gmra.mrb[0].mxu0 %v4388
      %v5429 = vpop.f32.mrb[0].mxu0
      %v5430 = vadd.f32 %v5269, %v5429
      %v5431 = vpop.f32.mrb[0].mxu0
      %v5432 = vpop.f32.mrb[0].mxu0
      %v5433 = vadd.f32 %v5272, %v5432
      %v5434 = vpop.f32.mrb[0].mxu0
      %5435 = vmatprep.mubr.bf16.mxu0 0
      %5436 = vmatmul.mubr.bf16.gmra.mrb[0].mxu0 %v4391
      %v5437 = vpop.f32.mrb[0].mxu0
      %v5438 = vadd.f32 %v5277, %v5437
      %v5439 = vpop.f32.mrb[0].mxu0
      %v5440 = vpop.f32.mrb[0].mxu0
      %v5441 = vadd.f32 %v5280, %v5440
      %v5442 = vpop.f32.mrb[0].mxu0
      %5443 = vmatprep.mubr.bf16.mxu0 0
      %5444 = vmatmul.mubr.bf16.gmra.mrb[0].mxu0 %v4394
      %v5445 = vpop.f32.mrb[0].mxu0
      %v5446 = vadd.f32 %v5285, %v5445
      %v5447 = vpop.f32.mrb[0].mxu0
      %v5448 = vpop.f32.mrb[0].mxu0
      %v5449 = vadd.f32 %v5288, %v5448
      %v5450 = vpop.f32.mrb[0].mxu0
      %5451 = vmatprep.mubr.bf16.mxu0 0
      %5452 = vmatmul.mubr.bf16.gmra.mrb[0].mxu0 %v4397
      %v5453 = vpop.f32.mrb[0].mxu0
      %v5454 = vadd.f32 %v5293, %v5453
      %v5455 = vpop.f32.mrb[0].mxu0
      %v5456 = vpop.f32.mrb[0].mxu0
      %v5457 = vadd.f32 %v5296, %v5456
      %v5458 = vpop.f32.mrb[0].mxu0
      %5459 = vmatprep.mubr.bf16.mxu0 0
      %5460 = vmatmul.mubr.bf16.gmra.mrb[0].mxu0 %v4400
      %v5461 = vpop.f32.mrb[0].mxu0
      %v5462 = vadd.f32 %v5301, %v5461
      %v5463 = vpop.f32.mrb[0].mxu0
      %v5464 = vpop.f32.mrb[0].mxu0
      %v5465 = vadd.f32 %v5304, %v5464
      %v5466 = vpop.f32.mrb[0].mxu0
      %5467 = vmatprep.mubr.bf16.mxu0 0
      %5468 = vmatmul.mubr.bf16.gmra.mrb[0].mxu0 %v4403
      %v5469 = vpop.f32.mrb[0].mxu0
      %v5470 = vadd.f32 %v5309, %v5469
      %v5471 = vpop.f32.mrb[0].mxu0
      %v5472 = vpop.f32.mrb[0].mxu0
      %v5473 = vadd.f32 %v5312, %v5472
      %v5474 = vpop.f32.mrb[0].mxu0
      %5475 = vmatprep.mubr.bf16.mxu0 0
      %5476 = vmatmul.mubr.bf16.gmra.mrb[0].mxu0 %v4406
      %v5477 = vpop.f32.mrb[0].mxu0
      %v5478 = vadd.f32 %v5317, %v5477
      %v5479 = vpop.f32.mrb[0].mxu0
      %v5480 = vpop.f32.mrb[0].mxu0
      %v5481 = vadd.f32 %v5320, %v5480
      %v5482 = vpop.f32.mrb[0].mxu0
      %5483 = vdwg.mxu0
      %s5484 = scalar_lea.vmem [#allocation4], 48
      %v5485 = vld [vmem:[%s5484] sm:$0xff]
      %v5486 = vld [vmem:[%s5484 + $0x8] sm:$0xff]
      %v5487 = vld [vmem:[%s5484 + $0x10] sm:$0xff]
      %v5488 = vld [vmem:[%s5484 + $0x18] sm:$0xff]
      %v5489 = vld [vmem:[%s5484 + $0x20] sm:$0xff]
      %v5490 = vld [vmem:[%s5484 + $0x28] sm:$0xff]
      %v5491 = vld [vmem:[%s5484 + $0x30] sm:$0xff]
      %v5492 = vld [vmem:[%s5484 + $0x38] sm:$0xff]
      %v5493 = vld [vmem:[%s5484 + $0x40] sm:$0xff]
      %v5494 = vld [vmem:[%s5484 + $0x48] sm:$0xff]
      %v5495 = vld [vmem:[%s5484 + $0x50] sm:$0xff]
      %v5496 = vld [vmem:[%s5484 + $0x58] sm:$0xff]
      %v5497 = vld [vmem:[%s5484 + $0x60] sm:$0xff]
      %v5498 = vld [vmem:[%s5484 + $0x68] sm:$0xff]
      %v5499 = vld [vmem:[%s5484 + $0x70] sm:$0xff]
      %v5500 = vld [vmem:[%s5484 + $0x78] sm:$0xff]
      %v5501 = vld [vmem:[%s5484 + $0x80] sm:$0xff]
      %v5502 = vld [vmem:[%s5484 + $0x88] sm:$0xff]
      %v5503 = vld [vmem:[%s5484 + $0x90] sm:$0xff]
      %v5504 = vld [vmem:[%s5484 + $0x98] sm:$0xff]
      %v5505 = vld [vmem:[%s5484 + $0xa0] sm:$0xff]
      %v5506 = vld [vmem:[%s5484 + $0xa8] sm:$0xff]
      %v5507 = vld [vmem:[%s5484 + $0xb0] sm:$0xff]
      %v5508 = vld [vmem:[%s5484 + $0xb8] sm:$0xff]
      %v5509 = vld [vmem:[%s5484 + $0xc0] sm:$0xff]
      %v5510 = vld [vmem:[%s5484 + $0xc8] sm:$0xff]
      %v5511 = vld [vmem:[%s5484 + $0xd0] sm:$0xff]
      %v5512 = vld [vmem:[%s5484 + $0xd8] sm:$0xff]
      %v5513 = vld [vmem:[%s5484 + $0xe0] sm:$0xff]
      %v5514 = vld [vmem:[%s5484 + $0xe8] sm:$0xff]
      %v5515 = vld [vmem:[%s5484 + $0xf0] sm:$0xff]
      %v5516 = vld [vmem:[%s5484 + $0xf8] sm:$0xff]
      %v5517 = vld [vmem:[%s5484 + $0x100] sm:$0xff]
      %v5518 = vld [vmem:[%s5484 + $0x108] sm:$0xff]
      %v5519 = vld [vmem:[%s5484 + $0x110] sm:$0xff]
      %v5520 = vld [vmem:[%s5484 + $0x118] sm:$0xff]
      %v5521 = vld [vmem:[%s5484 + $0x120] sm:$0xff]
      %v5522 = vld [vmem:[%s5484 + $0x128] sm:$0xff]
      %v5523 = vld [vmem:[%s5484 + $0x130] sm:$0xff]
      %v5524 = vld [vmem:[%s5484 + $0x138] sm:$0xff]
      %v5525 = vld [vmem:[%s5484 + $0x140] sm:$0xff]
      %v5526 = vld [vmem:[%s5484 + $0x148] sm:$0xff]
      %v5527 = vld [vmem:[%s5484 + $0x150] sm:$0xff]
      %v5528 = vld [vmem:[%s5484 + $0x158] sm:$0xff]
      %v5529 = vld [vmem:[%s5484 + $0x160] sm:$0xff]
      %v5530 = vld [vmem:[%s5484 + $0x168] sm:$0xff]
      %v5531 = vld [vmem:[%s5484 + $0x170] sm:$0xff]
      %v5532 = vld [vmem:[%s5484 + $0x178] sm:$0xff]
      %s5533 = scalar_lea.vmem %s5, 384
      %v5534 = vld [vmem:[%s5533] sm:$0xf]
      %v5535 = vld [vmem:[%s5533 + $0x4] sm:$0xf]
      %v5536 = vld [vmem:[%s5533 + $0x8] sm:$0xf]
      %v5537 = vld [vmem:[%s5533 + $0xc] sm:$0xf]
      %v5538 = vld [vmem:[%s5533 + $0x10] sm:$0xf]
      %v5539 = vld [vmem:[%s5533 + $0x14] sm:$0xf]
      %v5540 = vld [vmem:[%s5533 + $0x18] sm:$0xf]
      %v5541 = vld [vmem:[%s5533 + $0x1c] sm:$0xf]
      %v5542 = vld [vmem:[%s5533 + $0x20] sm:$0xf]
      %v5543 = vld [vmem:[%s5533 + $0x24] sm:$0xf]
      %v5544 = vld [vmem:[%s5533 + $0x28] sm:$0xf]
      %v5545 = vld [vmem:[%s5533 + $0x2c] sm:$0xf]
      %v5546 = vld [vmem:[%s5533 + $0x30] sm:$0xf]
      %v5547 = vld [vmem:[%s5533 + $0x34] sm:$0xf]
      %v5548 = vld [vmem:[%s5533 + $0x38] sm:$0xf]
      %v5549 = vld [vmem:[%s5533 + $0x3c] sm:$0xf]
      %v5550 = vld [vmem:[%s5533 + $0x40] sm:$0xf]
      %v5551 = vld [vmem:[%s5533 + $0x44] sm:$0xf]
      %v5552 = vld [vmem:[%s5533 + $0x48] sm:$0xf]
      %v5553 = vld [vmem:[%s5533 + $0x4c] sm:$0xf]
      %v5554 = vld [vmem:[%s5533 + $0x50] sm:$0xf]
      %v5555 = vld [vmem:[%s5533 + $0x54] sm:$0xf]
      %v5556 = vld [vmem:[%s5533 + $0x58] sm:$0xf]
      %v5557 = vld [vmem:[%s5533 + $0x5c] sm:$0xf]
      %v5558 = vld [vmem:[%s5533 + $0x60] sm:$0xf]
      %v5559 = vld [vmem:[%s5533 + $0x64] sm:$0xf]
      %v5560 = vld [vmem:[%s5533 + $0x68] sm:$0xf]
      %v5561 = vld [vmem:[%s5533 + $0x6c] sm:$0xf]
      %v5562 = vld [vmem:[%s5533 + $0x70] sm:$0xf]
      %v5563 = vld [vmem:[%s5533 + $0x74] sm:$0xf]
      %v5564 = vld [vmem:[%s5533 + $0x78] sm:$0xf]
      %v5565 = vld [vmem:[%s5533 + $0x7c] sm:$0xf]
      %v5566 = vld [vmem:[%s5533 + $0x80] sm:$0xf]
      %v5567 = vld [vmem:[%s5533 + $0x84] sm:$0xf]
      %v5568 = vld [vmem:[%s5533 + $0x88] sm:$0xf]
      %v5569 = vld [vmem:[%s5533 + $0x8c] sm:$0xf]
      %v5570 = vld [vmem:[%s5533 + $0x90] sm:$0xf]
      %v5571 = vld [vmem:[%s5533 + $0x94] sm:$0xf]
      %v5572 = vld [vmem:[%s5533 + $0x98] sm:$0xf]
      %v5573 = vld [vmem:[%s5533 + $0x9c] sm:$0xf]
      %v5574 = vld [vmem:[%s5533 + $0xa0] sm:$0xf]
      %v5575 = vld [vmem:[%s5533 + $0xa4] sm:$0xf]
      %v5576 = vld [vmem:[%s5533 + $0xa8] sm:$0xf]
      %v5577 = vld [vmem:[%s5533 + $0xac] sm:$0xf]
      %v5578 = vld [vmem:[%s5533 + $0xb0] sm:$0xf]
      %v5579 = vld [vmem:[%s5533 + $0xb4] sm:$0xf]
      %v5580 = vld [vmem:[%s5533 + $0xb8] sm:$0xf]
      %v5581 = vld [vmem:[%s5533 + $0xbc] sm:$0xf]
      %v5630 = vunpack.c.l.b16 %v5534
      %v5631 = vunpack.c.l.b16 %v5535
      %v5632 = vunpack.c.l.b16 %v5536
      %v5633 = vunpack.c.l.b16 %v5537
      %v5634 = vunpack.c.l.b16 %v5538
      %v5635 = vunpack.c.l.b16 %v5539
      %v5636 = vunpack.c.l.b16 %v5540
      %v5637 = vunpack.c.l.b16 %v5541
      %v5638 = vunpack.c.l.b16 %v5542
      %v5639 = vunpack.c.l.b16 %v5543
      %v5640 = vunpack.c.l.b16 %v5544
      %v5641 = vunpack.c.l.b16 %v5545
      %v5642 = vunpack.c.l.b16 %v5546
      %v5643 = vunpack.c.l.b16 %v5547
      %v5644 = vunpack.c.l.b16 %v5548
      %v5645 = vunpack.c.l.b16 %v5549
      %v5646 = vunpack.c.l.b16 %v5550
      %v5647 = vunpack.c.l.b16 %v5551
      %v5648 = vunpack.c.l.b16 %v5552
      %v5649 = vunpack.c.l.b16 %v5553
      %v5650 = vunpack.c.l.b16 %v5554
      %v5651 = vunpack.c.l.b16 %v5555
      %v5652 = vunpack.c.l.b16 %v5556
      %v5653 = vunpack.c.l.b16 %v5557
      %v5654 = vunpack.c.l.b16 %v5558
      %v5655 = vunpack.c.l.b16 %v5559
      %v5656 = vunpack.c.l.b16 %v5560
      %v5657 = vunpack.c.l.b16 %v5561
      %v5658 = vunpack.c.l.b16 %v5562
      %v5659 = vunpack.c.l.b16 %v5563
      %v5660 = vunpack.c.l.b16 %v5564
      %v5661 = vunpack.c.l.b16 %v5565
      %v5662 = vunpack.c.l.b16 %v5566
      %v5663 = vunpack.c.l.b16 %v5567
      %v5664 = vunpack.c.l.b16 %v5568
      %v5665 = vunpack.c.l.b16 %v5569
      %v5666 = vunpack.c.l.b16 %v5570
      %v5667 = vunpack.c.l.b16 %v5571
      %v5668 = vunpack.c.l.b16 %v5572
      %v5669 = vunpack.c.l.b16 %v5573
      %v5670 = vunpack.c.l.b16 %v5574
      %v5671 = vunpack.c.l.b16 %v5575
      %v5672 = vunpack.c.l.b16 %v5576
      %v5673 = vunpack.c.l.b16 %v5577
      %v5674 = vunpack.c.l.b16 %v5578
      %v5675 = vunpack.c.l.b16 %v5579
      %v5676 = vunpack.c.l.b16 %v5580
      %v5677 = vunpack.c.l.b16 %v5581
      %v5678 = vpack.c.b16 %v5631, %v5630
      %v5679 = vpack.c.b16 %v5633, %v5632
      %v5680 = vpack.c.b16 %v5635, %v5634
      %v5681 = vpack.c.b16 %v5637, %v5636
      %v5682 = vpack.c.b16 %v5639, %v5638
      %v5683 = vpack.c.b16 %v5641, %v5640
      %v5684 = vpack.c.b16 %v5643, %v5642
      %v5685 = vpack.c.b16 %v5645, %v5644
      %v5686 = vpack.c.b16 %v5647, %v5646
      %v5687 = vpack.c.b16 %v5649, %v5648
      %v5688 = vpack.c.b16 %v5651, %v5650
      %v5689 = vpack.c.b16 %v5653, %v5652
      %v5690 = vpack.c.b16 %v5655, %v5654
      %v5691 = vpack.c.b16 %v5657, %v5656
      %v5692 = vpack.c.b16 %v5659, %v5658
      %v5693 = vpack.c.b16 %v5661, %v5660
      %v5694 = vpack.c.b16 %v5663, %v5662
      %v5695 = vpack.c.b16 %v5665, %v5664
      %v5696 = vpack.c.b16 %v5667, %v5666
      %v5697 = vpack.c.b16 %v5669, %v5668
      %v5698 = vpack.c.b16 %v5671, %v5670
      %v5699 = vpack.c.b16 %v5673, %v5672
      %v5700 = vpack.c.b16 %v5675, %v5674
      %v5701 = vpack.c.b16 %v5677, %v5676
      %5726 = vmatprep.subr.bf16.mxu0 0
      %5727 = vmatpush1.bf16.msra.mxu0 %v5678
      %5728 = vmatprep.subr.bf16.mxu0 0
      %5729 = vmatpush1.bf16.msra.mxu0 %v5679
      %5730 = vmatprep.subr.bf16.mxu0 0
      %5731 = vmatpush1.bf16.msra.mxu0 %v5680
      %5732 = vmatprep.subr.bf16.mxu0 0
      %5733 = vmatpush1.bf16.msra.mxu0 %v5681
      %5734 = vmatprep.subr.bf16.mxu0 0
      %5735 = vmatpush1.bf16.msra.mxu0 %v5682
      %5736 = vmatprep.subr.bf16.mxu0 0
      %5737 = vmatpush1.bf16.msra.mxu0 %v5683
      %5738 = vmatprep.subr.bf16.mxu0 0
      %5739 = vmatpush1.bf16.msra.mxu0 %v5684
      %5740 = vmatprep.subr.bf16.mxu0 0
      %5741 = vmatpush1.bf16.msra.mxu0 %v5685
      %5742 = vmatprep.subr.bf16.mxu0 0
      %5743 = vmatpush1.bf16.msra.mxu0 %v5686
      %5744 = vmatprep.subr.bf16.mxu0 0
      %5745 = vmatpush1.bf16.msra.mxu0 %v5687
      %5746 = vmatprep.subr.bf16.mxu0 0
      %5747 = vmatpush1.bf16.msra.mxu0 %v5688
      %5748 = vmatprep.subr.bf16.mxu0 0
      %5749 = vmatpush1.bf16.msra.mxu0 %v5689
      %5750 = vmatprep.subr.bf16.mxu0 0
      %5751 = vmatpush1.bf16.msra.mxu0 %v5690
      %5752 = vmatprep.subr.bf16.mxu0 0
      %5753 = vmatpush1.bf16.msra.mxu0 %v5691
      %5754 = vmatprep.subr.bf16.mxu0 0
      %5755 = vmatpush1.bf16.msra.mxu0 %v5692
      %5756 = vmatprep.subr.bf16.mxu0 0
      %5757 = vmatpush1.bf16.msra.mxu0 %v5693
      %5758 = vmatprep.mubr.bf16.mxu0 %v5486
      %5759 = vmatmul.mubr.bf16.gmra.mrb[0].mxu0 %v5485
      %v5760 = vpop.f32.mrb[0].mxu0
      %v5761 = vadd.f32 0.0, %v5760
      %v5762 = vpop.f32.mrb[0].mxu0
      %v5763 = vpop.f32.mrb[0].mxu0
      %v5764 = vadd.f32 0.0, %v5763
      %v5765 = vpop.f32.mrb[0].mxu0
      %5766 = vmatprep.mubr.bf16.mxu0 %v5489
      %5767 = vmatmul.mubr.bf16.gmra.mrb[0].mxu0 %v5488
      %v5768 = vpop.f32.mrb[0].mxu0
      %v5769 = vadd.f32 0.0, %v5768
      %v5770 = vpop.f32.mrb[0].mxu0
      %v5771 = vpop.f32.mrb[0].mxu0
      %v5772 = vadd.f32 0.0, %v5771
      %v5773 = vpop.f32.mrb[0].mxu0
      %5774 = vmatprep.mubr.bf16.mxu0 %v5492
      %5775 = vmatmul.mubr.bf16.gmra.mrb[0].mxu0 %v5491
      %v5776 = vpop.f32.mrb[0].mxu0
      %v5777 = vadd.f32 0.0, %v5776
      %v5778 = vpop.f32.mrb[0].mxu0
      %v5779 = vpop.f32.mrb[0].mxu0
      %v5780 = vadd.f32 0.0, %v5779
      %v5781 = vpop.f32.mrb[0].mxu0
      %5782 = vmatprep.mubr.bf16.mxu0 %v5495
      %5783 = vmatmul.mubr.bf16.gmra.mrb[0].mxu0 %v5494
      %v5784 = vpop.f32.mrb[0].mxu0
      %v5785 = vadd.f32 0.0, %v5784
      %v5786 = vpop.f32.mrb[0].mxu0
      %v5787 = vpop.f32.mrb[0].mxu0
      %v5788 = vadd.f32 0.0, %v5787
      %v5789 = vpop.f32.mrb[0].mxu0
      %5790 = vmatprep.mubr.bf16.mxu0 %v5498
      %5791 = vmatmul.mubr.bf16.gmra.mrb[0].mxu0 %v5497
      %v5792 = vpop.f32.mrb[0].mxu0
      %v5793 = vadd.f32 0.0, %v5792
      %v5794 = vpop.f32.mrb[0].mxu0
      %v5795 = vpop.f32.mrb[0].mxu0
      %v5796 = vadd.f32 0.0, %v5795
      %v5797 = vpop.f32.mrb[0].mxu0
      %5798 = vmatprep.mubr.bf16.mxu0 %v5501
      %5799 = vmatmul.mubr.bf16.gmra.mrb[0].mxu0 %v5500
      %v5800 = vpop.f32.mrb[0].mxu0
      %v5801 = vadd.f32 0.0, %v5800
      %v5802 = vpop.f32.mrb[0].mxu0
      %v5803 = vpop.f32.mrb[0].mxu0
      %v5804 = vadd.f32 0.0, %v5803
      %v5805 = vpop.f32.mrb[0].mxu0
      %5806 = vmatprep.mubr.bf16.mxu0 %v5504
      %5807 = vmatmul.mubr.bf16.gmra.mrb[0].mxu0 %v5503
      %v5808 = vpop.f32.mrb[0].mxu0
      %v5809 = vadd.f32 0.0, %v5808
      %v5810 = vpop.f32.mrb[0].mxu0
      %v5811 = vpop.f32.mrb[0].mxu0
      %v5812 = vadd.f32 0.0, %v5811
      %v5813 = vpop.f32.mrb[0].mxu0
      %5814 = vmatprep.mubr.bf16.mxu0 %v5507
      %5815 = vmatmul.mubr.bf16.gmra.mrb[0].mxu0 %v5506
      %v5816 = vpop.f32.mrb[0].mxu0
      %v5817 = vadd.f32 0.0, %v5816
      %v5818 = vpop.f32.mrb[0].mxu0
      %v5819 = vpop.f32.mrb[0].mxu0
      %v5820 = vadd.f32 0.0, %v5819
      %v5821 = vpop.f32.mrb[0].mxu0
      %5822 = vmatprep.mubr.bf16.mxu0 %v5510
      %5823 = vmatmul.mubr.bf16.gmra.mrb[0].mxu0 %v5509
      %v5824 = vpop.f32.mrb[0].mxu0
      %v5825 = vadd.f32 0.0, %v5824
      %v5826 = vpop.f32.mrb[0].mxu0
      %v5827 = vpop.f32.mrb[0].mxu0
      %v5828 = vadd.f32 0.0, %v5827
      %v5829 = vpop.f32.mrb[0].mxu0
      %5830 = vmatprep.mubr.bf16.mxu0 %v5513
      %5831 = vmatmul.mubr.bf16.gmra.mrb[0].mxu0 %v5512
      %v5832 = vpop.f32.mrb[0].mxu0
      %v5833 = vadd.f32 0.0, %v5832
      %v5834 = vpop.f32.mrb[0].mxu0
      %v5835 = vpop.f32.mrb[0].mxu0
      %v5836 = vadd.f32 0.0, %v5835
      %v5837 = vpop.f32.mrb[0].mxu0
      %5838 = vmatprep.mubr.bf16.mxu0 %v5516
      %5839 = vmatmul.mubr.bf16.gmra.mrb[0].mxu0 %v5515
      %v5840 = vpop.f32.mrb[0].mxu0
      %v5841 = vadd.f32 0.0, %v5840
      %v5842 = vpop.f32.mrb[0].mxu0
      %v5843 = vpop.f32.mrb[0].mxu0
      %v5844 = vadd.f32 0.0, %v5843
      %v5845 = vpop.f32.mrb[0].mxu0
      %5846 = vmatprep.mubr.bf16.mxu0 %v5519
      %5847 = vmatmul.mubr.bf16.gmra.mrb[0].mxu0 %v5518
      %v5848 = vpop.f32.mrb[0].mxu0
      %v5849 = vadd.f32 0.0, %v5848
      %v5850 = vpop.f32.mrb[0].mxu0
      %v5851 = vpop.f32.mrb[0].mxu0
      %v5852 = vadd.f32 0.0, %v5851
      %v5853 = vpop.f32.mrb[0].mxu0
      %5854 = vmatprep.mubr.bf16.mxu0 %v5522
      %5855 = vmatmul.mubr.bf16.gmra.mrb[0].mxu0 %v5521
      %v5856 = vpop.f32.mrb[0].mxu0
      %v5857 = vadd.f32 0.0, %v5856
      %v5858 = vpop.f32.mrb[0].mxu0
      %v5859 = vpop.f32.mrb[0].mxu0
      %v5860 = vadd.f32 0.0, %v5859
      %v5861 = vpop.f32.mrb[0].mxu0
      %5862 = vmatprep.mubr.bf16.mxu0 %v5525
      %5863 = vmatmul.mubr.bf16.gmra.mrb[0].mxu0 %v5524
      %v5864 = vpop.f32.mrb[0].mxu0
      %v5865 = vadd.f32 0.0, %v5864
      %v5866 = vpop.f32.mrb[0].mxu0
      %v5867 = vpop.f32.mrb[0].mxu0
      %v5868 = vadd.f32 0.0, %v5867
      %v5869 = vpop.f32.mrb[0].mxu0
      %5870 = vmatprep.mubr.bf16.mxu0 %v5528
      %5871 = vmatmul.mubr.bf16.gmra.mrb[0].mxu0 %v5527
      %v5872 = vpop.f32.mrb[0].mxu0
      %v5873 = vadd.f32 0.0, %v5872
      %v5874 = vpop.f32.mrb[0].mxu0
      %v5875 = vpop.f32.mrb[0].mxu0
      %v5876 = vadd.f32 0.0, %v5875
      %v5877 = vpop.f32.mrb[0].mxu0
      %5878 = vmatprep.mubr.bf16.mxu0 %v5531
      %5879 = vmatmul.mubr.bf16.gmra.mrb[0].mxu0 %v5530
      %v5880 = vpop.f32.mrb[0].mxu0
      %v5881 = vadd.f32 0.0, %v5880
      %v5882 = vpop.f32.mrb[0].mxu0
      %v5883 = vpop.f32.mrb[0].mxu0
      %v5884 = vadd.f32 0.0, %v5883
      %v5885 = vpop.f32.mrb[0].mxu0
      %5886 = vdwg.mxu0
      %5887 = vmatprep.subr.bf16.mxu0 0
      %5888 = vmatpush1.bf16.msra.mxu0 %v5694
      %5889 = vmatprep.subr.bf16.mxu0 0
      %5890 = vmatpush1.bf16.msra.mxu0 %v5695
      %5891 = vmatprep.subr.bf16.mxu0 0
      %5892 = vmatpush1.bf16.msra.mxu0 %v5696
      %5893 = vmatprep.subr.bf16.mxu0 0
      %5894 = vmatpush1.bf16.msra.mxu0 %v5697
      %5895 = vmatprep.subr.bf16.mxu0 0
      %5896 = vmatpush1.bf16.msra.mxu0 %v5698
      %5897 = vmatprep.subr.bf16.mxu0 0
      %5898 = vmatpush1.bf16.msra.mxu0 %v5699
      %5899 = vmatprep.subr.bf16.mxu0 0
      %5900 = vmatpush1.bf16.msra.mxu0 %v5700
      %5901 = vmatprep.subr.bf16.mxu0 0
      %5902 = vmatpush1.bf16.msra.mxu0 %v5701
      %5903 = vmatprep.subr.bf16.mxu0 0
      %5904 = vmatpush1.bf16.msra.mxu0 0
      %5905 = vmatprep.subr.bf16.mxu0 0
      %5906 = vmatpush1.bf16.msra.mxu0 0
      %5907 = vmatprep.subr.bf16.mxu0 0
      %5908 = vmatpush1.bf16.msra.mxu0 0
      %5909 = vmatprep.subr.bf16.mxu0 0
      %5910 = vmatpush1.bf16.msra.mxu0 0
      %5911 = vmatprep.subr.bf16.mxu0 0
      %5912 = vmatpush1.bf16.msra.mxu0 0
      %5913 = vmatprep.subr.bf16.mxu0 0
      %5914 = vmatpush1.bf16.msra.mxu0 0
      %5915 = vmatprep.subr.bf16.mxu0 0
      %5916 = vmatpush1.bf16.msra.mxu0 0
      %5917 = vmatprep.subr.bf16.mxu0 0
      %5918 = vmatpush1.bf16.msra.mxu0 0
      %5919 = vmatprep.mubr.bf16.mxu0 0
      %5920 = vmatmul.mubr.bf16.gmra.mrb[0].mxu0 %v5487
      %v5921 = vpop.f32.mrb[0].mxu0
      %v5922 = vadd.f32 %v5761, %v5921
      %v5923 = vpop.f32.mrb[0].mxu0
      %v5924 = vpop.f32.mrb[0].mxu0
      %v5925 = vadd.f32 %v5764, %v5924
      %v5926 = vpop.f32.mrb[0].mxu0
      %5927 = vmatprep.mubr.bf16.mxu0 0
      %5928 = vmatmul.mubr.bf16.gmra.mrb[0].mxu0 %v5490
      %v5929 = vpop.f32.mrb[0].mxu0
      %v5930 = vadd.f32 %v5769, %v5929
      %v5931 = vpop.f32.mrb[0].mxu0
      %v5932 = vpop.f32.mrb[0].mxu0
      %v5933 = vadd.f32 %v5772, %v5932
      %v5934 = vpop.f32.mrb[0].mxu0
      %5935 = vmatprep.mubr.bf16.mxu0 0
      %5936 = vmatmul.mubr.bf16.gmra.mrb[0].mxu0 %v5493
      %v5937 = vpop.f32.mrb[0].mxu0
      %v5938 = vadd.f32 %v5777, %v5937
      %v5939 = vpop.f32.mrb[0].mxu0
      %v5940 = vpop.f32.mrb[0].mxu0
      %v5941 = vadd.f32 %v5780, %v5940
      %v5942 = vpop.f32.mrb[0].mxu0
      %5943 = vmatprep.mubr.bf16.mxu0 0
      %5944 = vmatmul.mubr.bf16.gmra.mrb[0].mxu0 %v5496
      %v5945 = vpop.f32.mrb[0].mxu0
      %v5946 = vadd.f32 %v5785, %v5945
      %v5947 = vpop.f32.mrb[0].mxu0
      %v5948 = vpop.f32.mrb[0].mxu0
      %v5949 = vadd.f32 %v5788, %v5948
      %v5950 = vpop.f32.mrb[0].mxu0
      %5951 = vmatprep.mubr.bf16.mxu0 0
      %5952 = vmatmul.mubr.bf16.gmra.mrb[0].mxu0 %v5499
      %v5953 = vpop.f32.mrb[0].mxu0
      %v5954 = vadd.f32 %v5793, %v5953
      %v5955 = vpop.f32.mrb[0].mxu0
      %v5956 = vpop.f32.mrb[0].mxu0
      %v5957 = vadd.f32 %v5796, %v5956
      %v5958 = vpop.f32.mrb[0].mxu0
      %5959 = vmatprep.mubr.bf16.mxu0 0
      %5960 = vmatmul.mubr.bf16.gmra.mrb[0].mxu0 %v5502
      %v5961 = vpop.f32.mrb[0].mxu0
      %v5962 = vadd.f32 %v5801, %v5961
      %v5963 = vpop.f32.mrb[0].mxu0
      %v5964 = vpop.f32.mrb[0].mxu0
      %v5965 = vadd.f32 %v5804, %v5964
      %v5966 = vpop.f32.mrb[0].mxu0
      %5967 = vmatprep.mubr.bf16.mxu0 0
      %5968 = vmatmul.mubr.bf16.gmra.mrb[0].mxu0 %v5505
      %v5969 = vpop.f32.mrb[0].mxu0
      %v5970 = vadd.f32 %v5809, %v5969
      %v5971 = vpop.f32.mrb[0].mxu0
      %v5972 = vpop.f32.mrb[0].mxu0
      %v5973 = vadd.f32 %v5812, %v5972
      %v5974 = vpop.f32.mrb[0].mxu0
      %5975 = vmatprep.mubr.bf16.mxu0 0
      %5976 = vmatmul.mubr.bf16.gmra.mrb[0].mxu0 %v5508
      %v5977 = vpop.f32.mrb[0].mxu0
      %v5978 = vadd.f32 %v5817, %v5977
      %v5979 = vpop.f32.mrb[0].mxu0
      %v5980 = vpop.f32.mrb[0].mxu0
      %v5981 = vadd.f32 %v5820, %v5980
      %v5982 = vpop.f32.mrb[0].mxu0
      %5983 = vmatprep.mubr.bf16.mxu0 0
      %5984 = vmatmul.mubr.bf16.gmra.mrb[0].mxu0 %v5511
      %v5985 = vpop.f32.mrb[0].mxu0
      %v5986 = vadd.f32 %v5825, %v5985
      %v5987 = vpop.f32.mrb[0].mxu0
      %v5988 = vpop.f32.mrb[0].mxu0
      %v5989 = vadd.f32 %v5828, %v5988
      %v5990 = vpop.f32.mrb[0].mxu0
      %5991 = vmatprep.mubr.bf16.mxu0 0
      %5992 = vmatmul.mubr.bf16.gmra.mrb[0].mxu0 %v5514
      %v5993 = vpop.f32.mrb[0].mxu0
      %v5994 = vadd.f32 %v5833, %v5993
      %v5995 = vpop.f32.mrb[0].mxu0
      %v5996 = vpop.f32.mrb[0].mxu0
      %v5997 = vadd.f32 %v5836, %v5996
      %v5998 = vpop.f32.mrb[0].mxu0
      %5999 = vmatprep.mubr.bf16.mxu0 0
      %6000 = vmatmul.mubr.bf16.gmra.mrb[0].mxu0 %v5517
      %v6001 = vpop.f32.mrb[0].mxu0
      %v6002 = vadd.f32 %v5841, %v6001
      %v6003 = vpop.f32.mrb[0].mxu0
      %v6004 = vpop.f32.mrb[0].mxu0
      %v6005 = vadd.f32 %v5844, %v6004
      %v6006 = vpop.f32.mrb[0].mxu0
      %6007 = vmatprep.mubr.bf16.mxu0 0
      %6008 = vmatmul.mubr.bf16.gmra.mrb[0].mxu0 %v5520
      %v6009 = vpop.f32.mrb[0].mxu0
      %v6010 = vadd.f32 %v5849, %v6009
      %v6011 = vpop.f32.mrb[0].mxu0
      %v6012 = vpop.f32.mrb[0].mxu0
      %v6013 = vadd.f32 %v5852, %v6012
      %v6014 = vpop.f32.mrb[0].mxu0
      %6015 = vmatprep.mubr.bf16.mxu0 0
      %6016 = vmatmul.mubr.bf16.gmra.mrb[0].mxu0 %v5523
      %v6017 = vpop.f32.mrb[0].mxu0
      %v6018 = vadd.f32 %v5857, %v6017
      %v6019 = vpop.f32.mrb[0].mxu0
      %v6020 = vpop.f32.mrb[0].mxu0
      %v6021 = vadd.f32 %v5860, %v6020
      %v6022 = vpop.f32.mrb[0].mxu0
      %6023 = vmatprep.mubr.bf16.mxu0 0
      %6024 = vmatmul.mubr.bf16.gmra.mrb[0].mxu0 %v5526
      %v6025 = vpop.f32.mrb[0].mxu0
      %v6026 = vadd.f32 %v5865, %v6025
      %v6027 = vpop.f32.mrb[0].mxu0
      %v6028 = vpop.f32.mrb[0].mxu0
      %v6029 = vadd.f32 %v5868, %v6028
      %v6030 = vpop.f32.mrb[0].mxu0
      %6031 = vmatprep.mubr.bf16.mxu0 0
      %6032 = vmatmul.mubr.bf16.gmra.mrb[0].mxu0 %v5529
      %v6033 = vpop.f32.mrb[0].mxu0
      %v6034 = vadd.f32 %v5873, %v6033
      %v6035 = vpop.f32.mrb[0].mxu0
      %v6036 = vpop.f32.mrb[0].mxu0
      %v6037 = vadd.f32 %v5876, %v6036
      %v6038 = vpop.f32.mrb[0].mxu0
      %6039 = vmatprep.mubr.bf16.mxu0 0
      %6040 = vmatmul.mubr.bf16.gmra.mrb[0].mxu0 %v5532
      %v6041 = vpop.f32.mrb[0].mxu0
      %v6042 = vadd.f32 %v5881, %v6041
      %v6043 = vpop.f32.mrb[0].mxu0
      %v6044 = vpop.f32.mrb[0].mxu0
      %v6045 = vadd.f32 %v5884, %v6044
      %v6046 = vpop.f32.mrb[0].mxu0
      %6047 = vdwg.mxu0
      %v6048 = vadd.f32 %v5358, %v5922
      %v6049 = vadd.f32 %v5361, %v5925
      %v6050 = vadd.f32 %v5366, %v5930
      %v6051 = vadd.f32 %v5369, %v5933
      %v6052 = vadd.f32 %v5374, %v5938
      %v6053 = vadd.f32 %v5377, %v5941
      %v6054 = vadd.f32 %v5382, %v5946
      %v6055 = vadd.f32 %v5385, %v5949
      %v6056 = vadd.f32 %v5390, %v5954
      %v6057 = vadd.f32 %v5393, %v5957
      %v6058 = vadd.f32 %v5398, %v5962
      %v6059 = vadd.f32 %v5401, %v5965
      %v6060 = vadd.f32 %v5406, %v5970
      %v6061 = vadd.f32 %v5409, %v5973
      %v6062 = vadd.f32 %v5414, %v5978
      %v6063 = vadd.f32 %v5417, %v5981
      %v6064 = vadd.f32 %v5422, %v5986
      %v6065 = vadd.f32 %v5425, %v5989
      %v6066 = vadd.f32 %v5430, %v5994
      %v6067 = vadd.f32 %v5433, %v5997
      %v6068 = vadd.f32 %v5438, %v6002
      %v6069 = vadd.f32 %v5441, %v6005
      %v6070 = vadd.f32 %v5446, %v6010
      %v6071 = vadd.f32 %v5449, %v6013
      %v6072 = vadd.f32 %v5454, %v6018
      %v6073 = vadd.f32 %v5457, %v6021
      %v6074 = vadd.f32 %v5462, %v6026
      %v6075 = vadd.f32 %v5465, %v6029
      %v6076 = vadd.f32 %v5470, %v6034
      %v6077 = vadd.f32 %v5473, %v6037
      %v6078 = vadd.f32 %v5478, %v6042
      %v6079 = vadd.f32 %v5481, %v6045
      %v6080 = vld [vmem:[%s6] sm:$0x1]
      %v6082 = vlaneseq
      %v6083 = vshrl.u32 %v6082, 7
      %v6084 = vsub.s32 0, %v6083
      %v6085 = vrot.slane %v6080, %v6084
      %v6087 = vmul.f32 %v6048, %v6085
      %v6088 = vmul.f32 %v6049, %v6085
      %v6089 = vmul.f32 %v6050, %v6085
      %v6090 = vmul.f32 %v6051, %v6085
      %v6091 = vmul.f32 %v6052, %v6085
      %v6092 = vmul.f32 %v6053, %v6085
      %v6093 = vmul.f32 %v6054, %v6085
      %v6094 = vmul.f32 %v6055, %v6085
      %v6095 = vmul.f32 %v6056, %v6085
      %v6096 = vmul.f32 %v6057, %v6085
      %v6097 = vmul.f32 %v6058, %v6085
      %v6098 = vmul.f32 %v6059, %v6085
      %v6099 = vmul.f32 %v6060, %v6085
      %v6100 = vmul.f32 %v6061, %v6085
      %v6101 = vmul.f32 %v6062, %v6085
      %v6102 = vmul.f32 %v6063, %v6085
      %v6103 = vmul.f32 %v6064, %v6085
      %v6104 = vmul.f32 %v6065, %v6085
      %v6105 = vmul.f32 %v6066, %v6085
      %v6106 = vmul.f32 %v6067, %v6085
      %v6107 = vmul.f32 %v6068, %v6085
      %v6108 = vmul.f32 %v6069, %v6085
      %v6109 = vmul.f32 %v6070, %v6085
      %v6110 = vmul.f32 %v6071, %v6085
      %v6111 = vmul.f32 %v6072, %v6085
      %v6112 = vmul.f32 %v6073, %v6085
      %v6113 = vmul.f32 %v6074, %v6085
      %v6114 = vmul.f32 %v6075, %v6085
      %v6115 = vmul.f32 %v6076, %v6085
      %v6116 = vmul.f32 %v6077, %v6085
      %v6117 = vmul.f32 %v6078, %v6085
      %v6118 = vmul.f32 %v6079, %v6085
      %v6119 = vld [vmem:[%s7] sm:$0x1]
      %v6121 = vlaneseq
      %v6122 = vshrl.u32 %v6121, 7
      %v6123 = vsub.s32 0, %v6122
      %v6124 = vrot.slane %v6119, %v6123
      %v6126 = vadd.f32 %v6087, %v6124
      %v6127 = vadd.f32 %v6088, %v6124
      %v6128 = vadd.f32 %v6089, %v6124
      %v6129 = vadd.f32 %v6090, %v6124
      %v6130 = vadd.f32 %v6091, %v6124
      %v6131 = vadd.f32 %v6092, %v6124
      %v6132 = vadd.f32 %v6093, %v6124
      %v6133 = vadd.f32 %v6094, %v6124
      %v6134 = vadd.f32 %v6095, %v6124
      %v6135 = vadd.f32 %v6096, %v6124
      %v6136 = vadd.f32 %v6097, %v6124
      %v6137 = vadd.f32 %v6098, %v6124
      %v6138 = vadd.f32 %v6099, %v6124
      %v6139 = vadd.f32 %v6100, %v6124
      %v6140 = vadd.f32 %v6101, %v6124
      %v6141 = vadd.f32 %v6102, %v6124
      %v6142 = vadd.f32 %v6103, %v6124
      %v6143 = vadd.f32 %v6104, %v6124
      %v6144 = vadd.f32 %v6105, %v6124
      %v6145 = vadd.f32 %v6106, %v6124
      %v6146 = vadd.f32 %v6107, %v6124
      %v6147 = vadd.f32 %v6108, %v6124
      %v6148 = vadd.f32 %v6109, %v6124
      %v6149 = vadd.f32 %v6110, %v6124
      %v6150 = vadd.f32 %v6111, %v6124
      %v6151 = vadd.f32 %v6112, %v6124
      %v6152 = vadd.f32 %v6113, %v6124
      %v6153 = vadd.f32 %v6114, %v6124
      %v6154 = vadd.f32 %v6115, %v6124
      %v6155 = vadd.f32 %v6116, %v6124
      %v6156 = vadd.f32 %v6117, %v6124
      %v6157 = vadd.f32 %v6118, %v6124
      %v6158 = vmax.f32 %v6126, 0.0
      %v6159 = vmax.f32 %v6127, 0.0
      %v6160 = vmax.f32 %v6128, 0.0
      %v6161 = vmax.f32 %v6129, 0.0
      %v6162 = vmax.f32 %v6130, 0.0
      %v6163 = vmax.f32 %v6131, 0.0
      %v6164 = vmax.f32 %v6132, 0.0
      %v6165 = vmax.f32 %v6133, 0.0
      %v6166 = vmax.f32 %v6134, 0.0
      %v6167 = vmax.f32 %v6135, 0.0
      %v6168 = vmax.f32 %v6136, 0.0
      %v6169 = vmax.f32 %v6137, 0.0
      %v6170 = vmax.f32 %v6138, 0.0
      %v6171 = vmax.f32 %v6139, 0.0
      %v6172 = vmax.f32 %v6140, 0.0
      %v6173 = vmax.f32 %v6141, 0.0
      %v6174 = vmax.f32 %v6142, 0.0
      %v6175 = vmax.f32 %v6143, 0.0
      %v6176 = vmax.f32 %v6144, 0.0
      %v6177 = vmax.f32 %v6145, 0.0
      %v6178 = vmax.f32 %v6146, 0.0
      %v6179 = vmax.f32 %v6147, 0.0
      %v6180 = vmax.f32 %v6148, 0.0
      %v6181 = vmax.f32 %v6149, 0.0
      %v6182 = vmax.f32 %v6150, 0.0
      %v6183 = vmax.f32 %v6151, 0.0
      %v6184 = vmax.f32 %v6152, 0.0
      %v6185 = vmax.f32 %v6153, 0.0
      %v6186 = vmax.f32 %v6154, 0.0
      %v6187 = vmax.f32 %v6155, 0.0
      %v6188 = vmax.f32 %v6156, 0.0
      %v6189 = vmax.f32 %v6157, 0.0
      %v6190 = vpack.c.bf16 %v6159, %v6158
      %v6191 = vpack.c.bf16 %v6161, %v6160
      %v6192 = vpack.c.bf16 %v6163, %v6162
      %v6193 = vpack.c.bf16 %v6165, %v6164
      %v6194 = vpack.c.bf16 %v6167, %v6166
      %v6195 = vpack.c.bf16 %v6169, %v6168
      %v6196 = vpack.c.bf16 %v6171, %v6170
      %v6197 = vpack.c.bf16 %v6173, %v6172
      %v6198 = vpack.c.bf16 %v6175, %v6174
      %v6199 = vpack.c.bf16 %v6177, %v6176
      %v6200 = vpack.c.bf16 %v6179, %v6178
      %v6201 = vpack.c.bf16 %v6181, %v6180
      %v6202 = vpack.c.bf16 %v6183, %v6182
      %v6203 = vpack.c.bf16 %v6185, %v6184
      %v6204 = vpack.c.bf16 %v6187, %v6186
      %v6205 = vpack.c.bf16 %v6189, %v6188
      %v6222 = vunpack.c.l.b16 %v6190
      %v6223 = vunpack.c.h.b16 %v6190
      %v6224 = vunpack.c.l.b16 %v6191
      %v6225 = vunpack.c.h.b16 %v6191
      %v6226 = vunpack.c.l.b16 %v6192
      %v6227 = vunpack.c.h.b16 %v6192
      %v6228 = vunpack.c.l.b16 %v6193
      %v6229 = vunpack.c.h.b16 %v6193
      %v6230 = vunpack.c.l.b16 %v6194
      %v6231 = vunpack.c.h.b16 %v6194
      %v6232 = vunpack.c.l.b16 %v6195
      %v6233 = vunpack.c.h.b16 %v6195
      %v6234 = vunpack.c.l.b16 %v6196
      %v6235 = vunpack.c.h.b16 %v6196
      %v6236 = vunpack.c.l.b16 %v6197
      %v6237 = vunpack.c.h.b16 %v6197
      %v6238 = vunpack.c.l.b16 %v6198
      %v6239 = vunpack.c.h.b16 %v6198
      %v6240 = vunpack.c.l.b16 %v6199
      %v6241 = vunpack.c.h.b16 %v6199
      %v6242 = vunpack.c.l.b16 %v6200
      %v6243 = vunpack.c.h.b16 %v6200
      %v6244 = vunpack.c.l.b16 %v6201
      %v6245 = vunpack.c.h.b16 %v6201
      %v6246 = vunpack.c.l.b16 %v6202
      %v6247 = vunpack.c.h.b16 %v6202
      %v6248 = vunpack.c.l.b16 %v6203
      %v6249 = vunpack.c.h.b16 %v6203
      %v6250 = vunpack.c.l.b16 %v6204
      %v6251 = vunpack.c.h.b16 %v6204
      %v6252 = vunpack.c.l.b16 %v6205
      %v6253 = vunpack.c.h.b16 %v6205
      %v6254 = vpack.c.b16 %v6222, %v6222
      %v6255 = vpack.c.b16 %v6223, %v6223
      %v6256 = vpack.c.b16 %v6224, %v6224
      %v6257 = vpack.c.b16 %v6225, %v6225
      %v6258 = vpack.c.b16 %v6226, %v6226
      %v6259 = vpack.c.b16 %v6227, %v6227
      %v6260 = vpack.c.b16 %v6228, %v6228
      %v6261 = vpack.c.b16 %v6229, %v6229
      %v6262 = vpack.c.b16 %v6230, %v6230
      %v6263 = vpack.c.b16 %v6231, %v6231
      %v6264 = vpack.c.b16 %v6232, %v6232
      %v6265 = vpack.c.b16 %v6233, %v6233
      %v6266 = vpack.c.b16 %v6234, %v6234
      %v6267 = vpack.c.b16 %v6235, %v6235
      %v6268 = vpack.c.b16 %v6236, %v6236
      %v6269 = vpack.c.b16 %v6237, %v6237
      %v6270 = vpack.c.b16 %v6238, %v6238
      %v6271 = vpack.c.b16 %v6239, %v6239
      %v6272 = vpack.c.b16 %v6240, %v6240
      %v6273 = vpack.c.b16 %v6241, %v6241
      %v6274 = vpack.c.b16 %v6242, %v6242
      %v6275 = vpack.c.b16 %v6243, %v6243
      %v6276 = vpack.c.b16 %v6244, %v6244
      %v6277 = vpack.c.b16 %v6245, %v6245
      %v6278 = vpack.c.b16 %v6246, %v6246
      %v6279 = vpack.c.b16 %v6247, %v6247
      %v6280 = vpack.c.b16 %v6248, %v6248
      %v6281 = vpack.c.b16 %v6249, %v6249
      %v6282 = vpack.c.b16 %v6250, %v6250
      %v6283 = vpack.c.b16 %v6251, %v6251
      %v6284 = vpack.c.b16 %v6252, %v6252
      %v6285 = vpack.c.b16 %v6253, %v6253
      %vm6318 = vcmask 60416
      %6319 = vst.msk [vmem:[%s325] sm:$0xf] %vm6318, %v6254
      %6320 = vst.msk [vmem:[%s325 + $0x4] sm:$0xf] %vm6318, %v6255
      %6321 = vst.msk [vmem:[%s325 + $0x8] sm:$0xf] %vm6318, %v6256
      %6322 = vst.msk [vmem:[%s325 + $0xc] sm:$0xf] %vm6318, %v6257
      %6323 = vst.msk [vmem:[%s325 + $0x10] sm:$0xf] %vm6318, %v6258
      %6324 = vst.msk [vmem:[%s325 + $0x14] sm:$0xf] %vm6318, %v6259
      %6325 = vst.msk [vmem:[%s325 + $0x18] sm:$0xf] %vm6318, %v6260
      %6326 = vst.msk [vmem:[%s325 + $0x1c] sm:$0xf] %vm6318, %v6261
      %6327 = vst.msk [vmem:[%s325 + $0x20] sm:$0xf] %vm6318, %v6262
      %6328 = vst.msk [vmem:[%s325 + $0x24] sm:$0xf] %vm6318, %v6263
      %6329 = vst.msk [vmem:[%s325 + $0x28] sm:$0xf] %vm6318, %v6264
      %6330 = vst.msk [vmem:[%s325 + $0x2c] sm:$0xf] %vm6318, %v6265
      %6331 = vst.msk [vmem:[%s325 + $0x30] sm:$0xf] %vm6318, %v6266
      %6332 = vst.msk [vmem:[%s325 + $0x34] sm:$0xf] %vm6318, %v6267
      %6333 = vst.msk [vmem:[%s325 + $0x38] sm:$0xf] %vm6318, %v6268
      %6334 = vst.msk [vmem:[%s325 + $0x3c] sm:$0xf] %vm6318, %v6269
      %6335 = vst.msk [vmem:[%s325 + $0x40] sm:$0xf] %vm6318, %v6270
      %6336 = vst.msk [vmem:[%s325 + $0x44] sm:$0xf] %vm6318, %v6271
      %6337 = vst.msk [vmem:[%s325 + $0x48] sm:$0xf] %vm6318, %v6272
      %6338 = vst.msk [vmem:[%s325 + $0x4c] sm:$0xf] %vm6318, %v6273
      %6339 = vst.msk [vmem:[%s325 + $0x50] sm:$0xf] %vm6318, %v6274
      %6340 = vst.msk [vmem:[%s325 + $0x54] sm:$0xf] %vm6318, %v6275
      %6341 = vst.msk [vmem:[%s325 + $0x58] sm:$0xf] %vm6318, %v6276
      %6342 = vst.msk [vmem:[%s325 + $0x5c] sm:$0xf] %vm6318, %v6277
      %6343 = vst.msk [vmem:[%s325 + $0x60] sm:$0xf] %vm6318, %v6278
      %6344 = vst.msk [vmem:[%s325 + $0x64] sm:$0xf] %vm6318, %v6279
      %6345 = vst.msk [vmem:[%s325 + $0x68] sm:$0xf] %vm6318, %v6280
      %6346 = vst.msk [vmem:[%s325 + $0x6c] sm:$0xf] %vm6318, %v6281
      %6347 = vst.msk [vmem:[%s325 + $0x70] sm:$0xf] %vm6318, %v6282
      %6348 = vst.msk [vmem:[%s325 + $0x74] sm:$0xf] %vm6318, %v6283
      %6349 = vst.msk [vmem:[%s325 + $0x78] sm:$0xf] %vm6318, %v6284
      %6350 = vst.msk [vmem:[%s325 + $0x7c] sm:$0xf] %vm6318, %v6285
      %p6351 = scmp.lt.s32.totalorder %s19, 1
      %s6352 = scalar_select %p6351, %s19, 1
      %s6353 = smul.addr %s6352, 32
      %s6354 = smul.addr %s6353, 4
      %s6355 = scalar_lea.vmem %s8, %s6354
      // Predicated region
      $region53: #{custom_decoder_block_forward.1} parent=51 // pred_check
        %p6356 = pneg %p215
      $region54: #{custom_decoder_block_forward.1} parent=51 // pred_check_branch
        %6358 = sbr.rel (%p6356) target = $region56
      $region55: #{custom_decoder_block_forward.1} parent=51 // pred_region
        _
      $region56: #{custom_decoder_block_forward.1} parent=51 // pred_fallthru
        _
    $region52: #{custom_decoder_block_forward.1} parent=5 // pred_fallthru
      _
    %p6359 = scmp.le.s32.totalorder 2, %s14
    // Predicated region
    $region57: #{custom_decoder_block_forward.1} parent=5 // pred_check
      %p6360 = pneg %p6359
    $region58: #{custom_decoder_block_forward.1} parent=5 // pred_check_branch
      %6362 = sbr.rel (%p6360) target = $region60
    $region59: #{custom_decoder_block_forward.1} parent=5 // pred_region
      %s6363 = ssub.s32 %s14, 2
      // Predicated region
      $region61: #{custom_decoder_block_forward.1} parent=59 // pred_check
        %p6364 = pneg %p221
      $region62: #{custom_decoder_block_forward.1} parent=59 // pred_check_branch
        %6366 = sbr.rel (%p6364) target = $region64
      $region63: #{custom_decoder_block_forward.1} parent=59 // pred_region
        %p6367 = scmp.lt.s32.totalorder %s20, 1
        %s6368 = scalar_select %p6367, %s20, 1
        %s6369 = smul.addr %s6368, 32
        %s6370 = smul.addr %s6369, 4
        %s6371 = scalar_lea.vmem %s8, %s6370
      $region64: #{custom_decoder_block_forward.1} parent=59 // pred_fallthru
        _
    $region60: #{custom_decoder_block_forward.1} parent=5 // pred_fallthru
      _
  $region6: #{custom_decoder_block_forward.1} parent=0 // loop_footer
    %s18 = sadd.s32 1, %s14
  $region7: #{custom_decoder_block_forward.1} parent=0 // loop_footer_branch
    %13 = sbr.rel target = $region3
  $region8: #{custom_decoder_block_forward.1} parent=0 // loop_exit
    _

</llo_original>
